<compile_context>
chip_gen: v7x
topology: tpu7x:2x2x1
jax: 0.10.0
libtpu: 0.0.40
codegen_flags: <defaults>
</compile_context>

<pallas_src>
import jax
import jax.numpy as jnp
from jax.experimental import pallas as pl
from jax.experimental.pallas import tpu as pltpu

EPS = 1e-3
LANE = 128


def _round_up(x, m):
    return (x + m - 1) // m * m


# ---------------------------------------------------------------------------
# Pallas kernel: one (tm x tn) output tile of  relu(patches @ W_scaled + bias)
# ---------------------------------------------------------------------------
def _matmul_bias_relu_kernel(p_ref, w_ref, b_ref, o_ref):
    # p_ref: (tm, K) bf16 ; w_ref: (K, tn) bf16 ; b_ref: (1, tn) f32 ; o: f32
    acc = jnp.dot(p_ref[...], w_ref[...], preferred_element_type=jnp.float32)
    o_ref[...] = jnp.maximum(acc + b_ref[...], 0.0).astype(o_ref.dtype)


def _conv_matmul_pallas(patches, w_mat, bias, tm):
    """patches (M, K) bf16 (M % tm == 0), w_mat (K, Cp) bf16, bias (1, Cp) f32
    with Cp % 128 == 0.  Returns f32 (M, Cp)."""
    M, K = patches.shape
    Cp = w_mat.shape[1]
    tn = LANE
    grid = (M // tm, Cp // tn)

    cost = pl.CostEstimate(
        flops=2 * M * K * Cp,
        transcendentals=0,
        bytes_accessed=M * K * 2 + K * Cp * 2 + Cp * 4 + M * Cp * 4,
    )
    return pl.pallas_call(
        _matmul_bias_relu_kernel,
        out_shape=jax.ShapeDtypeStruct((M, Cp), jnp.float32),
        grid_spec=pltpu.PrefetchScalarGridSpec(
            num_scalar_prefetch=0,
            grid=grid,
            in_specs=[
                pl.BlockSpec((tm, K), lambda i, j: (i, 0)),   # patch rows
                pl.BlockSpec((K, tn), lambda i, j: (0, j)),   # weight cols
                pl.BlockSpec((1, tn), lambda i, j: (0, j)),   # folded BN bias
            ],
            out_specs=pl.BlockSpec((tm, tn), lambda i, j: (i, j)),
        ),
        compiler_params=pltpu.CompilerParams(
            dimension_semantics=("parallel", "parallel"),
            vmem_limit_bytes=32 * 1024 * 1024,
        ),
        cost_estimate=cost,
    )(patches, w_mat, bias)


# ---------------------------------------------------------------------------
# BasicConv2d in NHWC: conv (no bias) -> BN(eval) -> ReLU, via Pallas matmul
# ---------------------------------------------------------------------------
def basic_conv2d_nhwc(x_nhwc, w_oihw, bn, padding=(0, 0)):
    cout, cin, kh, kw = w_oihw.shape
    ph, pw = padding

    xp = x_nhwc
    if ph or pw:
        xp = jnp.pad(xp, ((0, 0), (ph, ph), (pw, pw), (0, 0)))
    xp = xp.astype(jnp.bfloat16)          # bf16 MXU operands (f32 accumulate)

    N, Hp, Wp, C = xp.shape
    OH, OW = Hp - kh + 1, Wp - kw + 1
    if kh == 1 and kw == 1:
        patches = xp.reshape(N * OH * OW, C)           # no im2col expansion
    else:
        # TODO(synk): 7-tap im2col still materialized in HBM (bf16); a tap-axis
        # grid with in-VMEM shifted slices would remove the 7x expansion.
        cols = [xp[:, i:i + OH, j:j + OW, :]
                for i in range(kh) for j in range(kw)]
        patches = jnp.stack(cols, axis=3).reshape(N * OH * OW, kh * kw * C)
    M, K = patches.shape

    # Fold BN (inference) into per-output-channel scale/bias; fold scale into W.
    gamma, beta, mean, var = bn
    scale = gamma / jnp.sqrt(var + EPS)                      # (Cout,)
    bias = beta - mean * scale                               # (Cout,)
    w_mat = jnp.transpose(w_oihw, (2, 3, 1, 0)).reshape(K, cout)
    w_mat = (w_mat * scale[None, :]).astype(jnp.bfloat16)

    # Pad to lane-dense / tile-aligned shapes.
    cp = _round_up(cout, LANE)
    tm = 512 if M >= 512 else _round_up(M, 8)
    mp = _round_up(M, tm)
    if mp != M:
        patches = jnp.pad(patches, ((0, mp - M), (0, 0)))
    if cp != cout:
        w_mat = jnp.pad(w_mat, ((0, 0), (0, cp - cout)))
        bias = jnp.pad(bias, (0, cp - cout))
    bias = bias.reshape(1, cp).astype(jnp.float32)

    out = _conv_matmul_pallas(patches, w_mat, bias, tm)      # (mp, cp) f32
    return out[:M, :cout].reshape(N, OH, OW, cout)


def avg_pool_3x3_s1_p1_nhwc(x):
    # TODO(synk): purely memory-bound; kept as lax.reduce_window per perf
    # review (a Pallas version needs overlapping-window blocks for no gain).
    s = jax.lax.reduce_window(
        x, 0.0, jax.lax.add, (1, 3, 3, 1), (1, 1, 1, 1),
        [(0, 0), (1, 1), (1, 1), (0, 0)])
    return s * (1.0 / 9.0)     # count_include_pad=True (PyTorch default)


# ---------------------------------------------------------------------------
# InceptionC
# ---------------------------------------------------------------------------
def init_inception_c_params(key, in_channels, channels_7x7):
    def conv_params(k, cout, cin, kh, kw):
        k1, k2, k3, k4, k5 = jax.random.split(k, 5)
        w = 0.1 * jax.random.normal(k1, (cout, cin, kh, kw), jnp.float32)
        gamma = 1.0 + 0.1 * jax.random.normal(k2, (cout,), jnp.float32)
        beta = 0.1 * jax.random.normal(k3, (cout,), jnp.float32)
        rmean = 0.1 * jax.random.normal(k4, (cout,), jnp.float32)
        rvar = 1.0 + 0.1 * jax.random.uniform(k5, (cout,), jnp.float32)
        return {"w": w, "bn": (gamma, beta, rmean, rvar)}

    c7 = channels_7x7
    specs = {
        "branch1x1":      (192, in_channels, 1, 1),
        "branch7x7_1":    (c7, in_channels, 1, 1),
        "branch7x7_2":    (c7, c7, 1, 7),
        "branch7x7_3":    (192, c7, 7, 1),
        "branch7x7dbl_1": (c7, in_channels, 1, 1),
        "branch7x7dbl_2": (c7, c7, 7, 1),
        "branch7x7dbl_3": (c7, c7, 1, 7),
        "branch7x7dbl_4": (c7, c7, 7, 1),
        "branch7x7dbl_5": (192, c7, 1, 7),
        "branch_pool":    (192, in_channels, 1, 1),
    }
    keys = jax.random.split(key, len(specs))
    return {name: conv_params(k, *spec)
            for k, (name, spec) in zip(keys, specs.items())}


def inception_c_forward(params, x_nchw):
    x = jnp.transpose(x_nchw, (0, 2, 3, 1))           # -> NHWC once

    def conv(name, inp, padding=(0, 0)):
        p = params[name]
        return basic_conv2d_nhwc(inp, p["w"], p["bn"], padding=padding)

    b1 = conv("branch1x1", x)

    b7 = conv("branch7x7_1", x)
    b7 = conv("branch7x7_2", b7, padding=(0, 3))
    b7 = conv("branch7x7_3", b7, padding=(3, 0))

    bd = conv("branch7x7dbl_1", x)
    bd = conv("branch7x7dbl_2", bd, padding=(3, 0))
    bd = conv("branch7x7dbl_3", bd, padding=(0, 3))
    bd = conv("branch7x7dbl_4", bd, padding=(3, 0))
    bd = conv("branch7x7dbl_5", bd, padding=(0, 3))

    bp = avg_pool_3x3_s1_p1_nhwc(x)
    bp = conv("branch_pool", bp)

    out = jnp.concatenate([b1, b7, bd, bp], axis=-1)  # channel concat (NHWC)
    return jnp.transpose(out, (0, 3, 1, 2))           # -> NCHW at boundary


# ---------------------------------------------------------------------------
# Pure-JAX reference (for verification only)
# ---------------------------------------------------------------------------
def _ref_basic_conv2d(x, w, bn, padding):
    ph, pw = padding
    out = jax.lax.conv_general_dilated(
        x, w, window_strides=(1, 1),
        padding=((ph, ph), (pw, pw)),
        dimension_numbers=("NCHW", "OIHW", "NCHW"),
        precision=jax.lax.Precision.HIGHEST)
    gamma, beta, mean, var = bn
    scale = gamma / jnp.sqrt(var + EPS)
    bias = beta - mean * scale
    out = out * scale[None, :, None, None] + bias[None, :, None, None]
    return jnp.maximum(out, 0.0)


def _ref_forward(params, x):
    def conv(name, inp, padding=(0, 0)):
        p = params[name]
        return _ref_basic_conv2d(inp, p["w"], p["bn"], padding)

    b1 = conv("branch1x1", x)
    b7 = conv("branch7x7_1", x)
    b7 = conv("branch7x7_2", b7, (0, 3))
    b7 = conv("branch7x7_3", b7, (3, 0))
    bd = conv("branch7x7dbl_1", x)
    bd = conv("branch7x7dbl_2", bd, (3, 0))
    bd = conv("branch7x7dbl_3", bd, (0, 3))
    bd = conv("branch7x7dbl_4", bd, (3, 0))
    bd = conv("branch7x7dbl_5", bd, (0, 3))
    s = jax.lax.reduce_window(x, 0.0, jax.lax.add, (1, 1, 3, 3), (1, 1, 1, 1),
                              [(0, 0), (0, 0), (1, 1), (1, 1)])
    bp = conv("branch_pool", s / 9.0)
    return jnp.concatenate([b1, b7, bd, bp], axis=1)


if __name__ == "__main__":
    key = jax.random.PRNGKey(0)
    k_x, k_p = jax.random.split(key)

    N, C, H, W = 2, 4, 16, 16
    C7 = 8
    x = jax.random.normal(k_x, (N, C, H, W), jnp.float32)
    params = init_inception_c_params(k_p, C, C7)

    fwd = jax.jit(inception_c_forward)
    out = jax.block_until_ready(fwd(params, x))
    assert out.shape == (N, 192 + 192 + 192 + 192, H, W), out.shape

    ref = jax.block_until_ready(_ref_forward(params, x))
    max_err = float(jnp.max(jnp.abs(out - ref)))
    assert max_err < 2e-2, f"max abs error too large: {max_err}"

    print("KERNEL_OK")
</pallas_src>

<mosaic_0001>
module attributes {stable_mosaic.version = 11 : i64} {
  func.func @_matmul_bias_relu_kernel(%arg0: i32, %arg1: i32, %arg2: memref<512x4xbf16, #tpu.memory_space<vmem>>, %arg3: memref<4x128xbf16, #tpu.memory_space<vmem>>, %arg4: memref<1x128xf32, #tpu.memory_space<vmem>>, %arg5: memref<512x128xf32, #tpu.memory_space<vmem>>) attributes {dimension_semantics = [#tpu.dimension_semantics<parallel>, #tpu.dimension_semantics<parallel>], iteration_bounds = array<i64: 1, 1>, scalar_prefetch = 0 : i64, scratch_operands = 0 : i64, tpu.core_type = #tpu.core_type<tc>, window_params = [{transform_indices = @transform_0, window_bounds = array<i64: 512, 4>}, {transform_indices = @transform_1, window_bounds = array<i64: 4, 128>}, {transform_indices = @transform_2, window_bounds = array<i64: 1, 128>}, {transform_indices = @transform_3, window_bounds = array<i64: 512, 128>}]} {
    %c0 = arith.constant 0 : index
    %c0_0 = arith.constant 0 : index
    %0 = vector.load %arg2[%c0, %c0_0] : memref<512x4xbf16, #tpu.memory_space<vmem>>, vector<512x4xbf16>
    %c0_1 = arith.constant 0 : index
    %c0_2 = arith.constant 0 : index
    %1 = vector.load %arg3[%c0_1, %c0_2] : memref<4x128xbf16, #tpu.memory_space<vmem>>, vector<4x128xbf16>
    %cst = arith.constant dense<0.000000e+00> : vector<512x128xf32>
    %2 = tpu.matmul %0, %1, %cst {dimension_numbers = #tpu.dot_dimension_numbers<[1], [0], [0], [1], [0, 0, 1, 1], [], []>} : vector<512x4xbf16>, vector<4x128xbf16>, vector<512x128xf32> -> vector<512x128xf32>
    %c0_3 = arith.constant 0 : index
    %c0_4 = arith.constant 0 : index
    %3 = vector.load %arg4[%c0_3, %c0_4] : memref<1x128xf32, #tpu.memory_space<vmem>>, vector<1x128xf32>
    %4 = vector.broadcast %3 : vector<1x128xf32> to vector<512x128xf32>
    %5 = arith.addf %2, %4 : vector<512x128xf32>
    %cst_5 = arith.constant 0.000000e+00 : f32
    %6 = vector.broadcast %cst_5 : f32 to vector<512x128xf32>
    %7 = arith.maximumf %5, %6 : vector<512x128xf32>
    %c0_6 = arith.constant 0 : index
    %c0_7 = arith.constant 0 : index
    %8 = vector.load %arg5[%c0_6, %c0_7] : memref<512x128xf32, #tpu.memory_space<vmem>>, vector<512x128xf32>
    tpu.vector_store %arg5[%c0_6, %c0_7], %7 {strides = array<i32>} : memref<512x128xf32, #tpu.memory_space<vmem>>, vector<512x128xf32>,
    return
  }
  func.func @transform_0(%arg0: i32, %arg1: i32) -> (i32, i32) {
    %c0_i32 = arith.constant 0 : i32
    %c0_i32_0 = arith.constant 0 : i32
    return %arg0, %c0_i32 : i32, i32
  }
  func.func @transform_1(%arg0: i32, %arg1: i32) -> (i32, i32) {
    %c0_i32 = arith.constant 0 : i32
    %c0_i32_0 = arith.constant 0 : i32
    return %c0_i32, %arg1 : i32, i32
  }
  func.func @transform_2(%arg0: i32, %arg1: i32) -> (i32, i32) {
    %c0_i32 = arith.constant 0 : i32
    %c0_i32_0 = arith.constant 0 : i32
    return %c0_i32, %arg1 : i32, i32
  }
  func.func @transform_3(%arg0: i32, %arg1: i32) -> (i32, i32) {
    %c0_i32 = arith.constant 0 : i32
    return %arg0, %arg1 : i32, i32
  }
}

module attributes {stable_mosaic.version = 11 : i64} {
  func.func @_matmul_bias_relu_kernel(%arg0: i32, %arg1: i32, %arg2: memref<512x4xbf16, #tpu.memory_space<vmem>>, %arg3: memref<4x128xbf16, #tpu.memory_space<vmem>>, %arg4: memref<1x128xf32, #tpu.memory_space<vmem>>, %arg5: memref<512x128xf32, #tpu.memory_space<vmem>>) attributes {dimension_semantics = [#tpu.dimension_semantics<parallel>, #tpu.dimension_semantics<parallel>], iteration_bounds = array<i64: 1, 2>, scalar_prefetch = 0 : i64, scratch_operands = 0 : i64, tpu.core_type = #tpu.core_type<tc>, window_params = [{transform_indices = @transform_0, window_bounds = array<i64: 512, 4>}, {transform_indices = @transform_1, window_bounds = array<i64: 4, 128>}, {transform_indices = @transform_2, window_bounds = array<i64: 1, 128>}, {transform_indices = @transform_3, window_bounds = array<i64: 512, 128>}]} {
    %c0 = arith.constant 0 : index
    %c0_0 = arith.constant 0 : index
    %0 = vector.load %arg2[%c0, %c0_0] : memref<512x4xbf16, #tpu.memory_space<vmem>>, vector<512x4xbf16>
    %c0_1 = arith.constant 0 : index
    %c0_2 = arith.constant 0 : index
    %1 = vector.load %arg3[%c0_1, %c0_2] : memref<4x128xbf16, #tpu.memory_space<vmem>>, vector<4x128xbf16>
    %cst = arith.constant dense<0.000000e+00> : vector<512x128xf32>
    %2 = tpu.matmul %0, %1, %cst {dimension_numbers = #tpu.dot_dimension_numbers<[1], [0], [0], [1], [0, 0, 1, 1], [], []>} : vector<512x4xbf16>, vector<4x128xbf16>, vector<512x128xf32> -> vector<512x128xf32>
    %c0_3 = arith.constant 0 : index
    %c0_4 = arith.constant 0 : index
    %3 = vector.load %arg4[%c0_3, %c0_4] : memref<1x128xf32, #tpu.memory_space<vmem>>, vector<1x128xf32>
    %4 = vector.broadcast %3 : vector<1x128xf32> to vector<512x128xf32>
    %5 = arith.addf %2, %4 : vector<512x128xf32>
    %cst_5 = arith.constant 0.000000e+00 : f32
    %6 = vector.broadcast %cst_5 : f32 to vector<512x128xf32>
    %7 = arith.maximumf %5, %6 : vector<512x128xf32>
    %c0_6 = arith.constant 0 : index
    %c0_7 = arith.constant 0 : index
    %8 = vector.load %arg5[%c0_6, %c0_7] : memref<512x128xf32, #tpu.memory_space<vmem>>, vector<512x128xf32>
    tpu.vector_store %arg5[%c0_6, %c0_7], %7 {strides = array<i32>} : memref<512x128xf32, #tpu.memory_space<vmem>>, vector<512x128xf32>,
    return
  }
  func.func @transform_0(%arg0: i32, %arg1: i32) -> (i32, i32) {
    %c0_i32 = arith.constant 0 : i32
    %c0_i32_0 = arith.constant 0 : i32
    return %arg0, %c0_i32 : i32, i32
  }
  func.func @transform_1(%arg0: i32, %arg1: i32) -> (i32, i32) {
    %c0_i32 = arith.constant 0 : i32
    %c0_i32_0 = arith.constant 0 : i32
    return %c0_i32, %arg1 : i32, i32
  }
  func.func @transform_2(%arg0: i32, %arg1: i32) -> (i32, i32) {
    %c0_i32 = arith.constant 0 : i32
    %c0_i32_0 = arith.constant 0 : i32
    return %c0_i32, %arg1 : i32, i32
  }
  func.func @transform_3(%arg0: i32, %arg1: i32) -> (i32, i32) {
    %c0_i32 = arith.constant 0 : i32
    return %arg0, %arg1 : i32, i32
  }
}

module attributes {stable_mosaic.version = 11 : i64} {
  func.func @_matmul_bias_relu_kernel(%arg0: i32, %arg1: i32, %arg2: memref<512x56xbf16, #tpu.memory_space<vmem>>, %arg3: memref<56x128xbf16, #tpu.memory_space<vmem>>, %arg4: memref<1x128xf32, #tpu.memory_space<vmem>>, %arg5: memref<512x128xf32, #tpu.memory_space<vmem>>) attributes {dimension_semantics = [#tpu.dimension_semantics<parallel>, #tpu.dimension_semantics<parallel>], iteration_bounds = array<i64: 1, 1>, scalar_prefetch = 0 : i64, scratch_operands = 0 : i64, tpu.core_type = #tpu.core_type<tc>, window_params = [{transform_indices = @transform_0, window_bounds = array<i64: 512, 56>}, {transform_indices = @transform_1, window_bounds = array<i64: 56, 128>}, {transform_indices = @transform_2, window_bounds = array<i64: 1, 128>}, {transform_indices = @transform_3, window_bounds = array<i64: 512, 128>}]} {
    %c0 = arith.constant 0 : index
    %c0_0 = arith.constant 0 : index
    %0 = vector.load %arg2[%c0, %c0_0] : memref<512x56xbf16, #tpu.memory_space<vmem>>, vector<512x56xbf16>
    %c0_1 = arith.constant 0 : index
    %c0_2 = arith.constant 0 : index
    %1 = vector.load %arg3[%c0_1, %c0_2] : memref<56x128xbf16, #tpu.memory_space<vmem>>, vector<56x128xbf16>
    %cst = arith.constant dense<0.000000e+00> : vector<512x128xf32>
    %2 = tpu.matmul %0, %1, %cst {dimension_numbers = #tpu.dot_dimension_numbers<[1], [0], [0], [1], [0, 0, 1, 1], [], []>} : vector<512x56xbf16>, vector<56x128xbf16>, vector<512x128xf32> -> vector<512x128xf32>
    %c0_3 = arith.constant 0 : index
    %c0_4 = arith.constant 0 : index
    %3 = vector.load %arg4[%c0_3, %c0_4] : memref<1x128xf32, #tpu.memory_space<vmem>>, vector<1x128xf32>
    %4 = vector.broadcast %3 : vector<1x128xf32> to vector<512x128xf32>
    %5 = arith.addf %2, %4 : vector<512x128xf32>
    %cst_5 = arith.constant 0.000000e+00 : f32
    %6 = vector.broadcast %cst_5 : f32 to vector<512x128xf32>
    %7 = arith.maximumf %5, %6 : vector<512x128xf32>
    %c0_6 = arith.constant 0 : index
    %c0_7 = arith.constant 0 : index
    %8 = vector.load %arg5[%c0_6, %c0_7] : memref<512x128xf32, #tpu.memory_space<vmem>>, vector<512x128xf32>
    tpu.vector_store %arg5[%c0_6, %c0_7], %7 {strides = array<i32>} : memref<512x128xf32, #tpu.memory_space<vmem>>, vector<512x128xf32>,
    return
  }
  func.func @transform_0(%arg0: i32, %arg1: i32) -> (i32, i32) {
    %c0_i32 = arith.constant 0 : i32
    %c0_i32_0 = arith.constant 0 : i32
    return %arg0, %c0_i32 : i32, i32
  }
  func.func @transform_1(%arg0: i32, %arg1: i32) -> (i32, i32) {
    %c0_i32 = arith.constant 0 : i32
    %c0_i32_0 = arith.constant 0 : i32
    return %c0_i32, %arg1 : i32, i32
  }
  func.func @transform_2(%arg0: i32, %arg1: i32) -> (i32, i32) {
    %c0_i32 = arith.constant 0 : i32
    %c0_i32_0 = arith.constant 0 : i32
    return %c0_i32, %arg1 : i32, i32
  }
  func.func @transform_3(%arg0: i32, %arg1: i32) -> (i32, i32) {
    %c0_i32 = arith.constant 0 : i32
    return %arg0, %arg1 : i32, i32
  }
}

module attributes {stable_mosaic.version = 11 : i64} {
  func.func @_matmul_bias_relu_kernel(%arg0: i32, %arg1: i32, %arg2: memref<512x56xbf16, #tpu.memory_space<vmem>>, %arg3: memref<56x128xbf16, #tpu.memory_space<vmem>>, %arg4: memref<1x128xf32, #tpu.memory_space<vmem>>, %arg5: memref<512x128xf32, #tpu.memory_space<vmem>>) attributes {dimension_semantics = [#tpu.dimension_semantics<parallel>, #tpu.dimension_semantics<parallel>], iteration_bounds = array<i64: 1, 2>, scalar_prefetch = 0 : i64, scratch_operands = 0 : i64, tpu.core_type = #tpu.core_type<tc>, window_params = [{transform_indices = @transform_0, window_bounds = array<i64: 512, 56>}, {transform_indices = @transform_1, window_bounds = array<i64: 56, 128>}, {transform_indices = @transform_2, window_bounds = array<i64: 1, 128>}, {transform_indices = @transform_3, window_bounds = array<i64: 512, 128>}]} {
    %c0 = arith.constant 0 : index
    %c0_0 = arith.constant 0 : index
    %0 = vector.load %arg2[%c0, %c0_0] : memref<512x56xbf16, #tpu.memory_space<vmem>>, vector<512x56xbf16>
    %c0_1 = arith.constant 0 : index
    %c0_2 = arith.constant 0 : index
    %1 = vector.load %arg3[%c0_1, %c0_2] : memref<56x128xbf16, #tpu.memory_space<vmem>>, vector<56x128xbf16>
    %cst = arith.constant dense<0.000000e+00> : vector<512x128xf32>
    %2 = tpu.matmul %0, %1, %cst {dimension_numbers = #tpu.dot_dimension_numbers<[1], [0], [0], [1], [0, 0, 1, 1], [], []>} : vector<512x56xbf16>, vector<56x128xbf16>, vector<512x128xf32> -> vector<512x128xf32>
    %c0_3 = arith.constant 0 : index
    %c0_4 = arith.constant 0 : index
    %3 = vector.load %arg4[%c0_3, %c0_4] : memref<1x128xf32, #tpu.memory_space<vmem>>, vector<1x128xf32>
    %4 = vector.broadcast %3 : vector<1x128xf32> to vector<512x128xf32>
    %5 = arith.addf %2, %4 : vector<512x128xf32>
    %cst_5 = arith.constant 0.000000e+00 : f32
    %6 = vector.broadcast %cst_5 : f32 to vector<512x128xf32>
    %7 = arith.maximumf %5, %6 : vector<512x128xf32>
    %c0_6 = arith.constant 0 : index
    %c0_7 = arith.constant 0 : index
    %8 = vector.load %arg5[%c0_6, %c0_7] : memref<512x128xf32, #tpu.memory_space<vmem>>, vector<512x128xf32>
    tpu.vector_store %arg5[%c0_6, %c0_7], %7 {strides = array<i32>} : memref<512x128xf32, #tpu.memory_space<vmem>>, vector<512x128xf32>,
    return
  }
  func.func @transform_0(%arg0: i32, %arg1: i32) -> (i32, i32) {
    %c0_i32 = arith.constant 0 : i32
    %c0_i32_0 = arith.constant 0 : i32
    return %arg0, %c0_i32 : i32, i32
  }
  func.func @transform_1(%arg0: i32, %arg1: i32) -> (i32, i32) {
    %c0_i32 = arith.constant 0 : i32
    %c0_i32_0 = arith.constant 0 : i32
    return %c0_i32, %arg1 : i32, i32
  }
  func.func @transform_2(%arg0: i32, %arg1: i32) -> (i32, i32) {
    %c0_i32 = arith.constant 0 : i32
    %c0_i32_0 = arith.constant 0 : i32
    return %c0_i32, %arg1 : i32, i32
  }
  func.func @transform_3(%arg0: i32, %arg1: i32) -> (i32, i32) {
    %c0_i32 = arith.constant 0 : i32
    return %arg0, %arg1 : i32, i32
  }
}

</mosaic_0001>

<llo_original>
// kernel: inception_c_forward.14
$region0: #{inception_c_forward.14}
  #allocation0 [shape = 'u32[]', space=smem, size = 0x4, offset = 0x4, fixed_abs, tag = 'smem constant byte address 0x4 - core index']
  #allocation1 [shape = 'u32[144,128]{1,0:T(1,128)}', space=vmem, size = 0x12000, scoped, tag = 'internal scratch']
  %s0 = inlined_call_operand.vmem [shape: bf16[512,4], index: 0, kind: input, shape index: {}]
  %s1 = inlined_call_operand.vmem [shape: bf16[4,128], index: 1, kind: input, shape index: {}]
  %s2 = inlined_call_operand.vmem [shape: f32[1,128], index: 2, kind: input, shape index: {}]
  %s3 = inlined_call_operand.vmem [shape: f32[512,128], index: 3, kind: output, shape index: {}]
  %s4 = sld [smem:[#allocation0]]
  $region22: #{inception_c_forward.14} parent=0
    _
  %s6 = ssub.s32 1, %s4
  %s7 = scalar_select 0, %s6, %s4
  // Predicated region
  $region2: #{inception_c_forward.14} parent=0 // pred_check
    _
  $region3: #{inception_c_forward.14} parent=0 // pred_check_branch
    %9 = sbr.rel (0) target = $region5
  $region4: #{inception_c_forward.14} parent=0 // pred_region
    _
  $region5: #{inception_c_forward.14} parent=0 // pred_fallthru
    _
  // Predicated region
  $region6: #{inception_c_forward.14} parent=0 // pred_check
    _
  $region7: #{inception_c_forward.14} parent=0 // pred_check_branch
    %11 = sbr.rel (0) target = $region9
  $region8: #{inception_c_forward.14} parent=0 // pred_region
    _
  $region9: #{inception_c_forward.14} parent=0 // pred_fallthru
    _
  // Predicated region
  $region10: #{inception_c_forward.14} parent=0 // pred_check
    _
  $region11: #{inception_c_forward.14} parent=0 // pred_check_branch
    %13 = sbr.rel (0) target = $region13
  $region12: #{inception_c_forward.14} parent=0 // pred_region
    _
  $region13: #{inception_c_forward.14} parent=0 // pred_fallthru
    _
  %v15 = vld [vmem:[%s0] sm:$0xf]
  %v16 = vld [vmem:[%s0 + $0x4] sm:$0xf]
  %v17 = vld [vmem:[%s0 + $0x8] sm:$0xf]
  %v18 = vld [vmem:[%s0 + $0xc] sm:$0xf]
  %v19 = vld [vmem:[%s0 + $0x10] sm:$0xf]
  %v20 = vld [vmem:[%s0 + $0x14] sm:$0xf]
  %v21 = vld [vmem:[%s0 + $0x18] sm:$0xf]
  %v22 = vld [vmem:[%s0 + $0x1c] sm:$0xf]
  %v23 = vld [vmem:[%s0 + $0x20] sm:$0xf]
  %v24 = vld [vmem:[%s0 + $0x24] sm:$0xf]
  %v25 = vld [vmem:[%s0 + $0x28] sm:$0xf]
  %v26 = vld [vmem:[%s0 + $0x2c] sm:$0xf]
  %v27 = vld [vmem:[%s0 + $0x30] sm:$0xf]
  %v28 = vld [vmem:[%s0 + $0x34] sm:$0xf]
  %v29 = vld [vmem:[%s0 + $0x38] sm:$0xf]
  %v30 = vld [vmem:[%s0 + $0x3c] sm:$0xf]
  %v31 = vld [vmem:[%s0 + $0x40] sm:$0xf]
  %v32 = vld [vmem:[%s0 + $0x44] sm:$0xf]
  %v33 = vld [vmem:[%s0 + $0x48] sm:$0xf]
  %v34 = vld [vmem:[%s0 + $0x4c] sm:$0xf]
  %v35 = vld [vmem:[%s0 + $0x50] sm:$0xf]
  %v36 = vld [vmem:[%s0 + $0x54] sm:$0xf]
  %v37 = vld [vmem:[%s0 + $0x58] sm:$0xf]
  %v38 = vld [vmem:[%s0 + $0x5c] sm:$0xf]
  %v39 = vld [vmem:[%s0 + $0x60] sm:$0xf]
  %v40 = vld [vmem:[%s0 + $0x64] sm:$0xf]
  %v41 = vld [vmem:[%s0 + $0x68] sm:$0xf]
  %v42 = vld [vmem:[%s0 + $0x6c] sm:$0xf]
  %v43 = vld [vmem:[%s0 + $0x70] sm:$0xf]
  %v44 = vld [vmem:[%s0 + $0x74] sm:$0xf]
  %v45 = vld [vmem:[%s0 + $0x78] sm:$0xf]
  %v46 = vld [vmem:[%s0 + $0x7c] sm:$0xf]
  %v47 = vld [vmem:[%s0 + $0x80] sm:$0xf]
  %v48 = vld [vmem:[%s0 + $0x84] sm:$0xf]
  %v49 = vld [vmem:[%s0 + $0x88] sm:$0xf]
  %v50 = vld [vmem:[%s0 + $0x8c] sm:$0xf]
  %v51 = vld [vmem:[%s0 + $0x90] sm:$0xf]
  %v52 = vld [vmem:[%s0 + $0x94] sm:$0xf]
  %v53 = vld [vmem:[%s0 + $0x98] sm:$0xf]
  %v54 = vld [vmem:[%s0 + $0x9c] sm:$0xf]
  %v55 = vld [vmem:[%s0 + $0xa0] sm:$0xf]
  %v56 = vld [vmem:[%s0 + $0xa4] sm:$0xf]
  %v57 = vld [vmem:[%s0 + $0xa8] sm:$0xf]
  %v58 = vld [vmem:[%s0 + $0xac] sm:$0xf]
  %v59 = vld [vmem:[%s0 + $0xb0] sm:$0xf]
  %v60 = vld [vmem:[%s0 + $0xb4] sm:$0xf]
  %v61 = vld [vmem:[%s0 + $0xb8] sm:$0xf]
  %v62 = vld [vmem:[%s0 + $0xbc] sm:$0xf]
  %v63 = vld [vmem:[%s0 + $0xc0] sm:$0xf]
  %v64 = vld [vmem:[%s0 + $0xc4] sm:$0xf]
  %v65 = vld [vmem:[%s0 + $0xc8] sm:$0xf]
  %v66 = vld [vmem:[%s0 + $0xcc] sm:$0xf]
  %v67 = vld [vmem:[%s0 + $0xd0] sm:$0xf]
  %v68 = vld [vmem:[%s0 + $0xd4] sm:$0xf]
  %v69 = vld [vmem:[%s0 + $0xd8] sm:$0xf]
  %v70 = vld [vmem:[%s0 + $0xdc] sm:$0xf]
  %v71 = vld [vmem:[%s0 + $0xe0] sm:$0xf]
  %v72 = vld [vmem:[%s0 + $0xe4] sm:$0xf]
  %v73 = vld [vmem:[%s0 + $0xe8] sm:$0xf]
  %v74 = vld [vmem:[%s0 + $0xec] sm:$0xf]
  %v75 = vld [vmem:[%s0 + $0xf0] sm:$0xf]
  %v76 = vld [vmem:[%s0 + $0xf4] sm:$0xf]
  %v77 = vld [vmem:[%s0 + $0xf8] sm:$0xf]
  %v78 = vld [vmem:[%s0 + $0xfc] sm:$0xf]
  %v79 = vld [vmem:[%s1] sm:$0x3]
  %v80 = vld [vmem:[%s2] sm:$0x1]
  %v82 = vlaneseq
  %v83 = vshrl.u32 %v82, 7
  %v84 = vsub.s32 0, %v83
  %v85 = vrot.slane %v80, %v84
  %v151 = vunpack.c.l.b16 %v15
  %v152 = vunpack.c.l.b16 %v16
  %v153 = vunpack.c.l.b16 %v17
  %v154 = vunpack.c.l.b16 %v18
  %v155 = vunpack.c.l.b16 %v19
  %v156 = vunpack.c.l.b16 %v20
  %v157 = vunpack.c.l.b16 %v21
  %v158 = vunpack.c.l.b16 %v22
  %v159 = vunpack.c.l.b16 %v23
  %v160 = vunpack.c.l.b16 %v24
  %v161 = vunpack.c.l.b16 %v25
  %v162 = vunpack.c.l.b16 %v26
  %v163 = vunpack.c.l.b16 %v27
  %v164 = vunpack.c.l.b16 %v28
  %v165 = vunpack.c.l.b16 %v29
  %v166 = vunpack.c.l.b16 %v30
  %v167 = vunpack.c.l.b16 %v31
  %v168 = vunpack.c.l.b16 %v32
  %v169 = vunpack.c.l.b16 %v33
  %v170 = vunpack.c.l.b16 %v34
  %v171 = vunpack.c.l.b16 %v35
  %v172 = vunpack.c.l.b16 %v36
  %v173 = vunpack.c.l.b16 %v37
  %v174 = vunpack.c.l.b16 %v38
  %v175 = vunpack.c.l.b16 %v39
  %v176 = vunpack.c.l.b16 %v40
  %v177 = vunpack.c.l.b16 %v41
  %v178 = vunpack.c.l.b16 %v42
  %v179 = vunpack.c.l.b16 %v43
  %v180 = vunpack.c.l.b16 %v44
  %v181 = vunpack.c.l.b16 %v45
  %v182 = vunpack.c.l.b16 %v46
  %v183 = vunpack.c.l.b16 %v47
  %v184 = vunpack.c.l.b16 %v48
  %v185 = vunpack.c.l.b16 %v49
  %v186 = vunpack.c.l.b16 %v50
  %v187 = vunpack.c.l.b16 %v51
  %v188 = vunpack.c.l.b16 %v52
  %v189 = vunpack.c.l.b16 %v53
  %v190 = vunpack.c.l.b16 %v54
  %v191 = vunpack.c.l.b16 %v55
  %v192 = vunpack.c.l.b16 %v56
  %v193 = vunpack.c.l.b16 %v57
  %v194 = vunpack.c.l.b16 %v58
  %v195 = vunpack.c.l.b16 %v59
  %v196 = vunpack.c.l.b16 %v60
  %v197 = vunpack.c.l.b16 %v61
  %v198 = vunpack.c.l.b16 %v62
  %v199 = vunpack.c.l.b16 %v63
  %v200 = vunpack.c.l.b16 %v64
  %v201 = vunpack.c.l.b16 %v65
  %v202 = vunpack.c.l.b16 %v66
  %v203 = vunpack.c.l.b16 %v67
  %v204 = vunpack.c.l.b16 %v68
  %v205 = vunpack.c.l.b16 %v69
  %v206 = vunpack.c.l.b16 %v70
  %v207 = vunpack.c.l.b16 %v71
  %v208 = vunpack.c.l.b16 %v72
  %v209 = vunpack.c.l.b16 %v73
  %v210 = vunpack.c.l.b16 %v74
  %v211 = vunpack.c.l.b16 %v75
  %v212 = vunpack.c.l.b16 %v76
  %v213 = vunpack.c.l.b16 %v77
  %v214 = vunpack.c.l.b16 %v78
  %v215 = vpack.c.b16 %v152, %v151
  %v216 = vpack.c.b16 %v154, %v153
  %v217 = vpack.c.b16 %v156, %v155
  %v218 = vpack.c.b16 %v158, %v157
  %v219 = vpack.c.b16 %v160, %v159
  %v220 = vpack.c.b16 %v162, %v161
  %v221 = vpack.c.b16 %v164, %v163
  %v222 = vpack.c.b16 %v166, %v165
  %v223 = vpack.c.b16 %v168, %v167
  %v224 = vpack.c.b16 %v170, %v169
  %v225 = vpack.c.b16 %v172, %v171
  %v226 = vpack.c.b16 %v174, %v173
  %v227 = vpack.c.b16 %v176, %v175
  %v228 = vpack.c.b16 %v178, %v177
  %v229 = vpack.c.b16 %v180, %v179
  %v230 = vpack.c.b16 %v182, %v181
  %v231 = vpack.c.b16 %v184, %v183
  %v232 = vpack.c.b16 %v186, %v185
  %v233 = vpack.c.b16 %v188, %v187
  %v234 = vpack.c.b16 %v190, %v189
  %v235 = vpack.c.b16 %v192, %v191
  %v236 = vpack.c.b16 %v194, %v193
  %v237 = vpack.c.b16 %v196, %v195
  %v238 = vpack.c.b16 %v198, %v197
  %v239 = vpack.c.b16 %v200, %v199
  %v240 = vpack.c.b16 %v202, %v201
  %v241 = vpack.c.b16 %v204, %v203
  %v242 = vpack.c.b16 %v206, %v205
  %v243 = vpack.c.b16 %v208, %v207
  %v244 = vpack.c.b16 %v210, %v209
  %v245 = vpack.c.b16 %v212, %v211
  %v246 = vpack.c.b16 %v214, %v213
  %vm247 = vcmask 31744
  %v249 = vsel %vm247, %v215, 0
  %v252 = vsel %vm247, %v216, 0
  %v255 = vsel %vm247, %v217, 0
  %v258 = vsel %vm247, %v218, 0
  %v261 = vsel %vm247, %v219, 0
  %v264 = vsel %vm247, %v220, 0
  %v267 = vsel %vm247, %v221, 0
  %v270 = vsel %vm247, %v222, 0
  %v273 = vsel %vm247, %v223, 0
  %v276 = vsel %vm247, %v224, 0
  %v279 = vsel %vm247, %v225, 0
  %v282 = vsel %vm247, %v226, 0
  %v285 = vsel %vm247, %v227, 0
  %v288 = vsel %vm247, %v228, 0
  %v291 = vsel %vm247, %v229, 0
  %v294 = vsel %vm247, %v230, 0
  %v297 = vsel %vm247, %v231, 0
  %v300 = vsel %vm247, %v232, 0
  %v303 = vsel %vm247, %v233, 0
  %v306 = vsel %vm247, %v234, 0
  %v309 = vsel %vm247, %v235, 0
  %v312 = vsel %vm247, %v236, 0
  %v315 = vsel %vm247, %v237, 0
  %v318 = vsel %vm247, %v238, 0
  %v321 = vsel %vm247, %v239, 0
  %v324 = vsel %vm247, %v240, 0
  %v327 = vsel %vm247, %v241, 0
  %v330 = vsel %vm247, %v242, 0
  %v333 = vsel %vm247, %v243, 0
  %v336 = vsel %vm247, %v244, 0
  %v339 = vsel %vm247, %v245, 0
  %v342 = vsel %vm247, %v246, 0
  %vm344 = vcmask 1041408
  %v346 = vsel %vm344, %v79, 0
  %348 = vmatprep.subr.bf16.mxu0 0
  %349 = vmatpush1.bf16.msra.mxu0 %v346
  %350 = vmatprep.subr.bf16.mxu0 0
  %351 = vmatpush1.bf16.msra.mxu0 0
  %352 = vmatprep.subr.bf16.mxu0 0
  %353 = vmatpush1.bf16.msra.mxu0 0
  %354 = vmatprep.subr.bf16.mxu0 0
  %355 = vmatpush1.bf16.msra.mxu0 0
  %356 = vmatprep.subr.bf16.mxu0 0
  %357 = vmatpush1.bf16.msra.mxu0 0
  %358 = vmatprep.subr.bf16.mxu0 0
  %359 = vmatpush1.bf16.msra.mxu0 0
  %360 = vmatprep.subr.bf16.mxu0 0
  %361 = vmatpush1.bf16.msra.mxu0 0
  %362 = vmatprep.subr.bf16.mxu0 0
  %363 = vmatpush1.bf16.msra.mxu0 0
  %364 = vmatprep.subr.bf16.mxu0 0
  %365 = vmatpush1.bf16.msra.mxu0 0
  %366 = vmatprep.subr.bf16.mxu0 0
  %367 = vmatpush1.bf16.msra.mxu0 0
  %368 = vmatprep.subr.bf16.mxu0 0
  %369 = vmatpush1.bf16.msra.mxu0 0
  %370 = vmatprep.subr.bf16.mxu0 0
  %371 = vmatpush1.bf16.msra.mxu0 0
  %372 = vmatprep.subr.bf16.mxu0 0
  %373 = vmatpush1.bf16.msra.mxu0 0
  %374 = vmatprep.subr.bf16.mxu0 0
  %375 = vmatpush1.bf16.msra.mxu0 0
  %376 = vmatprep.subr.bf16.mxu0 0
  %377 = vmatpush1.bf16.msra.mxu0 0
  %378 = vmatprep.subr.bf16.mxu0 0
  %379 = vmatpush1.bf16.msra.mxu0 0
  %380 = vmatprep.mubr.bf16.mxu0 0
  %381 = vmatmul.mubr.bf16.gmra.mrb[0].mxu0 %v249
  %v382 = vpop.f32.mrb[0].mxu0
  %v383 = vadd.f32 %v85, %v382
  %v384 = vpop.f32.mrb[0].mxu0
  %v385 = vpop.f32.mrb[0].mxu0
  %v386 = vadd.f32 %v85, %v385
  %v387 = vpop.f32.mrb[0].mxu0
  %388 = vmatprep.mubr.bf16.mxu0 0
  %389 = vmatmul.mubr.bf16.gmra.mrb[0].mxu0 %v252
  %v390 = vpop.f32.mrb[0].mxu0
  %v391 = vadd.f32 %v85, %v390
  %v392 = vpop.f32.mrb[0].mxu0
  %v393 = vpop.f32.mrb[0].mxu0
  %v394 = vadd.f32 %v85, %v393
  %v395 = vpop.f32.mrb[0].mxu0
  %396 = vmatprep.mubr.bf16.mxu0 0
  %397 = vmatmul.mubr.bf16.gmra.mrb[0].mxu0 %v255
  %v398 = vpop.f32.mrb[0].mxu0
  %v399 = vadd.f32 %v85, %v398
  %v400 = vpop.f32.mrb[0].mxu0
  %v401 = vpop.f32.mrb[0].mxu0
  %v402 = vadd.f32 %v85, %v401
  %v403 = vpop.f32.mrb[0].mxu0
  %404 = vmatprep.mubr.bf16.mxu0 0
  %405 = vmatmul.mubr.bf16.gmra.mrb[0].mxu0 %v258
  %v406 = vpop.f32.mrb[0].mxu0
  %v407 = vadd.f32 %v85, %v406
  %v408 = vpop.f32.mrb[0].mxu0
  %v409 = vpop.f32.mrb[0].mxu0
  %v410 = vadd.f32 %v85, %v409
  %v411 = vpop.f32.mrb[0].mxu0
  %412 = vmatprep.mubr.bf16.mxu0 0
  %413 = vmatmul.mubr.bf16.gmra.mrb[0].mxu0 %v261
  %v414 = vpop.f32.mrb[0].mxu0
  %v415 = vadd.f32 %v85, %v414
  %v416 = vpop.f32.mrb[0].mxu0
  %v417 = vpop.f32.mrb[0].mxu0
  %v418 = vadd.f32 %v85, %v417
  %v419 = vpop.f32.mrb[0].mxu0
  %420 = vmatprep.mubr.bf16.mxu0 0
  %421 = vmatmul.mubr.bf16.gmra.mrb[0].mxu0 %v264
  %v422 = vpop.f32.mrb[0].mxu0
  %v423 = vadd.f32 %v85, %v422
  %v424 = vpop.f32.mrb[0].mxu0
  %v425 = vpop.f32.mrb[0].mxu0
  %v426 = vadd.f32 %v85, %v425
  %v427 = vpop.f32.mrb[0].mxu0
  %428 = vmatprep.mubr.bf16.mxu0 0
  %429 = vmatmul.mubr.bf16.gmra.mrb[0].mxu0 %v267
  %v430 = vpop.f32.mrb[0].mxu0
  %v431 = vadd.f32 %v85, %v430
  %v432 = vpop.f32.mrb[0].mxu0
  %v433 = vpop.f32.mrb[0].mxu0
  %v434 = vadd.f32 %v85, %v433
  %v435 = vpop.f32.mrb[0].mxu0
  %436 = vmatprep.mubr.bf16.mxu0 0
  %437 = vmatmul.mubr.bf16.gmra.mrb[0].mxu0 %v270
  %v438 = vpop.f32.mrb[0].mxu0
  %v439 = vadd.f32 %v85, %v438
  %v440 = vpop.f32.mrb[0].mxu0
  %v441 = vpop.f32.mrb[0].mxu0
  %v442 = vadd.f32 %v85, %v441
  %v443 = vpop.f32.mrb[0].mxu0
  %444 = vmatprep.mubr.bf16.mxu0 0
  %445 = vmatmul.mubr.bf16.gmra.mrb[0].mxu0 %v273
  %v446 = vpop.f32.mrb[0].mxu0
  %v447 = vadd.f32 %v85, %v446
  %v448 = vpop.f32.mrb[0].mxu0
  %v449 = vpop.f32.mrb[0].mxu0
  %v450 = vadd.f32 %v85, %v449
  %v451 = vpop.f32.mrb[0].mxu0
  %452 = vmatprep.mubr.bf16.mxu0 0
  %453 = vmatmul.mubr.bf16.gmra.mrb[0].mxu0 %v276
  %v454 = vpop.f32.mrb[0].mxu0
  %v455 = vadd.f32 %v85, %v454
  %v456 = vpop.f32.mrb[0].mxu0
  %v457 = vpop.f32.mrb[0].mxu0
  %v458 = vadd.f32 %v85, %v457
  %v459 = vpop.f32.mrb[0].mxu0
  %460 = vmatprep.mubr.bf16.mxu0 0
  %461 = vmatmul.mubr.bf16.gmra.mrb[0].mxu0 %v279
  %v462 = vpop.f32.mrb[0].mxu0
  %v463 = vadd.f32 %v85, %v462
  %v464 = vpop.f32.mrb[0].mxu0
  %v465 = vpop.f32.mrb[0].mxu0
  %v466 = vadd.f32 %v85, %v465
  %v467 = vpop.f32.mrb[0].mxu0
  %468 = vmatprep.mubr.bf16.mxu0 0
  %469 = vmatmul.mubr.bf16.gmra.mrb[0].mxu0 %v282
  %v470 = vpop.f32.mrb[0].mxu0
  %v471 = vadd.f32 %v85, %v470
  %v472 = vpop.f32.mrb[0].mxu0
  %v473 = vpop.f32.mrb[0].mxu0
  %v474 = vadd.f32 %v85, %v473
  %v475 = vpop.f32.mrb[0].mxu0
  %476 = vmatprep.mubr.bf16.mxu0 0
  %477 = vmatmul.mubr.bf16.gmra.mrb[0].mxu0 %v285
  %v478 = vpop.f32.mrb[0].mxu0
  %v479 = vadd.f32 %v85, %v478
  %v480 = vpop.f32.mrb[0].mxu0
  %v481 = vpop.f32.mrb[0].mxu0
  %v482 = vadd.f32 %v85, %v481
  %v483 = vpop.f32.mrb[0].mxu0
  %484 = vmatprep.mubr.bf16.mxu0 0
  %485 = vmatmul.mubr.bf16.gmra.mrb[0].mxu0 %v288
  %v486 = vpop.f32.mrb[0].mxu0
  %v487 = vadd.f32 %v85, %v486
  %v488 = vpop.f32.mrb[0].mxu0
  %v489 = vpop.f32.mrb[0].mxu0
  %v490 = vadd.f32 %v85, %v489
  %v491 = vpop.f32.mrb[0].mxu0
  %492 = vmatprep.mubr.bf16.mxu0 0
  %493 = vmatmul.mubr.bf16.gmra.mrb[0].mxu0 %v291
  %v494 = vpop.f32.mrb[0].mxu0
  %v495 = vadd.f32 %v85, %v494
  %v496 = vpop.f32.mrb[0].mxu0
  %v497 = vpop.f32.mrb[0].mxu0
  %v498 = vadd.f32 %v85, %v497
  %v499 = vpop.f32.mrb[0].mxu0
  %500 = vmatprep.mubr.bf16.mxu0 0
  %501 = vmatmul.mubr.bf16.gmra.mrb[0].mxu0 %v294
  %v502 = vpop.f32.mrb[0].mxu0
  %v503 = vadd.f32 %v85, %v502
  %v504 = vpop.f32.mrb[0].mxu0
  %v505 = vpop.f32.mrb[0].mxu0
  %v506 = vadd.f32 %v85, %v505
  %v507 = vpop.f32.mrb[0].mxu0
  %508 = vmatprep.mubr.bf16.mxu0 0
  %509 = vmatmul.mubr.bf16.gmra.mrb[0].mxu0 %v297
  %v510 = vpop.f32.mrb[0].mxu0
  %v511 = vadd.f32 %v85, %v510
  %v512 = vpop.f32.mrb[0].mxu0
  %v513 = vpop.f32.mrb[0].mxu0
  %v514 = vadd.f32 %v85, %v513
  %v515 = vpop.f32.mrb[0].mxu0
  %516 = vmatprep.mubr.bf16.mxu0 0
  %517 = vmatmul.mubr.bf16.gmra.mrb[0].mxu0 %v300
  %v518 = vpop.f32.mrb[0].mxu0
  %v519 = vadd.f32 %v85, %v518
  %v520 = vpop.f32.mrb[0].mxu0
  %v521 = vpop.f32.mrb[0].mxu0
  %v522 = vadd.f32 %v85, %v521
  %v523 = vpop.f32.mrb[0].mxu0
  %524 = vmatprep.mubr.bf16.mxu0 0
  %525 = vmatmul.mubr.bf16.gmra.mrb[0].mxu0 %v303
  %v526 = vpop.f32.mrb[0].mxu0
  %v527 = vadd.f32 %v85, %v526
  %v528 = vpop.f32.mrb[0].mxu0
  %v529 = vpop.f32.mrb[0].mxu0
  %v530 = vadd.f32 %v85, %v529
  %v531 = vpop.f32.mrb[0].mxu0
  %532 = vmatprep.mubr.bf16.mxu0 0
  %533 = vmatmul.mubr.bf16.gmra.mrb[0].mxu0 %v306
  %v534 = vpop.f32.mrb[0].mxu0
  %v535 = vadd.f32 %v85, %v534
  %v536 = vpop.f32.mrb[0].mxu0
  %v537 = vpop.f32.mrb[0].mxu0
  %v538 = vadd.f32 %v85, %v537
  %v539 = vpop.f32.mrb[0].mxu0
  %540 = vmatprep.mubr.bf16.mxu0 0
  %541 = vmatmul.mubr.bf16.gmra.mrb[0].mxu0 %v309
  %v542 = vpop.f32.mrb[0].mxu0
  %v543 = vadd.f32 %v85, %v542
  %v544 = vpop.f32.mrb[0].mxu0
  %v545 = vpop.f32.mrb[0].mxu0
  %v546 = vadd.f32 %v85, %v545
  %v547 = vpop.f32.mrb[0].mxu0
  %548 = vmatprep.mubr.bf16.mxu0 0
  %549 = vmatmul.mubr.bf16.gmra.mrb[0].mxu0 %v312
  %v550 = vpop.f32.mrb[0].mxu0
  %v551 = vadd.f32 %v85, %v550
  %v552 = vpop.f32.mrb[0].mxu0
  %v553 = vpop.f32.mrb[0].mxu0
  %v554 = vadd.f32 %v85, %v553
  %v555 = vpop.f32.mrb[0].mxu0
  %556 = vmatprep.mubr.bf16.mxu0 0
  %557 = vmatmul.mubr.bf16.gmra.mrb[0].mxu0 %v315
  %v558 = vpop.f32.mrb[0].mxu0
  %v559 = vadd.f32 %v85, %v558
  %v560 = vpop.f32.mrb[0].mxu0
  %v561 = vpop.f32.mrb[0].mxu0
  %v562 = vadd.f32 %v85, %v561
  %v563 = vpop.f32.mrb[0].mxu0
  %564 = vmatprep.mubr.bf16.mxu0 0
  %565 = vmatmul.mubr.bf16.gmra.mrb[0].mxu0 %v318
  %v566 = vpop.f32.mrb[0].mxu0
  %v567 = vadd.f32 %v85, %v566
  %v568 = vpop.f32.mrb[0].mxu0
  %v569 = vpop.f32.mrb[0].mxu0
  %v570 = vadd.f32 %v85, %v569
  %v571 = vpop.f32.mrb[0].mxu0
  %572 = vmatprep.mubr.bf16.mxu0 0
  %573 = vmatmul.mubr.bf16.gmra.mrb[0].mxu0 %v321
  %v574 = vpop.f32.mrb[0].mxu0
  %v575 = vadd.f32 %v85, %v574
  %v576 = vpop.f32.mrb[0].mxu0
  %v577 = vpop.f32.mrb[0].mxu0
  %v578 = vadd.f32 %v85, %v577
  %v579 = vpop.f32.mrb[0].mxu0
  %580 = vmatprep.mubr.bf16.mxu0 0
  %581 = vmatmul.mubr.bf16.gmra.mrb[0].mxu0 %v324
  %v582 = vpop.f32.mrb[0].mxu0
  %v583 = vadd.f32 %v85, %v582
  %v584 = vpop.f32.mrb[0].mxu0
  %v585 = vpop.f32.mrb[0].mxu0
  %v586 = vadd.f32 %v85, %v585
  %v587 = vpop.f32.mrb[0].mxu0
  %588 = vmatprep.mubr.bf16.mxu0 0
  %589 = vmatmul.mubr.bf16.gmra.mrb[0].mxu0 %v327
  %v590 = vpop.f32.mrb[0].mxu0
  %v591 = vadd.f32 %v85, %v590
  %v592 = vpop.f32.mrb[0].mxu0
  %v593 = vpop.f32.mrb[0].mxu0
  %v594 = vadd.f32 %v85, %v593
  %v595 = vpop.f32.mrb[0].mxu0
  %596 = vmatprep.mubr.bf16.mxu0 0
  %597 = vmatmul.mubr.bf16.gmra.mrb[0].mxu0 %v330
  %v598 = vpop.f32.mrb[0].mxu0
  %v599 = vadd.f32 %v85, %v598
  %v600 = vpop.f32.mrb[0].mxu0
  %v601 = vpop.f32.mrb[0].mxu0
  %v602 = vadd.f32 %v85, %v601
  %v603 = vpop.f32.mrb[0].mxu0
  %604 = vmatprep.mubr.bf16.mxu0 0
  %605 = vmatmul.mubr.bf16.gmra.mrb[0].mxu0 %v333
  %v606 = vpop.f32.mrb[0].mxu0
  %v607 = vadd.f32 %v85, %v606
  %v608 = vpop.f32.mrb[0].mxu0
  %v609 = vpop.f32.mrb[0].mxu0
  %v610 = vadd.f32 %v85, %v609
  %v611 = vpop.f32.mrb[0].mxu0
  %612 = vmatprep.mubr.bf16.mxu0 0
  %613 = vmatmul.mubr.bf16.gmra.mrb[0].mxu0 %v336
  %v614 = vpop.f32.mrb[0].mxu0
  %v615 = vadd.f32 %v85, %v614
  %v616 = vpop.f32.mrb[0].mxu0
  %v617 = vpop.f32.mrb[0].mxu0
  %v618 = vadd.f32 %v85, %v617
  %v619 = vpop.f32.mrb[0].mxu0
  %620 = vmatprep.mubr.bf16.mxu0 0
  %621 = vmatmul.mubr.bf16.gmra.mrb[0].mxu0 %v339
  %v622 = vpop.f32.mrb[0].mxu0
  %v623 = vadd.f32 %v85, %v622
  %v624 = vpop.f32.mrb[0].mxu0
  %v625 = vpop.f32.mrb[0].mxu0
  %v626 = vadd.f32 %v85, %v625
  %v627 = vpop.f32.mrb[0].mxu0
  %628 = vmatprep.mubr.bf16.mxu0 0
  %629 = vmatmul.mubr.bf16.gmra.mrb[0].mxu0 %v342
  %v630 = vpop.f32.mrb[0].mxu0
  %v631 = vadd.f32 %v85, %v630
  %v632 = vpop.f32.mrb[0].mxu0
  %v633 = vpop.f32.mrb[0].mxu0
  %v634 = vadd.f32 %v85, %v633
  %v635 = vpop.f32.mrb[0].mxu0
  %636 = vdwg.mxu0
  %v637 = vmax.f32 %v383, 0.0
  %v638 = vmax.f32 %v386, 0.0
  %v639 = vmax.f32 %v391, 0.0
  %v640 = vmax.f32 %v394, 0.0
  %v641 = vmax.f32 %v399, 0.0
  %v642 = vmax.f32 %v402, 0.0
  %v643 = vmax.f32 %v407, 0.0
  %v644 = vmax.f32 %v410, 0.0
  %v645 = vmax.f32 %v415, 0.0
  %v646 = vmax.f32 %v418, 0.0
  %v647 = vmax.f32 %v423, 0.0
  %v648 = vmax.f32 %v426, 0.0
  %v649 = vmax.f32 %v431, 0.0
  %v650 = vmax.f32 %v434, 0.0
  %v651 = vmax.f32 %v439, 0.0
  %v652 = vmax.f32 %v442, 0.0
  %v653 = vmax.f32 %v447, 0.0
  %v654 = vmax.f32 %v450, 0.0
  %v655 = vmax.f32 %v455, 0.0
  %v656 = vmax.f32 %v458, 0.0
  %v657 = vmax.f32 %v463, 0.0
  %v658 = vmax.f32 %v466, 0.0
  %v659 = vmax.f32 %v471, 0.0
  %v660 = vmax.f32 %v474, 0.0
  %v661 = vmax.f32 %v479, 0.0
  %v662 = vmax.f32 %v482, 0.0
  %v663 = vmax.f32 %v487, 0.0
  %v664 = vmax.f32 %v490, 0.0
  %v665 = vmax.f32 %v495, 0.0
  %v666 = vmax.f32 %v498, 0.0
  %v667 = vmax.f32 %v503, 0.0
  %v668 = vmax.f32 %v506, 0.0
  %v669 = vmax.f32 %v511, 0.0
  %v670 = vmax.f32 %v514, 0.0
  %v671 = vmax.f32 %v519, 0.0
  %v672 = vmax.f32 %v522, 0.0
  %v673 = vmax.f32 %v527, 0.0
  %v674 = vmax.f32 %v530, 0.0
  %v675 = vmax.f32 %v535, 0.0
  %v676 = vmax.f32 %v538, 0.0
  %v677 = vmax.f32 %v543, 0.0
  %v678 = vmax.f32 %v546, 0.0
  %v679 = vmax.f32 %v551, 0.0
  %v680 = vmax.f32 %v554, 0.0
  %v681 = vmax.f32 %v559, 0.0
  %v682 = vmax.f32 %v562, 0.0
  %v683 = vmax.f32 %v567, 0.0
  %v684 = vmax.f32 %v570, 0.0
  %v685 = vmax.f32 %v575, 0.0
  %v686 = vmax.f32 %v578, 0.0
  %v687 = vmax.f32 %v583, 0.0
  %v688 = vmax.f32 %v586, 0.0
  %v689 = vmax.f32 %v591, 0.0
  %v690 = vmax.f32 %v594, 0.0
  %v691 = vmax.f32 %v599, 0.0
  %v692 = vmax.f32 %v602, 0.0
  %v693 = vmax.f32 %v607, 0.0
  %v694 = vmax.f32 %v610, 0.0
  %v695 = vmax.f32 %v615, 0.0
  %v696 = vmax.f32 %v618, 0.0
  %v697 = vmax.f32 %v623, 0.0
  %v698 = vmax.f32 %v626, 0.0
  %v699 = vmax.f32 %v631, 0.0
  %v700 = vmax.f32 %v634, 0.0
  %701 = vst [vmem:[%s3] sm:$0xff] %v637
  %702 = vst [vmem:[%s3 + $0x8] sm:$0xff] %v638
  %703 = vst [vmem:[%s3 + $0x10] sm:$0xff] %v639
  %704 = vst [vmem:[%s3 + $0x18] sm:$0xff] %v640
  %705 = vst [vmem:[%s3 + $0x20] sm:$0xff] %v641
  %706 = vst [vmem:[%s3 + $0x28] sm:$0xff] %v642
  %707 = vst [vmem:[%s3 + $0x30] sm:$0xff] %v643
  %708 = vst [vmem:[%s3 + $0x38] sm:$0xff] %v644
  %709 = vst [vmem:[%s3 + $0x40] sm:$0xff] %v645
  %710 = vst [vmem:[%s3 + $0x48] sm:$0xff] %v646
  %711 = vst [vmem:[%s3 + $0x50] sm:$0xff] %v647
  %712 = vst [vmem:[%s3 + $0x58] sm:$0xff] %v648
  %713 = vst [vmem:[%s3 + $0x60] sm:$0xff] %v649
  %714 = vst [vmem:[%s3 + $0x68] sm:$0xff] %v650
  %715 = vst [vmem:[%s3 + $0x70] sm:$0xff] %v651
  %716 = vst [vmem:[%s3 + $0x78] sm:$0xff] %v652
  %717 = vst [vmem:[%s3 + $0x80] sm:$0xff] %v653
  %718 = vst [vmem:[%s3 + $0x88] sm:$0xff] %v654
  %719 = vst [vmem:[%s3 + $0x90] sm:$0xff] %v655
  %720 = vst [vmem:[%s3 + $0x98] sm:$0xff] %v656
  %721 = vst [vmem:[%s3 + $0xa0] sm:$0xff] %v657
  %722 = vst [vmem:[%s3 + $0xa8] sm:$0xff] %v658
  %723 = vst [vmem:[%s3 + $0xb0] sm:$0xff] %v659
  %724 = vst [vmem:[%s3 + $0xb8] sm:$0xff] %v660
  %725 = vst [vmem:[%s3 + $0xc0] sm:$0xff] %v661
  %726 = vst [vmem:[%s3 + $0xc8] sm:$0xff] %v662
  %727 = vst [vmem:[%s3 + $0xd0] sm:$0xff] %v663
  %728 = vst [vmem:[%s3 + $0xd8] sm:$0xff] %v664
  %729 = vst [vmem:[%s3 + $0xe0] sm:$0xff] %v665
  %730 = vst [vmem:[%s3 + $0xe8] sm:$0xff] %v666
  %731 = vst [vmem:[%s3 + $0xf0] sm:$0xff] %v667
  %732 = vst [vmem:[%s3 + $0xf8] sm:$0xff] %v668
  %733 = vst [vmem:[%s3 + $0x100] sm:$0xff] %v669
  %734 = vst [vmem:[%s3 + $0x108] sm:$0xff] %v670
  %735 = vst [vmem:[%s3 + $0x110] sm:$0xff] %v671
  %736 = vst [vmem:[%s3 + $0x118] sm:$0xff] %v672
  %737 = vst [vmem:[%s3 + $0x120] sm:$0xff] %v673
  %738 = vst [vmem:[%s3 + $0x128] sm:$0xff] %v674
  %739 = vst [vmem:[%s3 + $0x130] sm:$0xff] %v675
  %740 = vst [vmem:[%s3 + $0x138] sm:$0xff] %v676
  %741 = vst [vmem:[%s3 + $0x140] sm:$0xff] %v677
  %742 = vst [vmem:[%s3 + $0x148] sm:$0xff] %v678
  %743 = vst [vmem:[%s3 + $0x150] sm:$0xff] %v679
  %744 = vst [vmem:[%s3 + $0x158] sm:$0xff] %v680
  %745 = vst [vmem:[%s3 + $0x160] sm:$0xff] %v681
  %746 = vst [vmem:[%s3 + $0x168] sm:$0xff] %v682
  %747 = vst [vmem:[%s3 + $0x170] sm:$0xff] %v683
  %748 = vst [vmem:[%s3 + $0x178] sm:$0xff] %v684
  %749 = vst [vmem:[%s3 + $0x180] sm:$0xff] %v685
  %750 = vst [vmem:[%s3 + $0x188] sm:$0xff] %v686
  %751 = vst [vmem:[%s3 + $0x190] sm:$0xff] %v687
  %752 = vst [vmem:[%s3 + $0x198] sm:$0xff] %v688
  %753 = vst [vmem:[%s3 + $0x1a0] sm:$0xff] %v689
  %754 = vst [vmem:[%s3 + $0x1a8] sm:$0xff] %v690
  %755 = vst [vmem:[%s3 + $0x1b0] sm:$0xff] %v691
  %756 = vst [vmem:[%s3 + $0x1b8] sm:$0xff] %v692
  %757 = vst [vmem:[%s3 + $0x1c0] sm:$0xff] %v693
  %758 = vst [vmem:[%s3 + $0x1c8] sm:$0xff] %v694
  %759 = vst [vmem:[%s3 + $0x1d0] sm:$0xff] %v695
  %760 = vst [vmem:[%s3 + $0x1d8] sm:$0xff] %v696
  %761 = vst [vmem:[%s3 + $0x1e0] sm:$0xff] %v697
  %762 = vst [vmem:[%s3 + $0x1e8] sm:$0xff] %v698
  %763 = vst [vmem:[%s3 + $0x1f0] sm:$0xff] %v699
  %764 = vst [vmem:[%s3 + $0x1f8] sm:$0xff] %v700
  // Predicated region
  $region14: #{inception_c_forward.14} parent=0 // pred_check
    _
  $region15: #{inception_c_forward.14} parent=0 // pred_check_branch
    %766 = sbr.rel (0) target = $region17
  $region16: #{inception_c_forward.14} parent=0 // pred_region
    _
  $region17: #{inception_c_forward.14} parent=0 // pred_fallthru
    _
  // Predicated region
  $region18: #{inception_c_forward.14} parent=0 // pred_check
    _
  $region19: #{inception_c_forward.14} parent=0 // pred_check_branch
    %768 = sbr.rel (0) target = $region21
  $region20: #{inception_c_forward.14} parent=0 // pred_region
    _
  $region21: #{inception_c_forward.14} parent=0 // pred_fallthru
    _

// kernel: inception_c_forward.10
$region0: #{inception_c_forward.10}
  #allocation0 [shape = 'u32[]', space=smem, size = 0x4, offset = 0x4, fixed_abs, tag = 'smem constant byte address 0x4 - core index']
  #allocation1 [shape = 'u32[144,128]{1,0:T(1,128)}', space=vmem, size = 0x12000, scoped, tag = 'internal scratch']
  %s0 = inlined_call_operand.vmem [shape: bf16[512,4], index: 0, kind: input, shape index: {}]
  %s1 = inlined_call_operand.vmem [shape: bf16[4,256], index: 1, kind: input, shape index: {}]
  %s2 = inlined_call_operand.vmem [shape: f32[1,256], index: 2, kind: input, shape index: {}]
  %s3 = inlined_call_operand.vmem [shape: f32[512,256], index: 3, kind: output, shape index: {}]
  %s4 = sld [smem:[#allocation0]]
  $region79: #{inception_c_forward.10} parent=0
    _
  %s6 = ssub.s32 1, %s4
  %s7 = scalar_select 0, %s6, %s4
  $region1: #{inception_c_forward.10} parent=0
    #allocation2 [shape = 'u8[524288]{0}', space=vmem, size = 0x80000, scoped, tag = 'output window, operand 0']
    loop: start=0, step=1, limit=4
    $region2: #{inception_c_forward.10} parent=1 // loop_pre_header
      _
    $region3: #{inception_c_forward.10} parent=1 // loop_header
      %s9 = sphi 0, %s13
      %p10 = scmp.ge.s32.totalorder %s9, 4
      %s16 = sphi 0, %s28
      %s17 = sphi 0, %s24
      %s18 = sphi 0, %s16
      %s19 = sphi 0, %s17
      %s20 = sphi 0, %s18
      %s21 = sphi 0, %s19
      %s31 = sphi 0, %s33
      %s34 = sphi 0, %s31
      %s35 = sphi 0, %s34
      %s51 = sphi 0, %s35
      %s57 = sphi 0, %s59
      %s60 = sphi 0, %s57
      %s61 = sphi 0, %s60
      %s77 = sphi 0, %s61
      %s83 = sphi 0, %s85
      %s86 = sphi 0, %s83
      %s87 = sphi 0, %s86
      %s103 = sphi 0, %s87
      %s111 = sphi 0, %s113
      %s114 = sphi 0, %s111
      %s115 = sphi 0, %s114
      %s131 = sphi 0, %s115
    $region4: #{inception_c_forward.10} parent=1 // loop_header_branch
      %12 = sbr.rel (%p10) target = $region8
    $region5: #{inception_c_forward.10} parent=1 // loop_body
      %s14 = ssub.s32 %s9, 1
      %s15 = ssub.s32 %s9, 2
      %s22 = sadd.s32 1, %s17
      %p23 = scmp.ge.s32.totalorder %s22, 2
      %s24 = scalar_select %p23, 0, %s22
      %s25 = sadd.s32 1, %s16
      %s26 = scalar_select %p23, %s25, %s16
      %p27 = scmp.ge.s32.totalorder %s26, 1
      %s28 = scalar_select %p27, 0, %s26
      %s29 = ssub.s32 %s16, %s28
      %p30 = scmp.eq.s32.totalorder %s29, 0
      %s32 = sadd.s32 %s31, 1
      %s33 = scalar_select %p30, %s31, %s32
      %p36 = pneg %p30
      %p37 = scmp.eq.s32.totalorder %s9, 1
      %p38 = por %p36, %p37
      %p39 = scmp.ne.s32.totalorder %s31, %s34
      %p40 = scmp.eq.s32.totalorder %s9, 0
      %p41 = por %p39, %p40
      %p42 = scmp.ne.s32.totalorder %s31, %s34
      %p43 = scmp.eq.s32.totalorder %s14, 1
      %p44 = por %p42, %p43
      %p45 = scmp.ne.s32.totalorder %s34, %s35
      %p46 = scmp.eq.s32.totalorder %s14, 0
      %p47 = por %p45, %p46
      %p48 = scmp.ne.s32.totalorder %s34, %s35
      %p49 = scmp.eq.s32.totalorder %s15, 1
      %p50 = por %p48, %p49
      %p52 = scmp.ne.s32.totalorder %s35, %s51
      %p53 = scmp.eq.s32.totalorder %s15, 0
      %p54 = por %p52, %p53
      %s55 = ssub.s32 %s17, %s24
      %p56 = scmp.eq.s32.totalorder %s55, 0
      %s58 = sadd.s32 %s57, 1
      %s59 = scalar_select %p56, %s57, %s58
      %p62 = pneg %p56
      %p63 = scmp.eq.s32.totalorder %s9, 1
      %p64 = por %p62, %p63
      %p65 = scmp.ne.s32.totalorder %s57, %s60
      %p66 = scmp.eq.s32.totalorder %s9, 0
      %p67 = por %p65, %p66
      %p68 = scmp.ne.s32.totalorder %s57, %s60
      %p69 = scmp.eq.s32.totalorder %s14, 1
      %p70 = por %p68, %p69
      %p71 = scmp.ne.s32.totalorder %s60, %s61
      %p72 = scmp.eq.s32.totalorder %s14, 0
      %p73 = por %p71, %p72
      %p74 = scmp.ne.s32.totalorder %s60, %s61
      %p75 = scmp.eq.s32.totalorder %s15, 1
      %p76 = por %p74, %p75
      %p78 = scmp.ne.s32.totalorder %s61, %s77
      %p79 = scmp.eq.s32.totalorder %s15, 0
      %p80 = por %p78, %p79
      %s81 = ssub.s32 %s17, %s24
      %p82 = scmp.eq.s32.totalorder %s81, 0
      %s84 = sadd.s32 %s83, 1
      %s85 = scalar_select %p82, %s83, %s84
      %p88 = pneg %p82
      %p89 = scmp.eq.s32.totalorder %s9, 1
      %p90 = por %p88, %p89
      %p91 = scmp.ne.s32.totalorder %s83, %s86
      %p92 = scmp.eq.s32.totalorder %s9, 0
      %p93 = por %p91, %p92
      %p94 = scmp.ne.s32.totalorder %s83, %s86
      %p95 = scmp.eq.s32.totalorder %s14, 1
      %p96 = por %p94, %p95
      %p97 = scmp.ne.s32.totalorder %s86, %s87
      %p98 = scmp.eq.s32.totalorder %s14, 0
      %p99 = por %p97, %p98
      %p100 = scmp.ne.s32.totalorder %s86, %s87
      %p101 = scmp.eq.s32.totalorder %s15, 1
      %p102 = por %p100, %p101
      %p104 = scmp.ne.s32.totalorder %s87, %s103
      %p105 = scmp.eq.s32.totalorder %s15, 0
      %p106 = por %p104, %p105
      %s107 = ssub.s32 %s16, %s28
      %s108 = ssub.s32 %s17, %s24
      %s109 = sor.u32 %s107, %s108
      %p110 = scmp.eq.s32.totalorder %s109, 0
      %s112 = sadd.s32 %s111, 1
      %s113 = scalar_select %p110, %s111, %s112
      %p116 = pneg %p110
      %p117 = scmp.eq.s32.totalorder %s9, 1
      %p118 = por %p116, %p117
      %p119 = scmp.ne.s32.totalorder %s111, %s114
      %p120 = scmp.eq.s32.totalorder %s9, 0
      %p121 = por %p119, %p120
      %p122 = scmp.ne.s32.totalorder %s111, %s114
      %p123 = scmp.eq.s32.totalorder %s14, 1
      %p124 = por %p122, %p123
      %p125 = scmp.ne.s32.totalorder %s114, %s115
      %p126 = scmp.eq.s32.totalorder %s14, 0
      %p127 = por %p125, %p126
      %p128 = scmp.ne.s32.totalorder %s114, %s115
      %p129 = scmp.eq.s32.totalorder %s15, 1
      %p130 = por %p128, %p129
      %p132 = scmp.ne.s32.totalorder %s115, %s131
      %p133 = scmp.eq.s32.totalorder %s15, 0
      %p134 = por %p132, %p133
      %p135 = scmp.le.s32.totalorder 1, %s9
      %p136 = scmp.lt.s32.totalorder %s9, 3
      %p137 = pnand %p135, %p136
      %p138 = pneg %p137
      // Predicated region
      $region9: #{inception_c_forward.10} parent=5 // pred_check
        _
      $region10: #{inception_c_forward.10} parent=5 // pred_check_branch
        %140 = sbr.rel (%p137) target = $region12
      $region11: #{inception_c_forward.10} parent=5 // pred_region
        %s141 = ssub.s32 %s9, 1
        // Predicated region
        $region13: #{inception_c_forward.10} parent=11 // pred_check
          %p142 = pneg %p47
        $region14: #{inception_c_forward.10} parent=11 // pred_check_branch
          %144 = sbr.rel (%p142) target = $region16
        $region15: #{inception_c_forward.10} parent=11 // pred_region
          %s145 = smul.u32 64, %s18
          %p146 = scmp.lt.s32.totalorder %s145, 63
          %s147 = scalar_select %p146, %s145, 63
          %s148 = smul.addr %s147, 4
          %s149 = scalar_lea.vmem %s0, %s148
          %s150 = smul.u32 64, %s18
        $region16: #{inception_c_forward.10} parent=11 // pred_fallthru
          _
      $region12: #{inception_c_forward.10} parent=5 // pred_fallthru
        _
      %p151 = scmp.lt.s32.totalorder %s9, 2
      // Predicated region
      $region17: #{inception_c_forward.10} parent=5 // pred_check
        %p152 = pneg %p151
      $region18: #{inception_c_forward.10} parent=5 // pred_check_branch
        %154 = sbr.rel (%p152) target = $region20
      $region19: #{inception_c_forward.10} parent=5 // pred_region
        // Predicated region
        $region21: #{inception_c_forward.10} parent=19 // pred_check
          %p155 = pneg %p67
        $region22: #{inception_c_forward.10} parent=19 // pred_check_branch
          %157 = sbr.rel (%p155) target = $region24
        $region23: #{inception_c_forward.10} parent=19 // pred_region
          %p158 = scmp.lt.s32.totalorder %s17, 1
          %s159 = scalar_select %p158, %s17, 1
          %s160 = smul.addr %s159, 2
          %s161 = scalar_lea.vmem %s1, %s160
        $region24: #{inception_c_forward.10} parent=19 // pred_fallthru
          _
        // Predicated region
        $region25: #{inception_c_forward.10} parent=19 // pred_check
          %p162 = pneg %p93
        $region26: #{inception_c_forward.10} parent=19 // pred_check_branch
          %164 = sbr.rel (%p162) target = $region28
        $region27: #{inception_c_forward.10} parent=19 // pred_region
          %p165 = scmp.lt.s32.totalorder %s17, 1
          %s166 = scalar_select %p165, %s17, 1
          %s167 = scalar_lea.vmem %s2, %s166
        $region28: #{inception_c_forward.10} parent=19 // pred_fallthru
          _
      $region20: #{inception_c_forward.10} parent=5 // pred_fallthru
        _
      %p168 = scmp.le.s32.totalorder 1, %s9
      %p169 = scmp.lt.s32.totalorder %s9, 3
      %p170 = pnand %p168, %p169
      %p171 = pneg %p170
      // Predicated region
      $region29: #{inception_c_forward.10} parent=5 // pred_check
        _
      $region30: #{inception_c_forward.10} parent=5 // pred_check_branch
        %173 = sbr.rel (%p170) target = $region32
      $region31: #{inception_c_forward.10} parent=5 // pred_region
        %s174 = ssub.s32 %s9, 1
        %s175 = smul.u32 64, %s18
        %p176 = scmp.lt.s32.totalorder %s175, 63
        %s177 = scalar_select %p176, %s175, 63
        %s178 = smul.addr %s177, 4
        %s179 = scalar_lea.vmem %s0, %s178
        %p180 = pneg %p47
        %p181 = pneg %p44
        %p182 = scmp.lt.s32.totalorder %s19, 1
        %s183 = scalar_select %p182, %s19, 1
        %s184 = smul.addr %s183, 2
        %s185 = scalar_lea.vmem %s1, %s184
        %p186 = pneg %p73
        %p187 = pneg %p70
        %p188 = scmp.lt.s32.totalorder %s19, 1
        %s189 = scalar_select %p188, %s19, 1
        %s190 = scalar_lea.vmem %s2, %s189
        %p191 = pneg %p99
        %p192 = pneg %p96
        %p193 = pneg %p127
        %p194 = pneg %p124
        %s195 = sand.u32 %s114, 1
        %s196 = sand.u32 %s114, 1
        %s197 = smul.addr %s196, 512
        %s198 = scalar_lea.vmem [#allocation2], %s197
        %s199 = smul.u32 64, %s18
        %p200 = scmp.lt.s32.totalorder %s199, 63
        %s201 = scalar_select %p200, %s199, 63
        %s202 = smul.addr %s201, 4
        %s203 = scalar_lea.vmem %s0, %s202
        %s204 = smul.u32 64, %s18
        %p205 = scmp.lt.s32.totalorder %s19, 1
        %s206 = scalar_select %p205, %s19, 1
        %s207 = smul.addr %s206, 2
        %s208 = scalar_lea.vmem %s1, %s207
        %p209 = scmp.lt.s32.totalorder %s19, 1
        %s210 = scalar_select %p209, %s19, 1
        %s211 = scalar_lea.vmem %s2, %s210
        %s212 = smul.u32 64, %s18
        %v214 = vld [vmem:[%s203] sm:$0xf]
        %v215 = vld [vmem:[%s203 + $0x4] sm:$0xf]
        %v216 = vld [vmem:[%s203 + $0x8] sm:$0xf]
        %v217 = vld [vmem:[%s203 + $0xc] sm:$0xf]
        %v218 = vld [vmem:[%s203 + $0x10] sm:$0xf]
        %v219 = vld [vmem:[%s203 + $0x14] sm:$0xf]
        %v220 = vld [vmem:[%s203 + $0x18] sm:$0xf]
        %v221 = vld [vmem:[%s203 + $0x1c] sm:$0xf]
        %v222 = vld [vmem:[%s203 + $0x20] sm:$0xf]
        %v223 = vld [vmem:[%s203 + $0x24] sm:$0xf]
        %v224 = vld [vmem:[%s203 + $0x28] sm:$0xf]
        %v225 = vld [vmem:[%s203 + $0x2c] sm:$0xf]
        %v226 = vld [vmem:[%s203 + $0x30] sm:$0xf]
        %v227 = vld [vmem:[%s203 + $0x34] sm:$0xf]
        %v228 = vld [vmem:[%s203 + $0x38] sm:$0xf]
        %v229 = vld [vmem:[%s203 + $0x3c] sm:$0xf]
        %v230 = vld [vmem:[%s203 + $0x40] sm:$0xf]
        %v231 = vld [vmem:[%s203 + $0x44] sm:$0xf]
        %v232 = vld [vmem:[%s203 + $0x48] sm:$0xf]
        %v233 = vld [vmem:[%s203 + $0x4c] sm:$0xf]
        %v234 = vld [vmem:[%s203 + $0x50] sm:$0xf]
        %v235 = vld [vmem:[%s203 + $0x54] sm:$0xf]
        %v236 = vld [vmem:[%s203 + $0x58] sm:$0xf]
        %v237 = vld [vmem:[%s203 + $0x5c] sm:$0xf]
        %v238 = vld [vmem:[%s203 + $0x60] sm:$0xf]
        %v239 = vld [vmem:[%s203 + $0x64] sm:$0xf]
        %v240 = vld [vmem:[%s203 + $0x68] sm:$0xf]
        %v241 = vld [vmem:[%s203 + $0x6c] sm:$0xf]
        %v242 = vld [vmem:[%s203 + $0x70] sm:$0xf]
        %v243 = vld [vmem:[%s203 + $0x74] sm:$0xf]
        %v244 = vld [vmem:[%s203 + $0x78] sm:$0xf]
        %v245 = vld [vmem:[%s203 + $0x7c] sm:$0xf]
        %v246 = vld [vmem:[%s203 + $0x80] sm:$0xf]
        %v247 = vld [vmem:[%s203 + $0x84] sm:$0xf]
        %v248 = vld [vmem:[%s203 + $0x88] sm:$0xf]
        %v249 = vld [vmem:[%s203 + $0x8c] sm:$0xf]
        %v250 = vld [vmem:[%s203 + $0x90] sm:$0xf]
        %v251 = vld [vmem:[%s203 + $0x94] sm:$0xf]
        %v252 = vld [vmem:[%s203 + $0x98] sm:$0xf]
        %v253 = vld [vmem:[%s203 + $0x9c] sm:$0xf]
        %v254 = vld [vmem:[%s203 + $0xa0] sm:$0xf]
        %v255 = vld [vmem:[%s203 + $0xa4] sm:$0xf]
        %v256 = vld [vmem:[%s203 + $0xa8] sm:$0xf]
        %v257 = vld [vmem:[%s203 + $0xac] sm:$0xf]
        %v258 = vld [vmem:[%s203 + $0xb0] sm:$0xf]
        %v259 = vld [vmem:[%s203 + $0xb4] sm:$0xf]
        %v260 = vld [vmem:[%s203 + $0xb8] sm:$0xf]
        %v261 = vld [vmem:[%s203 + $0xbc] sm:$0xf]
        %v262 = vld [vmem:[%s203 + $0xc0] sm:$0xf]
        %v263 = vld [vmem:[%s203 + $0xc4] sm:$0xf]
        %v264 = vld [vmem:[%s203 + $0xc8] sm:$0xf]
        %v265 = vld [vmem:[%s203 + $0xcc] sm:$0xf]
        %v266 = vld [vmem:[%s203 + $0xd0] sm:$0xf]
        %v267 = vld [vmem:[%s203 + $0xd4] sm:$0xf]
        %v268 = vld [vmem:[%s203 + $0xd8] sm:$0xf]
        %v269 = vld [vmem:[%s203 + $0xdc] sm:$0xf]
        %v270 = vld [vmem:[%s203 + $0xe0] sm:$0xf]
        %v271 = vld [vmem:[%s203 + $0xe4] sm:$0xf]
        %v272 = vld [vmem:[%s203 + $0xe8] sm:$0xf]
        %v273 = vld [vmem:[%s203 + $0xec] sm:$0xf]
        %v274 = vld [vmem:[%s203 + $0xf0] sm:$0xf]
        %v275 = vld [vmem:[%s203 + $0xf4] sm:$0xf]
        %v276 = vld [vmem:[%s203 + $0xf8] sm:$0xf]
        %v277 = vld [vmem:[%s203 + $0xfc] sm:$0xf]
        %v278 = vld [vmem:[%s208] sm:$0x3]
        %v279 = vld [vmem:[%s211] sm:$0x1]
        %v281 = vlaneseq
        %v282 = vshrl.u32 %v281, 7
        %v283 = vsub.s32 0, %v282
        %v284 = vrot.slane %v279, %v283
        %v350 = vunpack.c.l.b16 %v214
        %v351 = vunpack.c.l.b16 %v215
        %v352 = vunpack.c.l.b16 %v216
        %v353 = vunpack.c.l.b16 %v217
        %v354 = vunpack.c.l.b16 %v218
        %v355 = vunpack.c.l.b16 %v219
        %v356 = vunpack.c.l.b16 %v220
        %v357 = vunpack.c.l.b16 %v221
        %v358 = vunpack.c.l.b16 %v222
        %v359 = vunpack.c.l.b16 %v223
        %v360 = vunpack.c.l.b16 %v224
        %v361 = vunpack.c.l.b16 %v225
        %v362 = vunpack.c.l.b16 %v226
        %v363 = vunpack.c.l.b16 %v227
        %v364 = vunpack.c.l.b16 %v228
        %v365 = vunpack.c.l.b16 %v229
        %v366 = vunpack.c.l.b16 %v230
        %v367 = vunpack.c.l.b16 %v231
        %v368 = vunpack.c.l.b16 %v232
        %v369 = vunpack.c.l.b16 %v233
        %v370 = vunpack.c.l.b16 %v234
        %v371 = vunpack.c.l.b16 %v235
        %v372 = vunpack.c.l.b16 %v236
        %v373 = vunpack.c.l.b16 %v237
        %v374 = vunpack.c.l.b16 %v238
        %v375 = vunpack.c.l.b16 %v239
        %v376 = vunpack.c.l.b16 %v240
        %v377 = vunpack.c.l.b16 %v241
        %v378 = vunpack.c.l.b16 %v242
        %v379 = vunpack.c.l.b16 %v243
        %v380 = vunpack.c.l.b16 %v244
        %v381 = vunpack.c.l.b16 %v245
        %v382 = vunpack.c.l.b16 %v246
        %v383 = vunpack.c.l.b16 %v247
        %v384 = vunpack.c.l.b16 %v248
        %v385 = vunpack.c.l.b16 %v249
        %v386 = vunpack.c.l.b16 %v250
        %v387 = vunpack.c.l.b16 %v251
        %v388 = vunpack.c.l.b16 %v252
        %v389 = vunpack.c.l.b16 %v253
        %v390 = vunpack.c.l.b16 %v254
        %v391 = vunpack.c.l.b16 %v255
        %v392 = vunpack.c.l.b16 %v256
        %v393 = vunpack.c.l.b16 %v257
        %v394 = vunpack.c.l.b16 %v258
        %v395 = vunpack.c.l.b16 %v259
        %v396 = vunpack.c.l.b16 %v260
        %v397 = vunpack.c.l.b16 %v261
        %v398 = vunpack.c.l.b16 %v262
        %v399 = vunpack.c.l.b16 %v263
        %v400 = vunpack.c.l.b16 %v264
        %v401 = vunpack.c.l.b16 %v265
        %v402 = vunpack.c.l.b16 %v266
        %v403 = vunpack.c.l.b16 %v267
        %v404 = vunpack.c.l.b16 %v268
        %v405 = vunpack.c.l.b16 %v269
        %v406 = vunpack.c.l.b16 %v270
        %v407 = vunpack.c.l.b16 %v271
        %v408 = vunpack.c.l.b16 %v272
        %v409 = vunpack.c.l.b16 %v273
        %v410 = vunpack.c.l.b16 %v274
        %v411 = vunpack.c.l.b16 %v275
        %v412 = vunpack.c.l.b16 %v276
        %v413 = vunpack.c.l.b16 %v277
        %v414 = vpack.c.b16 %v351, %v350
        %v415 = vpack.c.b16 %v353, %v352
        %v416 = vpack.c.b16 %v355, %v354
        %v417 = vpack.c.b16 %v357, %v356
        %v418 = vpack.c.b16 %v359, %v358
        %v419 = vpack.c.b16 %v361, %v360
        %v420 = vpack.c.b16 %v363, %v362
        %v421 = vpack.c.b16 %v365, %v364
        %v422 = vpack.c.b16 %v367, %v366
        %v423 = vpack.c.b16 %v369, %v368
        %v424 = vpack.c.b16 %v371, %v370
        %v425 = vpack.c.b16 %v373, %v372
        %v426 = vpack.c.b16 %v375, %v374
        %v427 = vpack.c.b16 %v377, %v376
        %v428 = vpack.c.b16 %v379, %v378
        %v429 = vpack.c.b16 %v381, %v380
        %v430 = vpack.c.b16 %v383, %v382
        %v431 = vpack.c.b16 %v385, %v384
        %v432 = vpack.c.b16 %v387, %v386
        %v433 = vpack.c.b16 %v389, %v388
        %v434 = vpack.c.b16 %v391, %v390
        %v435 = vpack.c.b16 %v393, %v392
        %v436 = vpack.c.b16 %v395, %v394
        %v437 = vpack.c.b16 %v397, %v396
        %v438 = vpack.c.b16 %v399, %v398
        %v439 = vpack.c.b16 %v401, %v400
        %v440 = vpack.c.b16 %v403, %v402
        %v441 = vpack.c.b16 %v405, %v404
        %v442 = vpack.c.b16 %v407, %v406
        %v443 = vpack.c.b16 %v409, %v408
        %v444 = vpack.c.b16 %v411, %v410
        %v445 = vpack.c.b16 %v413, %v412
        %vm446 = vcmask 31744
        %v448 = vsel %vm446, %v414, 0
        %v451 = vsel %vm446, %v415, 0
        %v454 = vsel %vm446, %v416, 0
        %v457 = vsel %vm446, %v417, 0
        %v460 = vsel %vm446, %v418, 0
        %v463 = vsel %vm446, %v419, 0
        %v466 = vsel %vm446, %v420, 0
        %v469 = vsel %vm446, %v421, 0
        %v472 = vsel %vm446, %v422, 0
        %v475 = vsel %vm446, %v423, 0
        %v478 = vsel %vm446, %v424, 0
        %v481 = vsel %vm446, %v425, 0
        %v484 = vsel %vm446, %v426, 0
        %v487 = vsel %vm446, %v427, 0
        %v490 = vsel %vm446, %v428, 0
        %v493 = vsel %vm446, %v429, 0
        %v496 = vsel %vm446, %v430, 0
        %v499 = vsel %vm446, %v431, 0
        %v502 = vsel %vm446, %v432, 0
        %v505 = vsel %vm446, %v433, 0
        %v508 = vsel %vm446, %v434, 0
        %v511 = vsel %vm446, %v435, 0
        %v514 = vsel %vm446, %v436, 0
        %v517 = vsel %vm446, %v437, 0
        %v520 = vsel %vm446, %v438, 0
        %v523 = vsel %vm446, %v439, 0
        %v526 = vsel %vm446, %v440, 0
        %v529 = vsel %vm446, %v441, 0
        %v532 = vsel %vm446, %v442, 0
        %v535 = vsel %vm446, %v443, 0
        %v538 = vsel %vm446, %v444, 0
        %v541 = vsel %vm446, %v445, 0
        %vm543 = vcmask 1041408
        %v545 = vsel %vm543, %v278, 0
        %547 = vmatprep.subr.bf16.mxu0 0
        %548 = vmatpush1.bf16.msra.mxu0 %v545
        %549 = vmatprep.subr.bf16.mxu0 0
        %550 = vmatpush1.bf16.msra.mxu0 0
        %551 = vmatprep.subr.bf16.mxu0 0
        %552 = vmatpush1.bf16.msra.mxu0 0
        %553 = vmatprep.subr.bf16.mxu0 0
        %554 = vmatpush1.bf16.msra.mxu0 0
        %555 = vmatprep.subr.bf16.mxu0 0
        %556 = vmatpush1.bf16.msra.mxu0 0
        %557 = vmatprep.subr.bf16.mxu0 0
        %558 = vmatpush1.bf16.msra.mxu0 0
        %559 = vmatprep.subr.bf16.mxu0 0
        %560 = vmatpush1.bf16.msra.mxu0 0
        %561 = vmatprep.subr.bf16.mxu0 0
        %562 = vmatpush1.bf16.msra.mxu0 0
        %563 = vmatprep.subr.bf16.mxu0 0
        %564 = vmatpush1.bf16.msra.mxu0 0
        %565 = vmatprep.subr.bf16.mxu0 0
        %566 = vmatpush1.bf16.msra.mxu0 0
        %567 = vmatprep.subr.bf16.mxu0 0
        %568 = vmatpush1.bf16.msra.mxu0 0
        %569 = vmatprep.subr.bf16.mxu0 0
        %570 = vmatpush1.bf16.msra.mxu0 0
        %571 = vmatprep.subr.bf16.mxu0 0
        %572 = vmatpush1.bf16.msra.mxu0 0
        %573 = vmatprep.subr.bf16.mxu0 0
        %574 = vmatpush1.bf16.msra.mxu0 0
        %575 = vmatprep.subr.bf16.mxu0 0
        %576 = vmatpush1.bf16.msra.mxu0 0
        %577 = vmatprep.subr.bf16.mxu0 0
        %578 = vmatpush1.bf16.msra.mxu0 0
        %579 = vmatprep.mubr.bf16.mxu0 0
        %580 = vmatmul.mubr.bf16.gmra.mrb[0].mxu0 %v448
        %v581 = vpop.f32.mrb[0].mxu0
        %v582 = vadd.f32 %v284, %v581
        %v583 = vpop.f32.mrb[0].mxu0
        %v584 = vpop.f32.mrb[0].mxu0
        %v585 = vadd.f32 %v284, %v584
        %v586 = vpop.f32.mrb[0].mxu0
        %587 = vmatprep.mubr.bf16.mxu0 0
        %588 = vmatmul.mubr.bf16.gmra.mrb[0].mxu0 %v451
        %v589 = vpop.f32.mrb[0].mxu0
        %v590 = vadd.f32 %v284, %v589
        %v591 = vpop.f32.mrb[0].mxu0
        %v592 = vpop.f32.mrb[0].mxu0
        %v593 = vadd.f32 %v284, %v592
        %v594 = vpop.f32.mrb[0].mxu0
        %595 = vmatprep.mubr.bf16.mxu0 0
        %596 = vmatmul.mubr.bf16.gmra.mrb[0].mxu0 %v454
        %v597 = vpop.f32.mrb[0].mxu0
        %v598 = vadd.f32 %v284, %v597
        %v599 = vpop.f32.mrb[0].mxu0
        %v600 = vpop.f32.mrb[0].mxu0
        %v601 = vadd.f32 %v284, %v600
        %v602 = vpop.f32.mrb[0].mxu0
        %603 = vmatprep.mubr.bf16.mxu0 0
        %604 = vmatmul.mubr.bf16.gmra.mrb[0].mxu0 %v457
        %v605 = vpop.f32.mrb[0].mxu0
        %v606 = vadd.f32 %v284, %v605
        %v607 = vpop.f32.mrb[0].mxu0
        %v608 = vpop.f32.mrb[0].mxu0
        %v609 = vadd.f32 %v284, %v608
        %v610 = vpop.f32.mrb[0].mxu0
        %611 = vmatprep.mubr.bf16.mxu0 0
        %612 = vmatmul.mubr.bf16.gmra.mrb[0].mxu0 %v460
        %v613 = vpop.f32.mrb[0].mxu0
        %v614 = vadd.f32 %v284, %v613
        %v615 = vpop.f32.mrb[0].mxu0
        %v616 = vpop.f32.mrb[0].mxu0
        %v617 = vadd.f32 %v284, %v616
        %v618 = vpop.f32.mrb[0].mxu0
        %619 = vmatprep.mubr.bf16.mxu0 0
        %620 = vmatmul.mubr.bf16.gmra.mrb[0].mxu0 %v463
        %v621 = vpop.f32.mrb[0].mxu0
        %v622 = vadd.f32 %v284, %v621
        %v623 = vpop.f32.mrb[0].mxu0
        %v624 = vpop.f32.mrb[0].mxu0
        %v625 = vadd.f32 %v284, %v624
        %v626 = vpop.f32.mrb[0].mxu0
        %627 = vmatprep.mubr.bf16.mxu0 0
        %628 = vmatmul.mubr.bf16.gmra.mrb[0].mxu0 %v466
        %v629 = vpop.f32.mrb[0].mxu0
        %v630 = vadd.f32 %v284, %v629
        %v631 = vpop.f32.mrb[0].mxu0
        %v632 = vpop.f32.mrb[0].mxu0
        %v633 = vadd.f32 %v284, %v632
        %v634 = vpop.f32.mrb[0].mxu0
        %635 = vmatprep.mubr.bf16.mxu0 0
        %636 = vmatmul.mubr.bf16.gmra.mrb[0].mxu0 %v469
        %v637 = vpop.f32.mrb[0].mxu0
        %v638 = vadd.f32 %v284, %v637
        %v639 = vpop.f32.mrb[0].mxu0
        %v640 = vpop.f32.mrb[0].mxu0
        %v641 = vadd.f32 %v284, %v640
        %v642 = vpop.f32.mrb[0].mxu0
        %643 = vmatprep.mubr.bf16.mxu0 0
        %644 = vmatmul.mubr.bf16.gmra.mrb[0].mxu0 %v472
        %v645 = vpop.f32.mrb[0].mxu0
        %v646 = vadd.f32 %v284, %v645
        %v647 = vpop.f32.mrb[0].mxu0
        %v648 = vpop.f32.mrb[0].mxu0
        %v649 = vadd.f32 %v284, %v648
        %v650 = vpop.f32.mrb[0].mxu0
        %651 = vmatprep.mubr.bf16.mxu0 0
        %652 = vmatmul.mubr.bf16.gmra.mrb[0].mxu0 %v475
        %v653 = vpop.f32.mrb[0].mxu0
        %v654 = vadd.f32 %v284, %v653
        %v655 = vpop.f32.mrb[0].mxu0
        %v656 = vpop.f32.mrb[0].mxu0
        %v657 = vadd.f32 %v284, %v656
        %v658 = vpop.f32.mrb[0].mxu0
        %659 = vmatprep.mubr.bf16.mxu0 0
        %660 = vmatmul.mubr.bf16.gmra.mrb[0].mxu0 %v478
        %v661 = vpop.f32.mrb[0].mxu0
        %v662 = vadd.f32 %v284, %v661
        %v663 = vpop.f32.mrb[0].mxu0
        %v664 = vpop.f32.mrb[0].mxu0
        %v665 = vadd.f32 %v284, %v664
        %v666 = vpop.f32.mrb[0].mxu0
        %667 = vmatprep.mubr.bf16.mxu0 0
        %668 = vmatmul.mubr.bf16.gmra.mrb[0].mxu0 %v481
        %v669 = vpop.f32.mrb[0].mxu0
        %v670 = vadd.f32 %v284, %v669
        %v671 = vpop.f32.mrb[0].mxu0
        %v672 = vpop.f32.mrb[0].mxu0
        %v673 = vadd.f32 %v284, %v672
        %v674 = vpop.f32.mrb[0].mxu0
        %675 = vmatprep.mubr.bf16.mxu0 0
        %676 = vmatmul.mubr.bf16.gmra.mrb[0].mxu0 %v484
        %v677 = vpop.f32.mrb[0].mxu0
        %v678 = vadd.f32 %v284, %v677
        %v679 = vpop.f32.mrb[0].mxu0
        %v680 = vpop.f32.mrb[0].mxu0
        %v681 = vadd.f32 %v284, %v680
        %v682 = vpop.f32.mrb[0].mxu0
        %683 = vmatprep.mubr.bf16.mxu0 0
        %684 = vmatmul.mubr.bf16.gmra.mrb[0].mxu0 %v487
        %v685 = vpop.f32.mrb[0].mxu0
        %v686 = vadd.f32 %v284, %v685
        %v687 = vpop.f32.mrb[0].mxu0
        %v688 = vpop.f32.mrb[0].mxu0
        %v689 = vadd.f32 %v284, %v688
        %v690 = vpop.f32.mrb[0].mxu0
        %691 = vmatprep.mubr.bf16.mxu0 0
        %692 = vmatmul.mubr.bf16.gmra.mrb[0].mxu0 %v490
        %v693 = vpop.f32.mrb[0].mxu0
        %v694 = vadd.f32 %v284, %v693
        %v695 = vpop.f32.mrb[0].mxu0
        %v696 = vpop.f32.mrb[0].mxu0
        %v697 = vadd.f32 %v284, %v696
        %v698 = vpop.f32.mrb[0].mxu0
        %699 = vmatprep.mubr.bf16.mxu0 0
        %700 = vmatmul.mubr.bf16.gmra.mrb[0].mxu0 %v493
        %v701 = vpop.f32.mrb[0].mxu0
        %v702 = vadd.f32 %v284, %v701
        %v703 = vpop.f32.mrb[0].mxu0
        %v704 = vpop.f32.mrb[0].mxu0
        %v705 = vadd.f32 %v284, %v704
        %v706 = vpop.f32.mrb[0].mxu0
        %707 = vmatprep.mubr.bf16.mxu0 0
        %708 = vmatmul.mubr.bf16.gmra.mrb[0].mxu0 %v496
        %v709 = vpop.f32.mrb[0].mxu0
        %v710 = vadd.f32 %v284, %v709
        %v711 = vpop.f32.mrb[0].mxu0
        %v712 = vpop.f32.mrb[0].mxu0
        %v713 = vadd.f32 %v284, %v712
        %v714 = vpop.f32.mrb[0].mxu0
        %715 = vmatprep.mubr.bf16.mxu0 0
        %716 = vmatmul.mubr.bf16.gmra.mrb[0].mxu0 %v499
        %v717 = vpop.f32.mrb[0].mxu0
        %v718 = vadd.f32 %v284, %v717
        %v719 = vpop.f32.mrb[0].mxu0
        %v720 = vpop.f32.mrb[0].mxu0
        %v721 = vadd.f32 %v284, %v720
        %v722 = vpop.f32.mrb[0].mxu0
        %723 = vmatprep.mubr.bf16.mxu0 0
        %724 = vmatmul.mubr.bf16.gmra.mrb[0].mxu0 %v502
        %v725 = vpop.f32.mrb[0].mxu0
        %v726 = vadd.f32 %v284, %v725
        %v727 = vpop.f32.mrb[0].mxu0
        %v728 = vpop.f32.mrb[0].mxu0
        %v729 = vadd.f32 %v284, %v728
        %v730 = vpop.f32.mrb[0].mxu0
        %731 = vmatprep.mubr.bf16.mxu0 0
        %732 = vmatmul.mubr.bf16.gmra.mrb[0].mxu0 %v505
        %v733 = vpop.f32.mrb[0].mxu0
        %v734 = vadd.f32 %v284, %v733
        %v735 = vpop.f32.mrb[0].mxu0
        %v736 = vpop.f32.mrb[0].mxu0
        %v737 = vadd.f32 %v284, %v736
        %v738 = vpop.f32.mrb[0].mxu0
        %739 = vmatprep.mubr.bf16.mxu0 0
        %740 = vmatmul.mubr.bf16.gmra.mrb[0].mxu0 %v508
        %v741 = vpop.f32.mrb[0].mxu0
        %v742 = vadd.f32 %v284, %v741
        %v743 = vpop.f32.mrb[0].mxu0
        %v744 = vpop.f32.mrb[0].mxu0
        %v745 = vadd.f32 %v284, %v744
        %v746 = vpop.f32.mrb[0].mxu0
        %747 = vmatprep.mubr.bf16.mxu0 0
        %748 = vmatmul.mubr.bf16.gmra.mrb[0].mxu0 %v511
        %v749 = vpop.f32.mrb[0].mxu0
        %v750 = vadd.f32 %v284, %v749
        %v751 = vpop.f32.mrb[0].mxu0
        %v752 = vpop.f32.mrb[0].mxu0
        %v753 = vadd.f32 %v284, %v752
        %v754 = vpop.f32.mrb[0].mxu0
        %755 = vmatprep.mubr.bf16.mxu0 0
        %756 = vmatmul.mubr.bf16.gmra.mrb[0].mxu0 %v514
        %v757 = vpop.f32.mrb[0].mxu0
        %v758 = vadd.f32 %v284, %v757
        %v759 = vpop.f32.mrb[0].mxu0
        %v760 = vpop.f32.mrb[0].mxu0
        %v761 = vadd.f32 %v284, %v760
        %v762 = vpop.f32.mrb[0].mxu0
        %763 = vmatprep.mubr.bf16.mxu0 0
        %764 = vmatmul.mubr.bf16.gmra.mrb[0].mxu0 %v517
        %v765 = vpop.f32.mrb[0].mxu0
        %v766 = vadd.f32 %v284, %v765
        %v767 = vpop.f32.mrb[0].mxu0
        %v768 = vpop.f32.mrb[0].mxu0
        %v769 = vadd.f32 %v284, %v768
        %v770 = vpop.f32.mrb[0].mxu0
        %771 = vmatprep.mubr.bf16.mxu0 0
        %772 = vmatmul.mubr.bf16.gmra.mrb[0].mxu0 %v520
        %v773 = vpop.f32.mrb[0].mxu0
        %v774 = vadd.f32 %v284, %v773
        %v775 = vpop.f32.mrb[0].mxu0
        %v776 = vpop.f32.mrb[0].mxu0
        %v777 = vadd.f32 %v284, %v776
        %v778 = vpop.f32.mrb[0].mxu0
        %779 = vmatprep.mubr.bf16.mxu0 0
        %780 = vmatmul.mubr.bf16.gmra.mrb[0].mxu0 %v523
        %v781 = vpop.f32.mrb[0].mxu0
        %v782 = vadd.f32 %v284, %v781
        %v783 = vpop.f32.mrb[0].mxu0
        %v784 = vpop.f32.mrb[0].mxu0
        %v785 = vadd.f32 %v284, %v784
        %v786 = vpop.f32.mrb[0].mxu0
        %787 = vmatprep.mubr.bf16.mxu0 0
        %788 = vmatmul.mubr.bf16.gmra.mrb[0].mxu0 %v526
        %v789 = vpop.f32.mrb[0].mxu0
        %v790 = vadd.f32 %v284, %v789
        %v791 = vpop.f32.mrb[0].mxu0
        %v792 = vpop.f32.mrb[0].mxu0
        %v793 = vadd.f32 %v284, %v792
        %v794 = vpop.f32.mrb[0].mxu0
        %795 = vmatprep.mubr.bf16.mxu0 0
        %796 = vmatmul.mubr.bf16.gmra.mrb[0].mxu0 %v529
        %v797 = vpop.f32.mrb[0].mxu0
        %v798 = vadd.f32 %v284, %v797
        %v799 = vpop.f32.mrb[0].mxu0
        %v800 = vpop.f32.mrb[0].mxu0
        %v801 = vadd.f32 %v284, %v800
        %v802 = vpop.f32.mrb[0].mxu0
        %803 = vmatprep.mubr.bf16.mxu0 0
        %804 = vmatmul.mubr.bf16.gmra.mrb[0].mxu0 %v532
        %v805 = vpop.f32.mrb[0].mxu0
        %v806 = vadd.f32 %v284, %v805
        %v807 = vpop.f32.mrb[0].mxu0
        %v808 = vpop.f32.mrb[0].mxu0
        %v809 = vadd.f32 %v284, %v808
        %v810 = vpop.f32.mrb[0].mxu0
        %811 = vmatprep.mubr.bf16.mxu0 0
        %812 = vmatmul.mubr.bf16.gmra.mrb[0].mxu0 %v535
        %v813 = vpop.f32.mrb[0].mxu0
        %v814 = vadd.f32 %v284, %v813
        %v815 = vpop.f32.mrb[0].mxu0
        %v816 = vpop.f32.mrb[0].mxu0
        %v817 = vadd.f32 %v284, %v816
        %v818 = vpop.f32.mrb[0].mxu0
        %819 = vmatprep.mubr.bf16.mxu0 0
        %820 = vmatmul.mubr.bf16.gmra.mrb[0].mxu0 %v538
        %v821 = vpop.f32.mrb[0].mxu0
        %v822 = vadd.f32 %v284, %v821
        %v823 = vpop.f32.mrb[0].mxu0
        %v824 = vpop.f32.mrb[0].mxu0
        %v825 = vadd.f32 %v284, %v824
        %v826 = vpop.f32.mrb[0].mxu0
        %827 = vmatprep.mubr.bf16.mxu0 0
        %828 = vmatmul.mubr.bf16.gmra.mrb[0].mxu0 %v541
        %v829 = vpop.f32.mrb[0].mxu0
        %v830 = vadd.f32 %v284, %v829
        %v831 = vpop.f32.mrb[0].mxu0
        %v832 = vpop.f32.mrb[0].mxu0
        %v833 = vadd.f32 %v284, %v832
        %v834 = vpop.f32.mrb[0].mxu0
        %835 = vdwg.mxu0
        %v836 = vmax.f32 %v582, 0.0
        %v837 = vmax.f32 %v585, 0.0
        %v838 = vmax.f32 %v590, 0.0
        %v839 = vmax.f32 %v593, 0.0
        %v840 = vmax.f32 %v598, 0.0
        %v841 = vmax.f32 %v601, 0.0
        %v842 = vmax.f32 %v606, 0.0
        %v843 = vmax.f32 %v609, 0.0
        %v844 = vmax.f32 %v614, 0.0
        %v845 = vmax.f32 %v617, 0.0
        %v846 = vmax.f32 %v622, 0.0
        %v847 = vmax.f32 %v625, 0.0
        %v848 = vmax.f32 %v630, 0.0
        %v849 = vmax.f32 %v633, 0.0
        %v850 = vmax.f32 %v638, 0.0
        %v851 = vmax.f32 %v641, 0.0
        %v852 = vmax.f32 %v646, 0.0
        %v853 = vmax.f32 %v649, 0.0
        %v854 = vmax.f32 %v654, 0.0
        %v855 = vmax.f32 %v657, 0.0
        %v856 = vmax.f32 %v662, 0.0
        %v857 = vmax.f32 %v665, 0.0
        %v858 = vmax.f32 %v670, 0.0
        %v859 = vmax.f32 %v673, 0.0
        %v860 = vmax.f32 %v678, 0.0
        %v861 = vmax.f32 %v681, 0.0
        %v862 = vmax.f32 %v686, 0.0
        %v863 = vmax.f32 %v689, 0.0
        %v864 = vmax.f32 %v694, 0.0
        %v865 = vmax.f32 %v697, 0.0
        %v866 = vmax.f32 %v702, 0.0
        %v867 = vmax.f32 %v705, 0.0
        %v868 = vmax.f32 %v710, 0.0
        %v869 = vmax.f32 %v713, 0.0
        %v870 = vmax.f32 %v718, 0.0
        %v871 = vmax.f32 %v721, 0.0
        %v872 = vmax.f32 %v726, 0.0
        %v873 = vmax.f32 %v729, 0.0
        %v874 = vmax.f32 %v734, 0.0
        %v875 = vmax.f32 %v737, 0.0
        %v876 = vmax.f32 %v742, 0.0
        %v877 = vmax.f32 %v745, 0.0
        %v878 = vmax.f32 %v750, 0.0
        %v879 = vmax.f32 %v753, 0.0
        %v880 = vmax.f32 %v758, 0.0
        %v881 = vmax.f32 %v761, 0.0
        %v882 = vmax.f32 %v766, 0.0
        %v883 = vmax.f32 %v769, 0.0
        %v884 = vmax.f32 %v774, 0.0
        %v885 = vmax.f32 %v777, 0.0
        %v886 = vmax.f32 %v782, 0.0
        %v887 = vmax.f32 %v785, 0.0
        %v888 = vmax.f32 %v790, 0.0
        %v889 = vmax.f32 %v793, 0.0
        %v890 = vmax.f32 %v798, 0.0
        %v891 = vmax.f32 %v801, 0.0
        %v892 = vmax.f32 %v806, 0.0
        %v893 = vmax.f32 %v809, 0.0
        %v894 = vmax.f32 %v814, 0.0
        %v895 = vmax.f32 %v817, 0.0
        %v896 = vmax.f32 %v822, 0.0
        %v897 = vmax.f32 %v825, 0.0
        %v898 = vmax.f32 %v830, 0.0
        %v899 = vmax.f32 %v833, 0.0
        %900 = vst [vmem:[%s198] sm:$0xff] %v836
        %901 = vst [vmem:[%s198 + $0x8] sm:$0xff] %v837
        %902 = vst [vmem:[%s198 + $0x10] sm:$0xff] %v838
        %903 = vst [vmem:[%s198 + $0x18] sm:$0xff] %v839
        %904 = vst [vmem:[%s198 + $0x20] sm:$0xff] %v840
        %905 = vst [vmem:[%s198 + $0x28] sm:$0xff] %v841
        %906 = vst [vmem:[%s198 + $0x30] sm:$0xff] %v842
        %907 = vst [vmem:[%s198 + $0x38] sm:$0xff] %v843
        %908 = vst [vmem:[%s198 + $0x40] sm:$0xff] %v844
        %909 = vst [vmem:[%s198 + $0x48] sm:$0xff] %v845
        %910 = vst [vmem:[%s198 + $0x50] sm:$0xff] %v846
        %911 = vst [vmem:[%s198 + $0x58] sm:$0xff] %v847
        %912 = vst [vmem:[%s198 + $0x60] sm:$0xff] %v848
        %913 = vst [vmem:[%s198 + $0x68] sm:$0xff] %v849
        %914 = vst [vmem:[%s198 + $0x70] sm:$0xff] %v850
        %915 = vst [vmem:[%s198 + $0x78] sm:$0xff] %v851
        %916 = vst [vmem:[%s198 + $0x80] sm:$0xff] %v852
        %917 = vst [vmem:[%s198 + $0x88] sm:$0xff] %v853
        %918 = vst [vmem:[%s198 + $0x90] sm:$0xff] %v854
        %919 = vst [vmem:[%s198 + $0x98] sm:$0xff] %v855
        %920 = vst [vmem:[%s198 + $0xa0] sm:$0xff] %v856
        %921 = vst [vmem:[%s198 + $0xa8] sm:$0xff] %v857
        %922 = vst [vmem:[%s198 + $0xb0] sm:$0xff] %v858
        %923 = vst [vmem:[%s198 + $0xb8] sm:$0xff] %v859
        %924 = vst [vmem:[%s198 + $0xc0] sm:$0xff] %v860
        %925 = vst [vmem:[%s198 + $0xc8] sm:$0xff] %v861
        %926 = vst [vmem:[%s198 + $0xd0] sm:$0xff] %v862
        %927 = vst [vmem:[%s198 + $0xd8] sm:$0xff] %v863
        %928 = vst [vmem:[%s198 + $0xe0] sm:$0xff] %v864
        %929 = vst [vmem:[%s198 + $0xe8] sm:$0xff] %v865
        %930 = vst [vmem:[%s198 + $0xf0] sm:$0xff] %v866
        %931 = vst [vmem:[%s198 + $0xf8] sm:$0xff] %v867
        %932 = vst [vmem:[%s198 + $0x100] sm:$0xff] %v868
        %933 = vst [vmem:[%s198 + $0x108] sm:$0xff] %v869
        %934 = vst [vmem:[%s198 + $0x110] sm:$0xff] %v870
        %935 = vst [vmem:[%s198 + $0x118] sm:$0xff] %v871
        %936 = vst [vmem:[%s198 + $0x120] sm:$0xff] %v872
        %937 = vst [vmem:[%s198 + $0x128] sm:$0xff] %v873
        %938 = vst [vmem:[%s198 + $0x130] sm:$0xff] %v874
        %939 = vst [vmem:[%s198 + $0x138] sm:$0xff] %v875
        %940 = vst [vmem:[%s198 + $0x140] sm:$0xff] %v876
        %941 = vst [vmem:[%s198 + $0x148] sm:$0xff] %v877
        %942 = vst [vmem:[%s198 + $0x150] sm:$0xff] %v878
        %943 = vst [vmem:[%s198 + $0x158] sm:$0xff] %v879
        %944 = vst [vmem:[%s198 + $0x160] sm:$0xff] %v880
        %945 = vst [vmem:[%s198 + $0x168] sm:$0xff] %v881
        %946 = vst [vmem:[%s198 + $0x170] sm:$0xff] %v882
        %947 = vst [vmem:[%s198 + $0x178] sm:$0xff] %v883
        %948 = vst [vmem:[%s198 + $0x180] sm:$0xff] %v884
        %949 = vst [vmem:[%s198 + $0x188] sm:$0xff] %v885
        %950 = vst [vmem:[%s198 + $0x190] sm:$0xff] %v886
        %951 = vst [vmem:[%s198 + $0x198] sm:$0xff] %v887
        %952 = vst [vmem:[%s198 + $0x1a0] sm:$0xff] %v888
        %953 = vst [vmem:[%s198 + $0x1a8] sm:$0xff] %v889
        %954 = vst [vmem:[%s198 + $0x1b0] sm:$0xff] %v890
        %955 = vst [vmem:[%s198 + $0x1b8] sm:$0xff] %v891
        %956 = vst [vmem:[%s198 + $0x1c0] sm:$0xff] %v892
        %957 = vst [vmem:[%s198 + $0x1c8] sm:$0xff] %v893
        %958 = vst [vmem:[%s198 + $0x1d0] sm:$0xff] %v894
        %959 = vst [vmem:[%s198 + $0x1d8] sm:$0xff] %v895
        %960 = vst [vmem:[%s198 + $0x1e0] sm:$0xff] %v896
        %961 = vst [vmem:[%s198 + $0x1e8] sm:$0xff] %v897
        %962 = vst [vmem:[%s198 + $0x1f0] sm:$0xff] %v898
        %963 = vst [vmem:[%s198 + $0x1f8] sm:$0xff] %v899
        %s964 = sand.u32 %s114, 1
        %s965 = sand.u32 %s114, 1
        %s966 = smul.addr %s965, 512
        %s967 = scalar_lea.vmem [#allocation2], %s966
        // Predicated region
        $region33: #{inception_c_forward.10} parent=31 // pred_check
          %p968 = pneg %p124
        $region34: #{inception_c_forward.10} parent=31 // pred_check_branch
          %970 = sbr.rel (%p968) target = $region36
        $region35: #{inception_c_forward.10} parent=31 // pred_region
          %s971 = smul.u32 64, %s18
          %s972 = smul.addr %s971, 2
          %s973 = sadd.s32 %s19, %s972
          %s974 = smul.addr %s973, 8
          %s975 = scalar_lea.vmem %s3, %s974
          // Predicated region
          $region37: #{inception_c_forward.10} parent=35 // pred_check
            _
          $region38: #{inception_c_forward.10} parent=35 // pred_check_branch
            %977 = sbr.rel (0) target = $region40
          $region39: #{inception_c_forward.10} parent=35 // pred_region
            // Predicated region
            $region41: #{inception_c_forward.10} parent=39 // pred_check
              _
            $region42: #{inception_c_forward.10} parent=39 // pred_check_branch
              %979 = sbr.rel (0) target = $region44
            $region43: #{inception_c_forward.10} parent=39 // pred_region
              // Predicated region
              $region56: #{inception_c_forward.10} parent=43 // pred_check
                _
              $region57: #{inception_c_forward.10} parent=43 // pred_check_branch
                %1120 = sbr.rel (0) target = $region59
              $region58: #{inception_c_forward.10} parent=43 // pred_region
                loop: start=0, step=1, limit=1
                $region60: #{inception_c_forward.10} parent=58 // loop_pre_header
                  _
                $region61: #{inception_c_forward.10} parent=58 // loop_header
                  %s1122 = sphi 0, %s1126
                  %p1123 = scmp.ge.s32.totalorder %s1122, 1
                  %s1127 = sphi %s967, %s967
                  %s1128 = sphi %s975, %s975
                $region62: #{inception_c_forward.10} parent=58 // loop_header_branch
                  %1125 = sbr.rel (%p1123) target = $region66
                $region63: #{inception_c_forward.10} parent=58 // loop_body
                  %v1129 = vld [vmem:[%s1127] sm:$0xff]
                  %1130 = vst [vmem:[%s1128] sm:$0xff] %v1129
                  %v1131 = vld [vmem:[%s1127 + $0x8] sm:$0xff]
                  %1132 = vst [vmem:[%s1128 + $0x10] sm:$0xff] %v1131
                  %v1133 = vld [vmem:[%s1127 + $0x10] sm:$0xff]
                  %1134 = vst [vmem:[%s1128 + $0x20] sm:$0xff] %v1133
                  %v1135 = vld [vmem:[%s1127 + $0x18] sm:$0xff]
                  %1136 = vst [vmem:[%s1128 + $0x30] sm:$0xff] %v1135
                  %v1137 = vld [vmem:[%s1127 + $0x20] sm:$0xff]
                  %1138 = vst [vmem:[%s1128 + $0x40] sm:$0xff] %v1137
                  %v1139 = vld [vmem:[%s1127 + $0x28] sm:$0xff]
                  %1140 = vst [vmem:[%s1128 + $0x50] sm:$0xff] %v1139
                  %v1141 = vld [vmem:[%s1127 + $0x30] sm:$0xff]
                  %1142 = vst [vmem:[%s1128 + $0x60] sm:$0xff] %v1141
                  %v1143 = vld [vmem:[%s1127 + $0x38] sm:$0xff]
                  %1144 = vst [vmem:[%s1128 + $0x70] sm:$0xff] %v1143
                  %v1145 = vld [vmem:[%s1127 + $0x40] sm:$0xff]
                  %1146 = vst [vmem:[%s1128 + $0x80] sm:$0xff] %v1145
                  %v1147 = vld [vmem:[%s1127 + $0x48] sm:$0xff]
                  %1148 = vst [vmem:[%s1128 + $0x90] sm:$0xff] %v1147
                  %v1149 = vld [vmem:[%s1127 + $0x50] sm:$0xff]
                  %1150 = vst [vmem:[%s1128 + $0xa0] sm:$0xff] %v1149
                  %v1151 = vld [vmem:[%s1127 + $0x58] sm:$0xff]
                  %1152 = vst [vmem:[%s1128 + $0xb0] sm:$0xff] %v1151
                  %v1153 = vld [vmem:[%s1127 + $0x60] sm:$0xff]
                  %1154 = vst [vmem:[%s1128 + $0xc0] sm:$0xff] %v1153
                  %v1155 = vld [vmem:[%s1127 + $0x68] sm:$0xff]
                  %1156 = vst [vmem:[%s1128 + $0xd0] sm:$0xff] %v1155
                  %v1157 = vld [vmem:[%s1127 + $0x70] sm:$0xff]
                  %1158 = vst [vmem:[%s1128 + $0xe0] sm:$0xff] %v1157
                  %v1159 = vld [vmem:[%s1127 + $0x78] sm:$0xff]
                  %1160 = vst [vmem:[%s1128 + $0xf0] sm:$0xff] %v1159
                  %v1161 = vld [vmem:[%s1127 + $0x80] sm:$0xff]
                  %1162 = vst [vmem:[%s1128 + $0x100] sm:$0xff] %v1161
                  %v1163 = vld [vmem:[%s1127 + $0x88] sm:$0xff]
                  %1164 = vst [vmem:[%s1128 + $0x110] sm:$0xff] %v1163
                  %v1165 = vld [vmem:[%s1127 + $0x90] sm:$0xff]
                  %1166 = vst [vmem:[%s1128 + $0x120] sm:$0xff] %v1165
                  %v1167 = vld [vmem:[%s1127 + $0x98] sm:$0xff]
                  %1168 = vst [vmem:[%s1128 + $0x130] sm:$0xff] %v1167
                  %v1169 = vld [vmem:[%s1127 + $0xa0] sm:$0xff]
                  %1170 = vst [vmem:[%s1128 + $0x140] sm:$0xff] %v1169
                  %v1171 = vld [vmem:[%s1127 + $0xa8] sm:$0xff]
                  %1172 = vst [vmem:[%s1128 + $0x150] sm:$0xff] %v1171
                  %v1173 = vld [vmem:[%s1127 + $0xb0] sm:$0xff]
                  %1174 = vst [vmem:[%s1128 + $0x160] sm:$0xff] %v1173
                  %v1175 = vld [vmem:[%s1127 + $0xb8] sm:$0xff]
                  %1176 = vst [vmem:[%s1128 + $0x170] sm:$0xff] %v1175
                  %v1177 = vld [vmem:[%s1127 + $0xc0] sm:$0xff]
                  %1178 = vst [vmem:[%s1128 + $0x180] sm:$0xff] %v1177
                  %v1179 = vld [vmem:[%s1127 + $0xc8] sm:$0xff]
                  %1180 = vst [vmem:[%s1128 + $0x190] sm:$0xff] %v1179
                  %v1181 = vld [vmem:[%s1127 + $0xd0] sm:$0xff]
                  %1182 = vst [vmem:[%s1128 + $0x1a0] sm:$0xff] %v1181
                  %v1183 = vld [vmem:[%s1127 + $0xd8] sm:$0xff]
                  %1184 = vst [vmem:[%s1128 + $0x1b0] sm:$0xff] %v1183
                  %v1185 = vld [vmem:[%s1127 + $0xe0] sm:$0xff]
                  %1186 = vst [vmem:[%s1128 + $0x1c0] sm:$0xff] %v1185
                  %v1187 = vld [vmem:[%s1127 + $0xe8] sm:$0xff]
                  %1188 = vst [vmem:[%s1128 + $0x1d0] sm:$0xff] %v1187
                  %v1189 = vld [vmem:[%s1127 + $0xf0] sm:$0xff]
                  %1190 = vst [vmem:[%s1128 + $0x1e0] sm:$0xff] %v1189
                  %v1191 = vld [vmem:[%s1127 + $0xf8] sm:$0xff]
                  %1192 = vst [vmem:[%s1128 + $0x1f0] sm:$0xff] %v1191
                  %v1193 = vld [vmem:[%s1127 + $0x100] sm:$0xff]
                  %1194 = vst [vmem:[%s1128 + $0x200] sm:$0xff] %v1193
                  %v1195 = vld [vmem:[%s1127 + $0x108] sm:$0xff]
                  %1196 = vst [vmem:[%s1128 + $0x210] sm:$0xff] %v1195
                  %v1197 = vld [vmem:[%s1127 + $0x110] sm:$0xff]
                  %1198 = vst [vmem:[%s1128 + $0x220] sm:$0xff] %v1197
                  %v1199 = vld [vmem:[%s1127 + $0x118] sm:$0xff]
                  %1200 = vst [vmem:[%s1128 + $0x230] sm:$0xff] %v1199
                  %v1201 = vld [vmem:[%s1127 + $0x120] sm:$0xff]
                  %1202 = vst [vmem:[%s1128 + $0x240] sm:$0xff] %v1201
                  %v1203 = vld [vmem:[%s1127 + $0x128] sm:$0xff]
                  %1204 = vst [vmem:[%s1128 + $0x250] sm:$0xff] %v1203
                  %v1205 = vld [vmem:[%s1127 + $0x130] sm:$0xff]
                  %1206 = vst [vmem:[%s1128 + $0x260] sm:$0xff] %v1205
                  %v1207 = vld [vmem:[%s1127 + $0x138] sm:$0xff]
                  %1208 = vst [vmem:[%s1128 + $0x270] sm:$0xff] %v1207
                  %v1209 = vld [vmem:[%s1127 + $0x140] sm:$0xff]
                  %1210 = vst [vmem:[%s1128 + $0x280] sm:$0xff] %v1209
                  %v1211 = vld [vmem:[%s1127 + $0x148] sm:$0xff]
                  %1212 = vst [vmem:[%s1128 + $0x290] sm:$0xff] %v1211
                  %v1213 = vld [vmem:[%s1127 + $0x150] sm:$0xff]
                  %1214 = vst [vmem:[%s1128 + $0x2a0] sm:$0xff] %v1213
                  %v1215 = vld [vmem:[%s1127 + $0x158] sm:$0xff]
                  %1216 = vst [vmem:[%s1128 + $0x2b0] sm:$0xff] %v1215
                  %v1217 = vld [vmem:[%s1127 + $0x160] sm:$0xff]
                  %1218 = vst [vmem:[%s1128 + $0x2c0] sm:$0xff] %v1217
                  %v1219 = vld [vmem:[%s1127 + $0x168] sm:$0xff]
                  %1220 = vst [vmem:[%s1128 + $0x2d0] sm:$0xff] %v1219
                  %v1221 = vld [vmem:[%s1127 + $0x170] sm:$0xff]
                  %1222 = vst [vmem:[%s1128 + $0x2e0] sm:$0xff] %v1221
                  %v1223 = vld [vmem:[%s1127 + $0x178] sm:$0xff]
                  %1224 = vst [vmem:[%s1128 + $0x2f0] sm:$0xff] %v1223
                  %v1225 = vld [vmem:[%s1127 + $0x180] sm:$0xff]
                  %1226 = vst [vmem:[%s1128 + $0x300] sm:$0xff] %v1225
                  %v1227 = vld [vmem:[%s1127 + $0x188] sm:$0xff]
                  %1228 = vst [vmem:[%s1128 + $0x310] sm:$0xff] %v1227
                  %v1229 = vld [vmem:[%s1127 + $0x190] sm:$0xff]
                  %1230 = vst [vmem:[%s1128 + $0x320] sm:$0xff] %v1229
                  %v1231 = vld [vmem:[%s1127 + $0x198] sm:$0xff]
                  %1232 = vst [vmem:[%s1128 + $0x330] sm:$0xff] %v1231
                  %v1233 = vld [vmem:[%s1127 + $0x1a0] sm:$0xff]
                  %1234 = vst [vmem:[%s1128 + $0x340] sm:$0xff] %v1233
                  %v1235 = vld [vmem:[%s1127 + $0x1a8] sm:$0xff]
                  %1236 = vst [vmem:[%s1128 + $0x350] sm:$0xff] %v1235
                  %v1237 = vld [vmem:[%s1127 + $0x1b0] sm:$0xff]
                  %1238 = vst [vmem:[%s1128 + $0x360] sm:$0xff] %v1237
                  %v1239 = vld [vmem:[%s1127 + $0x1b8] sm:$0xff]
                  %1240 = vst [vmem:[%s1128 + $0x370] sm:$0xff] %v1239
                  %v1241 = vld [vmem:[%s1127 + $0x1c0] sm:$0xff]
                  %1242 = vst [vmem:[%s1128 + $0x380] sm:$0xff] %v1241
                  %v1243 = vld [vmem:[%s1127 + $0x1c8] sm:$0xff]
                  %1244 = vst [vmem:[%s1128 + $0x390] sm:$0xff] %v1243
                  %v1245 = vld [vmem:[%s1127 + $0x1d0] sm:$0xff]
                  %1246 = vst [vmem:[%s1128 + $0x3a0] sm:$0xff] %v1245
                  %v1247 = vld [vmem:[%s1127 + $0x1d8] sm:$0xff]
                  %1248 = vst [vmem:[%s1128 + $0x3b0] sm:$0xff] %v1247
                  %v1249 = vld [vmem:[%s1127 + $0x1e0] sm:$0xff]
                  %1250 = vst [vmem:[%s1128 + $0x3c0] sm:$0xff] %v1249
                  %v1251 = vld [vmem:[%s1127 + $0x1e8] sm:$0xff]
                  %1252 = vst [vmem:[%s1128 + $0x3d0] sm:$0xff] %v1251
                  %v1253 = vld [vmem:[%s1127 + $0x1f0] sm:$0xff]
                  %1254 = vst [vmem:[%s1128 + $0x3e0] sm:$0xff] %v1253
                  %v1255 = vld [vmem:[%s1127 + $0x1f8] sm:$0xff]
                  %1256 = vst [vmem:[%s1128 + $0x3f0] sm:$0xff] %v1255
                $region64: #{inception_c_forward.10} parent=58 // loop_footer
                  %s1126 = sadd.s32 1, %s1122
                $region65: #{inception_c_forward.10} parent=58 // loop_footer_branch
                  %1121 = sbr.rel target = $region61
                $region66: #{inception_c_forward.10} parent=58 // loop_exit
                  _
              $region59: #{inception_c_forward.10} parent=43 // pred_fallthru
                _
              // Predicated region
              $region67: #{inception_c_forward.10} parent=43 // pred_check
                _
              $region68: #{inception_c_forward.10} parent=43 // pred_check_branch
                %1258 = sbr.rel target = $region70
              $region69: #{inception_c_forward.10} parent=43 // pred_region
                _
              $region70: #{inception_c_forward.10} parent=43 // pred_fallthru
                _
            $region44: #{inception_c_forward.10} parent=39 // pred_fallthru
              _
            // Predicated region
            $region45: #{inception_c_forward.10} parent=39 // pred_check
              _
            $region46: #{inception_c_forward.10} parent=39 // pred_check_branch
              %981 = sbr.rel target = $region48
            $region47: #{inception_c_forward.10} parent=39 // pred_region
              loop: start=0, step=1, limit=1
              $region49: #{inception_c_forward.10} parent=47 // loop_pre_header
                _
              $region50: #{inception_c_forward.10} parent=47 // loop_header
                %s984 = sphi 0, %s988
                %p985 = scmp.ge.s32.totalorder %s984, 1
                %s989 = sphi %s967, %s967
                %s990 = sphi %s975, %s975
              $region51: #{inception_c_forward.10} parent=47 // loop_header_branch
                %987 = sbr.rel (%p985) target = $region55
              $region52: #{inception_c_forward.10} parent=47 // loop_body
                %v991 = vld [vmem:[%s989] sm:$0xff]
                %992 = vst [vmem:[%s990] sm:$0xff] %v991
                %v993 = vld [vmem:[%s989 + $0x8] sm:$0xff]
                %994 = vst [vmem:[%s990 + $0x10] sm:$0xff] %v993
                %v995 = vld [vmem:[%s989 + $0x10] sm:$0xff]
                %996 = vst [vmem:[%s990 + $0x20] sm:$0xff] %v995
                %v997 = vld [vmem:[%s989 + $0x18] sm:$0xff]
                %998 = vst [vmem:[%s990 + $0x30] sm:$0xff] %v997
                %v999 = vld [vmem:[%s989 + $0x20] sm:$0xff]
                %1000 = vst [vmem:[%s990 + $0x40] sm:$0xff] %v999
                %v1001 = vld [vmem:[%s989 + $0x28] sm:$0xff]
                %1002 = vst [vmem:[%s990 + $0x50] sm:$0xff] %v1001
                %v1003 = vld [vmem:[%s989 + $0x30] sm:$0xff]
                %1004 = vst [vmem:[%s990 + $0x60] sm:$0xff] %v1003
                %v1005 = vld [vmem:[%s989 + $0x38] sm:$0xff]
                %1006 = vst [vmem:[%s990 + $0x70] sm:$0xff] %v1005
                %v1007 = vld [vmem:[%s989 + $0x40] sm:$0xff]
                %1008 = vst [vmem:[%s990 + $0x80] sm:$0xff] %v1007
                %v1009 = vld [vmem:[%s989 + $0x48] sm:$0xff]
                %1010 = vst [vmem:[%s990 + $0x90] sm:$0xff] %v1009
                %v1011 = vld [vmem:[%s989 + $0x50] sm:$0xff]
                %1012 = vst [vmem:[%s990 + $0xa0] sm:$0xff] %v1011
                %v1013 = vld [vmem:[%s989 + $0x58] sm:$0xff]
                %1014 = vst [vmem:[%s990 + $0xb0] sm:$0xff] %v1013
                %v1015 = vld [vmem:[%s989 + $0x60] sm:$0xff]
                %1016 = vst [vmem:[%s990 + $0xc0] sm:$0xff] %v1015
                %v1017 = vld [vmem:[%s989 + $0x68] sm:$0xff]
                %1018 = vst [vmem:[%s990 + $0xd0] sm:$0xff] %v1017
                %v1019 = vld [vmem:[%s989 + $0x70] sm:$0xff]
                %1020 = vst [vmem:[%s990 + $0xe0] sm:$0xff] %v1019
                %v1021 = vld [vmem:[%s989 + $0x78] sm:$0xff]
                %1022 = vst [vmem:[%s990 + $0xf0] sm:$0xff] %v1021
                %v1023 = vld [vmem:[%s989 + $0x80] sm:$0xff]
                %1024 = vst [vmem:[%s990 + $0x100] sm:$0xff] %v1023
                %v1025 = vld [vmem:[%s989 + $0x88] sm:$0xff]
                %1026 = vst [vmem:[%s990 + $0x110] sm:$0xff] %v1025
                %v1027 = vld [vmem:[%s989 + $0x90] sm:$0xff]
                %1028 = vst [vmem:[%s990 + $0x120] sm:$0xff] %v1027
                %v1029 = vld [vmem:[%s989 + $0x98] sm:$0xff]
                %1030 = vst [vmem:[%s990 + $0x130] sm:$0xff] %v1029
                %v1031 = vld [vmem:[%s989 + $0xa0] sm:$0xff]
                %1032 = vst [vmem:[%s990 + $0x140] sm:$0xff] %v1031
                %v1033 = vld [vmem:[%s989 + $0xa8] sm:$0xff]
                %1034 = vst [vmem:[%s990 + $0x150] sm:$0xff] %v1033
                %v1035 = vld [vmem:[%s989 + $0xb0] sm:$0xff]
                %1036 = vst [vmem:[%s990 + $0x160] sm:$0xff] %v1035
                %v1037 = vld [vmem:[%s989 + $0xb8] sm:$0xff]
                %1038 = vst [vmem:[%s990 + $0x170] sm:$0xff] %v1037
                %v1039 = vld [vmem:[%s989 + $0xc0] sm:$0xff]
                %1040 = vst [vmem:[%s990 + $0x180] sm:$0xff] %v1039
                %v1041 = vld [vmem:[%s989 + $0xc8] sm:$0xff]
                %1042 = vst [vmem:[%s990 + $0x190] sm:$0xff] %v1041
                %v1043 = vld [vmem:[%s989 + $0xd0] sm:$0xff]
                %1044 = vst [vmem:[%s990 + $0x1a0] sm:$0xff] %v1043
                %v1045 = vld [vmem:[%s989 + $0xd8] sm:$0xff]
                %1046 = vst [vmem:[%s990 + $0x1b0] sm:$0xff] %v1045
                %v1047 = vld [vmem:[%s989 + $0xe0] sm:$0xff]
                %1048 = vst [vmem:[%s990 + $0x1c0] sm:$0xff] %v1047
                %v1049 = vld [vmem:[%s989 + $0xe8] sm:$0xff]
                %1050 = vst [vmem:[%s990 + $0x1d0] sm:$0xff] %v1049
                %v1051 = vld [vmem:[%s989 + $0xf0] sm:$0xff]
                %1052 = vst [vmem:[%s990 + $0x1e0] sm:$0xff] %v1051
                %v1053 = vld [vmem:[%s989 + $0xf8] sm:$0xff]
                %1054 = vst [vmem:[%s990 + $0x1f0] sm:$0xff] %v1053
                %v1055 = vld [vmem:[%s989 + $0x100] sm:$0xff]
                %1056 = vst [vmem:[%s990 + $0x200] sm:$0xff] %v1055
                %v1057 = vld [vmem:[%s989 + $0x108] sm:$0xff]
                %1058 = vst [vmem:[%s990 + $0x210] sm:$0xff] %v1057
                %v1059 = vld [vmem:[%s989 + $0x110] sm:$0xff]
                %1060 = vst [vmem:[%s990 + $0x220] sm:$0xff] %v1059
                %v1061 = vld [vmem:[%s989 + $0x118] sm:$0xff]
                %1062 = vst [vmem:[%s990 + $0x230] sm:$0xff] %v1061
                %v1063 = vld [vmem:[%s989 + $0x120] sm:$0xff]
                %1064 = vst [vmem:[%s990 + $0x240] sm:$0xff] %v1063
                %v1065 = vld [vmem:[%s989 + $0x128] sm:$0xff]
                %1066 = vst [vmem:[%s990 + $0x250] sm:$0xff] %v1065
                %v1067 = vld [vmem:[%s989 + $0x130] sm:$0xff]
                %1068 = vst [vmem:[%s990 + $0x260] sm:$0xff] %v1067
                %v1069 = vld [vmem:[%s989 + $0x138] sm:$0xff]
                %1070 = vst [vmem:[%s990 + $0x270] sm:$0xff] %v1069
                %v1071 = vld [vmem:[%s989 + $0x140] sm:$0xff]
                %1072 = vst [vmem:[%s990 + $0x280] sm:$0xff] %v1071
                %v1073 = vld [vmem:[%s989 + $0x148] sm:$0xff]
                %1074 = vst [vmem:[%s990 + $0x290] sm:$0xff] %v1073
                %v1075 = vld [vmem:[%s989 + $0x150] sm:$0xff]
                %1076 = vst [vmem:[%s990 + $0x2a0] sm:$0xff] %v1075
                %v1077 = vld [vmem:[%s989 + $0x158] sm:$0xff]
                %1078 = vst [vmem:[%s990 + $0x2b0] sm:$0xff] %v1077
                %v1079 = vld [vmem:[%s989 + $0x160] sm:$0xff]
                %1080 = vst [vmem:[%s990 + $0x2c0] sm:$0xff] %v1079
                %v1081 = vld [vmem:[%s989 + $0x168] sm:$0xff]
                %1082 = vst [vmem:[%s990 + $0x2d0] sm:$0xff] %v1081
                %v1083 = vld [vmem:[%s989 + $0x170] sm:$0xff]
                %1084 = vst [vmem:[%s990 + $0x2e0] sm:$0xff] %v1083
                %v1085 = vld [vmem:[%s989 + $0x178] sm:$0xff]
                %1086 = vst [vmem:[%s990 + $0x2f0] sm:$0xff] %v1085
                %v1087 = vld [vmem:[%s989 + $0x180] sm:$0xff]
                %1088 = vst [vmem:[%s990 + $0x300] sm:$0xff] %v1087
                %v1089 = vld [vmem:[%s989 + $0x188] sm:$0xff]
                %1090 = vst [vmem:[%s990 + $0x310] sm:$0xff] %v1089
                %v1091 = vld [vmem:[%s989 + $0x190] sm:$0xff]
                %1092 = vst [vmem:[%s990 + $0x320] sm:$0xff] %v1091
                %v1093 = vld [vmem:[%s989 + $0x198] sm:$0xff]
                %1094 = vst [vmem:[%s990 + $0x330] sm:$0xff] %v1093
                %v1095 = vld [vmem:[%s989 + $0x1a0] sm:$0xff]
                %1096 = vst [vmem:[%s990 + $0x340] sm:$0xff] %v1095
                %v1097 = vld [vmem:[%s989 + $0x1a8] sm:$0xff]
                %1098 = vst [vmem:[%s990 + $0x350] sm:$0xff] %v1097
                %v1099 = vld [vmem:[%s989 + $0x1b0] sm:$0xff]
                %1100 = vst [vmem:[%s990 + $0x360] sm:$0xff] %v1099
                %v1101 = vld [vmem:[%s989 + $0x1b8] sm:$0xff]
                %1102 = vst [vmem:[%s990 + $0x370] sm:$0xff] %v1101
                %v1103 = vld [vmem:[%s989 + $0x1c0] sm:$0xff]
                %1104 = vst [vmem:[%s990 + $0x380] sm:$0xff] %v1103
                %v1105 = vld [vmem:[%s989 + $0x1c8] sm:$0xff]
                %1106 = vst [vmem:[%s990 + $0x390] sm:$0xff] %v1105
                %v1107 = vld [vmem:[%s989 + $0x1d0] sm:$0xff]
                %1108 = vst [vmem:[%s990 + $0x3a0] sm:$0xff] %v1107
                %v1109 = vld [vmem:[%s989 + $0x1d8] sm:$0xff]
                %1110 = vst [vmem:[%s990 + $0x3b0] sm:$0xff] %v1109
                %v1111 = vld [vmem:[%s989 + $0x1e0] sm:$0xff]
                %1112 = vst [vmem:[%s990 + $0x3c0] sm:$0xff] %v1111
                %v1113 = vld [vmem:[%s989 + $0x1e8] sm:$0xff]
                %1114 = vst [vmem:[%s990 + $0x3d0] sm:$0xff] %v1113
                %v1115 = vld [vmem:[%s989 + $0x1f0] sm:$0xff]
                %1116 = vst [vmem:[%s990 + $0x3e0] sm:$0xff] %v1115
                %v1117 = vld [vmem:[%s989 + $0x1f8] sm:$0xff]
                %1118 = vst [vmem:[%s990 + $0x3f0] sm:$0xff] %v1117
              $region53: #{inception_c_forward.10} parent=47 // loop_footer
                %s988 = sadd.s32 1, %s984
              $region54: #{inception_c_forward.10} parent=47 // loop_footer_branch
                %983 = sbr.rel target = $region50
              $region55: #{inception_c_forward.10} parent=47 // loop_exit
                _
            $region48: #{inception_c_forward.10} parent=39 // pred_fallthru
              _
          $region40: #{inception_c_forward.10} parent=35 // pred_fallthru
            _
          %1259 = vnop
        $region36: #{inception_c_forward.10} parent=31 // pred_fallthru
          _
      $region32: #{inception_c_forward.10} parent=5 // pred_fallthru
        _
      %p1260 = scmp.le.s32.totalorder 2, %s9
      // Predicated region
      $region71: #{inception_c_forward.10} parent=5 // pred_check
        %p1261 = pneg %p1260
      $region72: #{inception_c_forward.10} parent=5 // pred_check_branch
        %1263 = sbr.rel (%p1261) target = $region74
      $region73: #{inception_c_forward.10} parent=5 // pred_region
        %s1264 = ssub.s32 %s9, 2
        // Predicated region
        $region75: #{inception_c_forward.10} parent=73 // pred_check
          %p1265 = pneg %p130
        $region76: #{inception_c_forward.10} parent=73 // pred_check_branch
          %1267 = sbr.rel (%p1265) target = $region78
        $region77: #{inception_c_forward.10} parent=73 // pred_region
          %s1268 = sand.u32 %s115, 1
          %s1269 = sand.u32 %s115, 1
          %s1270 = smul.addr %s1269, 512
          %s1271 = scalar_lea.vmem [#allocation2], %s1270
        $region78: #{inception_c_forward.10} parent=73 // pred_fallthru
          _
      $region74: #{inception_c_forward.10} parent=5 // pred_fallthru
        _
    $region6: #{inception_c_forward.10} parent=1 // loop_footer
      %s13 = sadd.s32 1, %s9
    $region7: #{inception_c_forward.10} parent=1 // loop_footer_branch
      %8 = sbr.rel target = $region3
    $region8: #{inception_c_forward.10} parent=1 // loop_exit
      _

// kernel: inception_c_forward.12
$region0: #{inception_c_forward.12}
  #allocation0 [shape = 'u32[]', space=smem, size = 0x4, offset = 0x4, fixed_abs, tag = 'smem constant byte address 0x4 - core index']
  #allocation1 [shape = 'u32[144,128]{1,0:T(1,128)}', space=vmem, size = 0x12000, scoped, tag = 'internal scratch']
  %s0 = inlined_call_operand.vmem [shape: bf16[512,56], index: 0, kind: input, shape index: {}]
  %s1 = inlined_call_operand.vmem [shape: bf16[56,128], index: 1, kind: input, shape index: {}]
  %s2 = inlined_call_operand.vmem [shape: f32[1,128], index: 2, kind: input, shape index: {}]
  %s3 = inlined_call_operand.vmem [shape: f32[512,128], index: 3, kind: output, shape index: {}]
  %s4 = sld [smem:[#allocation0]]
  $region22: #{inception_c_forward.12} parent=0
    _
  %s6 = ssub.s32 1, %s4
  %s7 = scalar_select 0, %s6, %s4
  // Predicated region
  $region2: #{inception_c_forward.12} parent=0 // pred_check
    _
  $region3: #{inception_c_forward.12} parent=0 // pred_check_branch
    %9 = sbr.rel (0) target = $region5
  $region4: #{inception_c_forward.12} parent=0 // pred_region
    _
  $region5: #{inception_c_forward.12} parent=0 // pred_fallthru
    _
  // Predicated region
  $region6: #{inception_c_forward.12} parent=0 // pred_check
    _
  $region7: #{inception_c_forward.12} parent=0 // pred_check_branch
    %11 = sbr.rel (0) target = $region9
  $region8: #{inception_c_forward.12} parent=0 // pred_region
    _
  $region9: #{inception_c_forward.12} parent=0 // pred_fallthru
    _
  // Predicated region
  $region10: #{inception_c_forward.12} parent=0 // pred_check
    _
  $region11: #{inception_c_forward.12} parent=0 // pred_check_branch
    %13 = sbr.rel (0) target = $region13
  $region12: #{inception_c_forward.12} parent=0 // pred_region
    _
  $region13: #{inception_c_forward.12} parent=0 // pred_fallthru
    _
  %v15 = vld [vmem:[%s0] sm:$0xf]
  %v16 = vld [vmem:[%s0 + $0x4] sm:$0xf]
  %v17 = vld [vmem:[%s0 + $0x8] sm:$0xf]
  %v18 = vld [vmem:[%s0 + $0xc] sm:$0xf]
  %v19 = vld [vmem:[%s0 + $0x10] sm:$0xf]
  %v20 = vld [vmem:[%s0 + $0x14] sm:$0xf]
  %v21 = vld [vmem:[%s0 + $0x18] sm:$0xf]
  %v22 = vld [vmem:[%s0 + $0x1c] sm:$0xf]
  %v23 = vld [vmem:[%s0 + $0x20] sm:$0xf]
  %v24 = vld [vmem:[%s0 + $0x24] sm:$0xf]
  %v25 = vld [vmem:[%s0 + $0x28] sm:$0xf]
  %v26 = vld [vmem:[%s0 + $0x2c] sm:$0xf]
  %v27 = vld [vmem:[%s0 + $0x30] sm:$0xf]
  %v28 = vld [vmem:[%s0 + $0x34] sm:$0xf]
  %v29 = vld [vmem:[%s0 + $0x38] sm:$0xf]
  %v30 = vld [vmem:[%s0 + $0x3c] sm:$0xf]
  %v31 = vld [vmem:[%s0 + $0x40] sm:$0xf]
  %v32 = vld [vmem:[%s0 + $0x44] sm:$0xf]
  %v33 = vld [vmem:[%s0 + $0x48] sm:$0xf]
  %v34 = vld [vmem:[%s0 + $0x4c] sm:$0xf]
  %v35 = vld [vmem:[%s0 + $0x50] sm:$0xf]
  %v36 = vld [vmem:[%s0 + $0x54] sm:$0xf]
  %v37 = vld [vmem:[%s0 + $0x58] sm:$0xf]
  %v38 = vld [vmem:[%s0 + $0x5c] sm:$0xf]
  %v39 = vld [vmem:[%s0 + $0x60] sm:$0xf]
  %v40 = vld [vmem:[%s0 + $0x64] sm:$0xf]
  %v41 = vld [vmem:[%s0 + $0x68] sm:$0xf]
  %v42 = vld [vmem:[%s0 + $0x6c] sm:$0xf]
  %v43 = vld [vmem:[%s0 + $0x70] sm:$0xf]
  %v44 = vld [vmem:[%s0 + $0x74] sm:$0xf]
  %v45 = vld [vmem:[%s0 + $0x78] sm:$0xf]
  %v46 = vld [vmem:[%s0 + $0x7c] sm:$0xf]
  %v47 = vld [vmem:[%s0 + $0x80] sm:$0xf]
  %v48 = vld [vmem:[%s0 + $0x84] sm:$0xf]
  %v49 = vld [vmem:[%s0 + $0x88] sm:$0xf]
  %v50 = vld [vmem:[%s0 + $0x8c] sm:$0xf]
  %v51 = vld [vmem:[%s0 + $0x90] sm:$0xf]
  %v52 = vld [vmem:[%s0 + $0x94] sm:$0xf]
  %v53 = vld [vmem:[%s0 + $0x98] sm:$0xf]
  %v54 = vld [vmem:[%s0 + $0x9c] sm:$0xf]
  %v55 = vld [vmem:[%s0 + $0xa0] sm:$0xf]
  %v56 = vld [vmem:[%s0 + $0xa4] sm:$0xf]
  %v57 = vld [vmem:[%s0 + $0xa8] sm:$0xf]
  %v58 = vld [vmem:[%s0 + $0xac] sm:$0xf]
  %v59 = vld [vmem:[%s0 + $0xb0] sm:$0xf]
  %v60 = vld [vmem:[%s0 + $0xb4] sm:$0xf]
  %v61 = vld [vmem:[%s0 + $0xb8] sm:$0xf]
  %v62 = vld [vmem:[%s0 + $0xbc] sm:$0xf]
  %v63 = vld [vmem:[%s0 + $0xc0] sm:$0xf]
  %v64 = vld [vmem:[%s0 + $0xc4] sm:$0xf]
  %v65 = vld [vmem:[%s0 + $0xc8] sm:$0xf]
  %v66 = vld [vmem:[%s0 + $0xcc] sm:$0xf]
  %v67 = vld [vmem:[%s0 + $0xd0] sm:$0xf]
  %v68 = vld [vmem:[%s0 + $0xd4] sm:$0xf]
  %v69 = vld [vmem:[%s0 + $0xd8] sm:$0xf]
  %v70 = vld [vmem:[%s0 + $0xdc] sm:$0xf]
  %v71 = vld [vmem:[%s0 + $0xe0] sm:$0xf]
  %v72 = vld [vmem:[%s0 + $0xe4] sm:$0xf]
  %v73 = vld [vmem:[%s0 + $0xe8] sm:$0xf]
  %v74 = vld [vmem:[%s0 + $0xec] sm:$0xf]
  %v75 = vld [vmem:[%s0 + $0xf0] sm:$0xf]
  %v76 = vld [vmem:[%s0 + $0xf4] sm:$0xf]
  %v77 = vld [vmem:[%s0 + $0xf8] sm:$0xf]
  %v78 = vld [vmem:[%s0 + $0xfc] sm:$0xf]
  %v79 = vld [vmem:[%s1] sm:$0xf]
  %v80 = vld [vmem:[%s1 + $0x4] sm:$0xf]
  %v81 = vld [vmem:[%s1 + $0x8] sm:$0xf]
  %v82 = vld [vmem:[%s1 + $0xc] sm:$0xf]
  %v83 = vld [vmem:[%s1 + $0x10] sm:$0xf]
  %v84 = vld [vmem:[%s1 + $0x14] sm:$0xf]
  %v85 = vld [vmem:[%s1 + $0x18] sm:$0xf]
  %v86 = vld [vmem:[%s2] sm:$0x1]
  %v88 = vlaneseq
  %v89 = vshrl.u32 %v88, 7
  %v90 = vsub.s32 0, %v89
  %v91 = vrot.slane %v86, %v90
  %v157 = vunpack.c.l.b16 %v15
  %v158 = vunpack.c.l.b16 %v16
  %v159 = vunpack.c.l.b16 %v17
  %v160 = vunpack.c.l.b16 %v18
  %v161 = vunpack.c.l.b16 %v19
  %v162 = vunpack.c.l.b16 %v20
  %v163 = vunpack.c.l.b16 %v21
  %v164 = vunpack.c.l.b16 %v22
  %v165 = vunpack.c.l.b16 %v23
  %v166 = vunpack.c.l.b16 %v24
  %v167 = vunpack.c.l.b16 %v25
  %v168 = vunpack.c.l.b16 %v26
  %v169 = vunpack.c.l.b16 %v27
  %v170 = vunpack.c.l.b16 %v28
  %v171 = vunpack.c.l.b16 %v29
  %v172 = vunpack.c.l.b16 %v30
  %v173 = vunpack.c.l.b16 %v31
  %v174 = vunpack.c.l.b16 %v32
  %v175 = vunpack.c.l.b16 %v33
  %v176 = vunpack.c.l.b16 %v34
  %v177 = vunpack.c.l.b16 %v35
  %v178 = vunpack.c.l.b16 %v36
  %v179 = vunpack.c.l.b16 %v37
  %v180 = vunpack.c.l.b16 %v38
  %v181 = vunpack.c.l.b16 %v39
  %v182 = vunpack.c.l.b16 %v40
  %v183 = vunpack.c.l.b16 %v41
  %v184 = vunpack.c.l.b16 %v42
  %v185 = vunpack.c.l.b16 %v43
  %v186 = vunpack.c.l.b16 %v44
  %v187 = vunpack.c.l.b16 %v45
  %v188 = vunpack.c.l.b16 %v46
  %v189 = vunpack.c.l.b16 %v47
  %v190 = vunpack.c.l.b16 %v48
  %v191 = vunpack.c.l.b16 %v49
  %v192 = vunpack.c.l.b16 %v50
  %v193 = vunpack.c.l.b16 %v51
  %v194 = vunpack.c.l.b16 %v52
  %v195 = vunpack.c.l.b16 %v53
  %v196 = vunpack.c.l.b16 %v54
  %v197 = vunpack.c.l.b16 %v55
  %v198 = vunpack.c.l.b16 %v56
  %v199 = vunpack.c.l.b16 %v57
  %v200 = vunpack.c.l.b16 %v58
  %v201 = vunpack.c.l.b16 %v59
  %v202 = vunpack.c.l.b16 %v60
  %v203 = vunpack.c.l.b16 %v61
  %v204 = vunpack.c.l.b16 %v62
  %v205 = vunpack.c.l.b16 %v63
  %v206 = vunpack.c.l.b16 %v64
  %v207 = vunpack.c.l.b16 %v65
  %v208 = vunpack.c.l.b16 %v66
  %v209 = vunpack.c.l.b16 %v67
  %v210 = vunpack.c.l.b16 %v68
  %v211 = vunpack.c.l.b16 %v69
  %v212 = vunpack.c.l.b16 %v70
  %v213 = vunpack.c.l.b16 %v71
  %v214 = vunpack.c.l.b16 %v72
  %v215 = vunpack.c.l.b16 %v73
  %v216 = vunpack.c.l.b16 %v74
  %v217 = vunpack.c.l.b16 %v75
  %v218 = vunpack.c.l.b16 %v76
  %v219 = vunpack.c.l.b16 %v77
  %v220 = vunpack.c.l.b16 %v78
  %v221 = vpack.c.b16 %v158, %v157
  %v222 = vpack.c.b16 %v160, %v159
  %v223 = vpack.c.b16 %v162, %v161
  %v224 = vpack.c.b16 %v164, %v163
  %v225 = vpack.c.b16 %v166, %v165
  %v226 = vpack.c.b16 %v168, %v167
  %v227 = vpack.c.b16 %v170, %v169
  %v228 = vpack.c.b16 %v172, %v171
  %v229 = vpack.c.b16 %v174, %v173
  %v230 = vpack.c.b16 %v176, %v175
  %v231 = vpack.c.b16 %v178, %v177
  %v232 = vpack.c.b16 %v180, %v179
  %v233 = vpack.c.b16 %v182, %v181
  %v234 = vpack.c.b16 %v184, %v183
  %v235 = vpack.c.b16 %v186, %v185
  %v236 = vpack.c.b16 %v188, %v187
  %v237 = vpack.c.b16 %v190, %v189
  %v238 = vpack.c.b16 %v192, %v191
  %v239 = vpack.c.b16 %v194, %v193
  %v240 = vpack.c.b16 %v196, %v195
  %v241 = vpack.c.b16 %v198, %v197
  %v242 = vpack.c.b16 %v200, %v199
  %v243 = vpack.c.b16 %v202, %v201
  %v244 = vpack.c.b16 %v204, %v203
  %v245 = vpack.c.b16 %v206, %v205
  %v246 = vpack.c.b16 %v208, %v207
  %v247 = vpack.c.b16 %v210, %v209
  %v248 = vpack.c.b16 %v212, %v211
  %v249 = vpack.c.b16 %v214, %v213
  %v250 = vpack.c.b16 %v216, %v215
  %v251 = vpack.c.b16 %v218, %v217
  %v252 = vpack.c.b16 %v220, %v219
  %v260 = vunpack.c.l.b16 %v79
  %v261 = vunpack.c.l.b16 %v80
  %v262 = vunpack.c.l.b16 %v81
  %v263 = vunpack.c.l.b16 %v82
  %v264 = vunpack.c.l.b16 %v83
  %v265 = vunpack.c.l.b16 %v84
  %v266 = vunpack.c.l.b16 %v85
  %v267 = vpack.c.b16 %v261, %v260
  %v268 = vpack.c.b16 %v263, %v262
  %v269 = vpack.c.b16 %v265, %v264
  %v270 = vpack.c.b16 %v266, %v266
  %vm274 = vcmask 457728
  %v276 = vsel %vm274, %v221, 0
  %v279 = vsel %vm274, %v222, 0
  %v282 = vsel %vm274, %v223, 0
  %v285 = vsel %vm274, %v224, 0
  %v288 = vsel %vm274, %v225, 0
  %v291 = vsel %vm274, %v226, 0
  %v294 = vsel %vm274, %v227, 0
  %v297 = vsel %vm274, %v228, 0
  %v300 = vsel %vm274, %v229, 0
  %v303 = vsel %vm274, %v230, 0
  %v306 = vsel %vm274, %v231, 0
  %v309 = vsel %vm274, %v232, 0
  %v312 = vsel %vm274, %v233, 0
  %v315 = vsel %vm274, %v234, 0
  %v318 = vsel %vm274, %v235, 0
  %v321 = vsel %vm274, %v236, 0
  %v324 = vsel %vm274, %v237, 0
  %v327 = vsel %vm274, %v238, 0
  %v330 = vsel %vm274, %v239, 0
  %v333 = vsel %vm274, %v240, 0
  %v336 = vsel %vm274, %v241, 0
  %v339 = vsel %vm274, %v242, 0
  %v342 = vsel %vm274, %v243, 0
  %v345 = vsel %vm274, %v244, 0
  %v348 = vsel %vm274, %v245, 0
  %v351 = vsel %vm274, %v246, 0
  %v354 = vsel %vm274, %v247, 0
  %v357 = vsel %vm274, %v248, 0
  %v360 = vsel %vm274, %v249, 0
  %v363 = vsel %vm274, %v250, 0
  %v366 = vsel %vm274, %v251, 0
  %v369 = vsel %vm274, %v252, 0
  %vm371 = vcmask 1043456
  %v373 = vsel %vm371, %v270, 0
  %375 = vmatprep.subr.bf16.mxu0 0
  %376 = vmatpush1.bf16.msra.mxu0 %v267
  %377 = vmatprep.subr.bf16.mxu0 0
  %378 = vmatpush1.bf16.msra.mxu0 %v268
  %379 = vmatprep.subr.bf16.mxu0 0
  %380 = vmatpush1.bf16.msra.mxu0 %v269
  %381 = vmatprep.subr.bf16.mxu0 0
  %382 = vmatpush1.bf16.msra.mxu0 %v373
  %383 = vmatprep.subr.bf16.mxu0 0
  %384 = vmatpush1.bf16.msra.mxu0 0
  %385 = vmatprep.subr.bf16.mxu0 0
  %386 = vmatpush1.bf16.msra.mxu0 0
  %387 = vmatprep.subr.bf16.mxu0 0
  %388 = vmatpush1.bf16.msra.mxu0 0
  %389 = vmatprep.subr.bf16.mxu0 0
  %390 = vmatpush1.bf16.msra.mxu0 0
  %391 = vmatprep.subr.bf16.mxu0 0
  %392 = vmatpush1.bf16.msra.mxu0 0
  %393 = vmatprep.subr.bf16.mxu0 0
  %394 = vmatpush1.bf16.msra.mxu0 0
  %395 = vmatprep.subr.bf16.mxu0 0
  %396 = vmatpush1.bf16.msra.mxu0 0
  %397 = vmatprep.subr.bf16.mxu0 0
  %398 = vmatpush1.bf16.msra.mxu0 0
  %399 = vmatprep.subr.bf16.mxu0 0
  %400 = vmatpush1.bf16.msra.mxu0 0
  %401 = vmatprep.subr.bf16.mxu0 0
  %402 = vmatpush1.bf16.msra.mxu0 0
  %403 = vmatprep.subr.bf16.mxu0 0
  %404 = vmatpush1.bf16.msra.mxu0 0
  %405 = vmatprep.subr.bf16.mxu0 0
  %406 = vmatpush1.bf16.msra.mxu0 0
  %407 = vmatprep.mubr.bf16.mxu0 0
  %408 = vmatmul.mubr.bf16.gmra.mrb[0].mxu0 %v276
  %v409 = vpop.f32.mrb[0].mxu0
  %v410 = vadd.f32 %v91, %v409
  %v411 = vpop.f32.mrb[0].mxu0
  %v412 = vpop.f32.mrb[0].mxu0
  %v413 = vadd.f32 %v91, %v412
  %v414 = vpop.f32.mrb[0].mxu0
  %415 = vmatprep.mubr.bf16.mxu0 0
  %416 = vmatmul.mubr.bf16.gmra.mrb[0].mxu0 %v279
  %v417 = vpop.f32.mrb[0].mxu0
  %v418 = vadd.f32 %v91, %v417
  %v419 = vpop.f32.mrb[0].mxu0
  %v420 = vpop.f32.mrb[0].mxu0
  %v421 = vadd.f32 %v91, %v420
  %v422 = vpop.f32.mrb[0].mxu0
  %423 = vmatprep.mubr.bf16.mxu0 0
  %424 = vmatmul.mubr.bf16.gmra.mrb[0].mxu0 %v282
  %v425 = vpop.f32.mrb[0].mxu0
  %v426 = vadd.f32 %v91, %v425
  %v427 = vpop.f32.mrb[0].mxu0
  %v428 = vpop.f32.mrb[0].mxu0
  %v429 = vadd.f32 %v91, %v428
  %v430 = vpop.f32.mrb[0].mxu0
  %431 = vmatprep.mubr.bf16.mxu0 0
  %432 = vmatmul.mubr.bf16.gmra.mrb[0].mxu0 %v285
  %v433 = vpop.f32.mrb[0].mxu0
  %v434 = vadd.f32 %v91, %v433
  %v435 = vpop.f32.mrb[0].mxu0
  %v436 = vpop.f32.mrb[0].mxu0
  %v437 = vadd.f32 %v91, %v436
  %v438 = vpop.f32.mrb[0].mxu0
  %439 = vmatprep.mubr.bf16.mxu0 0
  %440 = vmatmul.mubr.bf16.gmra.mrb[0].mxu0 %v288
  %v441 = vpop.f32.mrb[0].mxu0
  %v442 = vadd.f32 %v91, %v441
  %v443 = vpop.f32.mrb[0].mxu0
  %v444 = vpop.f32.mrb[0].mxu0
  %v445 = vadd.f32 %v91, %v444
  %v446 = vpop.f32.mrb[0].mxu0
  %447 = vmatprep.mubr.bf16.mxu0 0
  %448 = vmatmul.mubr.bf16.gmra.mrb[0].mxu0 %v291
  %v449 = vpop.f32.mrb[0].mxu0
  %v450 = vadd.f32 %v91, %v449
  %v451 = vpop.f32.mrb[0].mxu0
  %v452 = vpop.f32.mrb[0].mxu0
  %v453 = vadd.f32 %v91, %v452
  %v454 = vpop.f32.mrb[0].mxu0
  %455 = vmatprep.mubr.bf16.mxu0 0
  %456 = vmatmul.mubr.bf16.gmra.mrb[0].mxu0 %v294
  %v457 = vpop.f32.mrb[0].mxu0
  %v458 = vadd.f32 %v91, %v457
  %v459 = vpop.f32.mrb[0].mxu0
  %v460 = vpop.f32.mrb[0].mxu0
  %v461 = vadd.f32 %v91, %v460
  %v462 = vpop.f32.mrb[0].mxu0
  %463 = vmatprep.mubr.bf16.mxu0 0
  %464 = vmatmul.mubr.bf16.gmra.mrb[0].mxu0 %v297
  %v465 = vpop.f32.mrb[0].mxu0
  %v466 = vadd.f32 %v91, %v465
  %v467 = vpop.f32.mrb[0].mxu0
  %v468 = vpop.f32.mrb[0].mxu0
  %v469 = vadd.f32 %v91, %v468
  %v470 = vpop.f32.mrb[0].mxu0
  %471 = vmatprep.mubr.bf16.mxu0 0
  %472 = vmatmul.mubr.bf16.gmra.mrb[0].mxu0 %v300
  %v473 = vpop.f32.mrb[0].mxu0
  %v474 = vadd.f32 %v91, %v473
  %v475 = vpop.f32.mrb[0].mxu0
  %v476 = vpop.f32.mrb[0].mxu0
  %v477 = vadd.f32 %v91, %v476
  %v478 = vpop.f32.mrb[0].mxu0
  %479 = vmatprep.mubr.bf16.mxu0 0
  %480 = vmatmul.mubr.bf16.gmra.mrb[0].mxu0 %v303
  %v481 = vpop.f32.mrb[0].mxu0
  %v482 = vadd.f32 %v91, %v481
  %v483 = vpop.f32.mrb[0].mxu0
  %v484 = vpop.f32.mrb[0].mxu0
  %v485 = vadd.f32 %v91, %v484
  %v486 = vpop.f32.mrb[0].mxu0
  %487 = vmatprep.mubr.bf16.mxu0 0
  %488 = vmatmul.mubr.bf16.gmra.mrb[0].mxu0 %v306
  %v489 = vpop.f32.mrb[0].mxu0
  %v490 = vadd.f32 %v91, %v489
  %v491 = vpop.f32.mrb[0].mxu0
  %v492 = vpop.f32.mrb[0].mxu0
  %v493 = vadd.f32 %v91, %v492
  %v494 = vpop.f32.mrb[0].mxu0
  %495 = vmatprep.mubr.bf16.mxu0 0
  %496 = vmatmul.mubr.bf16.gmra.mrb[0].mxu0 %v309
  %v497 = vpop.f32.mrb[0].mxu0
  %v498 = vadd.f32 %v91, %v497
  %v499 = vpop.f32.mrb[0].mxu0
  %v500 = vpop.f32.mrb[0].mxu0
  %v501 = vadd.f32 %v91, %v500
  %v502 = vpop.f32.mrb[0].mxu0
  %503 = vmatprep.mubr.bf16.mxu0 0
  %504 = vmatmul.mubr.bf16.gmra.mrb[0].mxu0 %v312
  %v505 = vpop.f32.mrb[0].mxu0
  %v506 = vadd.f32 %v91, %v505
  %v507 = vpop.f32.mrb[0].mxu0
  %v508 = vpop.f32.mrb[0].mxu0
  %v509 = vadd.f32 %v91, %v508
  %v510 = vpop.f32.mrb[0].mxu0
  %511 = vmatprep.mubr.bf16.mxu0 0
  %512 = vmatmul.mubr.bf16.gmra.mrb[0].mxu0 %v315
  %v513 = vpop.f32.mrb[0].mxu0
  %v514 = vadd.f32 %v91, %v513
  %v515 = vpop.f32.mrb[0].mxu0
  %v516 = vpop.f32.mrb[0].mxu0
  %v517 = vadd.f32 %v91, %v516
  %v518 = vpop.f32.mrb[0].mxu0
  %519 = vmatprep.mubr.bf16.mxu0 0
  %520 = vmatmul.mubr.bf16.gmra.mrb[0].mxu0 %v318
  %v521 = vpop.f32.mrb[0].mxu0
  %v522 = vadd.f32 %v91, %v521
  %v523 = vpop.f32.mrb[0].mxu0
  %v524 = vpop.f32.mrb[0].mxu0
  %v525 = vadd.f32 %v91, %v524
  %v526 = vpop.f32.mrb[0].mxu0
  %527 = vmatprep.mubr.bf16.mxu0 0
  %528 = vmatmul.mubr.bf16.gmra.mrb[0].mxu0 %v321
  %v529 = vpop.f32.mrb[0].mxu0
  %v530 = vadd.f32 %v91, %v529
  %v531 = vpop.f32.mrb[0].mxu0
  %v532 = vpop.f32.mrb[0].mxu0
  %v533 = vadd.f32 %v91, %v532
  %v534 = vpop.f32.mrb[0].mxu0
  %535 = vmatprep.mubr.bf16.mxu0 0
  %536 = vmatmul.mubr.bf16.gmra.mrb[0].mxu0 %v324
  %v537 = vpop.f32.mrb[0].mxu0
  %v538 = vadd.f32 %v91, %v537
  %v539 = vpop.f32.mrb[0].mxu0
  %v540 = vpop.f32.mrb[0].mxu0
  %v541 = vadd.f32 %v91, %v540
  %v542 = vpop.f32.mrb[0].mxu0
  %543 = vmatprep.mubr.bf16.mxu0 0
  %544 = vmatmul.mubr.bf16.gmra.mrb[0].mxu0 %v327
  %v545 = vpop.f32.mrb[0].mxu0
  %v546 = vadd.f32 %v91, %v545
  %v547 = vpop.f32.mrb[0].mxu0
  %v548 = vpop.f32.mrb[0].mxu0
  %v549 = vadd.f32 %v91, %v548
  %v550 = vpop.f32.mrb[0].mxu0
  %551 = vmatprep.mubr.bf16.mxu0 0
  %552 = vmatmul.mubr.bf16.gmra.mrb[0].mxu0 %v330
  %v553 = vpop.f32.mrb[0].mxu0
  %v554 = vadd.f32 %v91, %v553
  %v555 = vpop.f32.mrb[0].mxu0
  %v556 = vpop.f32.mrb[0].mxu0
  %v557 = vadd.f32 %v91, %v556
  %v558 = vpop.f32.mrb[0].mxu0
  %559 = vmatprep.mubr.bf16.mxu0 0
  %560 = vmatmul.mubr.bf16.gmra.mrb[0].mxu0 %v333
  %v561 = vpop.f32.mrb[0].mxu0
  %v562 = vadd.f32 %v91, %v561
  %v563 = vpop.f32.mrb[0].mxu0
  %v564 = vpop.f32.mrb[0].mxu0
  %v565 = vadd.f32 %v91, %v564
  %v566 = vpop.f32.mrb[0].mxu0
  %567 = vmatprep.mubr.bf16.mxu0 0
  %568 = vmatmul.mubr.bf16.gmra.mrb[0].mxu0 %v336
  %v569 = vpop.f32.mrb[0].mxu0
  %v570 = vadd.f32 %v91, %v569
  %v571 = vpop.f32.mrb[0].mxu0
  %v572 = vpop.f32.mrb[0].mxu0
  %v573 = vadd.f32 %v91, %v572
  %v574 = vpop.f32.mrb[0].mxu0
  %575 = vmatprep.mubr.bf16.mxu0 0
  %576 = vmatmul.mubr.bf16.gmra.mrb[0].mxu0 %v339
  %v577 = vpop.f32.mrb[0].mxu0
  %v578 = vadd.f32 %v91, %v577
  %v579 = vpop.f32.mrb[0].mxu0
  %v580 = vpop.f32.mrb[0].mxu0
  %v581 = vadd.f32 %v91, %v580
  %v582 = vpop.f32.mrb[0].mxu0
  %583 = vmatprep.mubr.bf16.mxu0 0
  %584 = vmatmul.mubr.bf16.gmra.mrb[0].mxu0 %v342
  %v585 = vpop.f32.mrb[0].mxu0
  %v586 = vadd.f32 %v91, %v585
  %v587 = vpop.f32.mrb[0].mxu0
  %v588 = vpop.f32.mrb[0].mxu0
  %v589 = vadd.f32 %v91, %v588
  %v590 = vpop.f32.mrb[0].mxu0
  %591 = vmatprep.mubr.bf16.mxu0 0
  %592 = vmatmul.mubr.bf16.gmra.mrb[0].mxu0 %v345
  %v593 = vpop.f32.mrb[0].mxu0
  %v594 = vadd.f32 %v91, %v593
  %v595 = vpop.f32.mrb[0].mxu0
  %v596 = vpop.f32.mrb[0].mxu0
  %v597 = vadd.f32 %v91, %v596
  %v598 = vpop.f32.mrb[0].mxu0
  %599 = vmatprep.mubr.bf16.mxu0 0
  %600 = vmatmul.mubr.bf16.gmra.mrb[0].mxu0 %v348
  %v601 = vpop.f32.mrb[0].mxu0
  %v602 = vadd.f32 %v91, %v601
  %v603 = vpop.f32.mrb[0].mxu0
  %v604 = vpop.f32.mrb[0].mxu0
  %v605 = vadd.f32 %v91, %v604
  %v606 = vpop.f32.mrb[0].mxu0
  %607 = vmatprep.mubr.bf16.mxu0 0
  %608 = vmatmul.mubr.bf16.gmra.mrb[0].mxu0 %v351
  %v609 = vpop.f32.mrb[0].mxu0
  %v610 = vadd.f32 %v91, %v609
  %v611 = vpop.f32.mrb[0].mxu0
  %v612 = vpop.f32.mrb[0].mxu0
  %v613 = vadd.f32 %v91, %v612
  %v614 = vpop.f32.mrb[0].mxu0
  %615 = vmatprep.mubr.bf16.mxu0 0
  %616 = vmatmul.mubr.bf16.gmra.mrb[0].mxu0 %v354
  %v617 = vpop.f32.mrb[0].mxu0
  %v618 = vadd.f32 %v91, %v617
  %v619 = vpop.f32.mrb[0].mxu0
  %v620 = vpop.f32.mrb[0].mxu0
  %v621 = vadd.f32 %v91, %v620
  %v622 = vpop.f32.mrb[0].mxu0
  %623 = vmatprep.mubr.bf16.mxu0 0
  %624 = vmatmul.mubr.bf16.gmra.mrb[0].mxu0 %v357
  %v625 = vpop.f32.mrb[0].mxu0
  %v626 = vadd.f32 %v91, %v625
  %v627 = vpop.f32.mrb[0].mxu0
  %v628 = vpop.f32.mrb[0].mxu0
  %v629 = vadd.f32 %v91, %v628
  %v630 = vpop.f32.mrb[0].mxu0
  %631 = vmatprep.mubr.bf16.mxu0 0
  %632 = vmatmul.mubr.bf16.gmra.mrb[0].mxu0 %v360
  %v633 = vpop.f32.mrb[0].mxu0
  %v634 = vadd.f32 %v91, %v633
  %v635 = vpop.f32.mrb[0].mxu0
  %v636 = vpop.f32.mrb[0].mxu0
  %v637 = vadd.f32 %v91, %v636
  %v638 = vpop.f32.mrb[0].mxu0
  %639 = vmatprep.mubr.bf16.mxu0 0
  %640 = vmatmul.mubr.bf16.gmra.mrb[0].mxu0 %v363
  %v641 = vpop.f32.mrb[0].mxu0
  %v642 = vadd.f32 %v91, %v641
  %v643 = vpop.f32.mrb[0].mxu0
  %v644 = vpop.f32.mrb[0].mxu0
  %v645 = vadd.f32 %v91, %v644
  %v646 = vpop.f32.mrb[0].mxu0
  %647 = vmatprep.mubr.bf16.mxu0 0
  %648 = vmatmul.mubr.bf16.gmra.mrb[0].mxu0 %v366
  %v649 = vpop.f32.mrb[0].mxu0
  %v650 = vadd.f32 %v91, %v649
  %v651 = vpop.f32.mrb[0].mxu0
  %v652 = vpop.f32.mrb[0].mxu0
  %v653 = vadd.f32 %v91, %v652
  %v654 = vpop.f32.mrb[0].mxu0
  %655 = vmatprep.mubr.bf16.mxu0 0
  %656 = vmatmul.mubr.bf16.gmra.mrb[0].mxu0 %v369
  %v657 = vpop.f32.mrb[0].mxu0
  %v658 = vadd.f32 %v91, %v657
  %v659 = vpop.f32.mrb[0].mxu0
  %v660 = vpop.f32.mrb[0].mxu0
  %v661 = vadd.f32 %v91, %v660
  %v662 = vpop.f32.mrb[0].mxu0
  %663 = vdwg.mxu0
  %v664 = vmax.f32 %v410, 0.0
  %v665 = vmax.f32 %v413, 0.0
  %v666 = vmax.f32 %v418, 0.0
  %v667 = vmax.f32 %v421, 0.0
  %v668 = vmax.f32 %v426, 0.0
  %v669 = vmax.f32 %v429, 0.0
  %v670 = vmax.f32 %v434, 0.0
  %v671 = vmax.f32 %v437, 0.0
  %v672 = vmax.f32 %v442, 0.0
  %v673 = vmax.f32 %v445, 0.0
  %v674 = vmax.f32 %v450, 0.0
  %v675 = vmax.f32 %v453, 0.0
  %v676 = vmax.f32 %v458, 0.0
  %v677 = vmax.f32 %v461, 0.0
  %v678 = vmax.f32 %v466, 0.0
  %v679 = vmax.f32 %v469, 0.0
  %v680 = vmax.f32 %v474, 0.0
  %v681 = vmax.f32 %v477, 0.0
  %v682 = vmax.f32 %v482, 0.0
  %v683 = vmax.f32 %v485, 0.0
  %v684 = vmax.f32 %v490, 0.0
  %v685 = vmax.f32 %v493, 0.0
  %v686 = vmax.f32 %v498, 0.0
  %v687 = vmax.f32 %v501, 0.0
  %v688 = vmax.f32 %v506, 0.0
  %v689 = vmax.f32 %v509, 0.0
  %v690 = vmax.f32 %v514, 0.0
  %v691 = vmax.f32 %v517, 0.0
  %v692 = vmax.f32 %v522, 0.0
  %v693 = vmax.f32 %v525, 0.0
  %v694 = vmax.f32 %v530, 0.0
  %v695 = vmax.f32 %v533, 0.0
  %v696 = vmax.f32 %v538, 0.0
  %v697 = vmax.f32 %v541, 0.0
  %v698 = vmax.f32 %v546, 0.0
  %v699 = vmax.f32 %v549, 0.0
  %v700 = vmax.f32 %v554, 0.0
  %v701 = vmax.f32 %v557, 0.0
  %v702 = vmax.f32 %v562, 0.0
  %v703 = vmax.f32 %v565, 0.0
  %v704 = vmax.f32 %v570, 0.0
  %v705 = vmax.f32 %v573, 0.0
  %v706 = vmax.f32 %v578, 0.0
  %v707 = vmax.f32 %v581, 0.0
  %v708 = vmax.f32 %v586, 0.0
  %v709 = vmax.f32 %v589, 0.0
  %v710 = vmax.f32 %v594, 0.0
  %v711 = vmax.f32 %v597, 0.0
  %v712 = vmax.f32 %v602, 0.0
  %v713 = vmax.f32 %v605, 0.0
  %v714 = vmax.f32 %v610, 0.0
  %v715 = vmax.f32 %v613, 0.0
  %v716 = vmax.f32 %v618, 0.0
  %v717 = vmax.f32 %v621, 0.0
  %v718 = vmax.f32 %v626, 0.0
  %v719 = vmax.f32 %v629, 0.0
  %v720 = vmax.f32 %v634, 0.0
  %v721 = vmax.f32 %v637, 0.0
  %v722 = vmax.f32 %v642, 0.0
  %v723 = vmax.f32 %v645, 0.0
  %v724 = vmax.f32 %v650, 0.0
  %v725 = vmax.f32 %v653, 0.0
  %v726 = vmax.f32 %v658, 0.0
  %v727 = vmax.f32 %v661, 0.0
  %728 = vst [vmem:[%s3] sm:$0xff] %v664
  %729 = vst [vmem:[%s3 + $0x8] sm:$0xff] %v665
  %730 = vst [vmem:[%s3 + $0x10] sm:$0xff] %v666
  %731 = vst [vmem:[%s3 + $0x18] sm:$0xff] %v667
  %732 = vst [vmem:[%s3 + $0x20] sm:$0xff] %v668
  %733 = vst [vmem:[%s3 + $0x28] sm:$0xff] %v669
  %734 = vst [vmem:[%s3 + $0x30] sm:$0xff] %v670
  %735 = vst [vmem:[%s3 + $0x38] sm:$0xff] %v671
  %736 = vst [vmem:[%s3 + $0x40] sm:$0xff] %v672
  %737 = vst [vmem:[%s3 + $0x48] sm:$0xff] %v673
  %738 = vst [vmem:[%s3 + $0x50] sm:$0xff] %v674
  %739 = vst [vmem:[%s3 + $0x58] sm:$0xff] %v675
  %740 = vst [vmem:[%s3 + $0x60] sm:$0xff] %v676
  %741 = vst [vmem:[%s3 + $0x68] sm:$0xff] %v677
  %742 = vst [vmem:[%s3 + $0x70] sm:$0xff] %v678
  %743 = vst [vmem:[%s3 + $0x78] sm:$0xff] %v679
  %744 = vst [vmem:[%s3 + $0x80] sm:$0xff] %v680
  %745 = vst [vmem:[%s3 + $0x88] sm:$0xff] %v681
  %746 = vst [vmem:[%s3 + $0x90] sm:$0xff] %v682
  %747 = vst [vmem:[%s3 + $0x98] sm:$0xff] %v683
  %748 = vst [vmem:[%s3 + $0xa0] sm:$0xff] %v684
  %749 = vst [vmem:[%s3 + $0xa8] sm:$0xff] %v685
  %750 = vst [vmem:[%s3 + $0xb0] sm:$0xff] %v686
  %751 = vst [vmem:[%s3 + $0xb8] sm:$0xff] %v687
  %752 = vst [vmem:[%s3 + $0xc0] sm:$0xff] %v688
  %753 = vst [vmem:[%s3 + $0xc8] sm:$0xff] %v689
  %754 = vst [vmem:[%s3 + $0xd0] sm:$0xff] %v690
  %755 = vst [vmem:[%s3 + $0xd8] sm:$0xff] %v691
  %756 = vst [vmem:[%s3 + $0xe0] sm:$0xff] %v692
  %757 = vst [vmem:[%s3 + $0xe8] sm:$0xff] %v693
  %758 = vst [vmem:[%s3 + $0xf0] sm:$0xff] %v694
  %759 = vst [vmem:[%s3 + $0xf8] sm:$0xff] %v695
  %760 = vst [vmem:[%s3 + $0x100] sm:$0xff] %v696
  %761 = vst [vmem:[%s3 + $0x108] sm:$0xff] %v697
  %762 = vst [vmem:[%s3 + $0x110] sm:$0xff] %v698
  %763 = vst [vmem:[%s3 + $0x118] sm:$0xff] %v699
  %764 = vst [vmem:[%s3 + $0x120] sm:$0xff] %v700
  %765 = vst [vmem:[%s3 + $0x128] sm:$0xff] %v701
  %766 = vst [vmem:[%s3 + $0x130] sm:$0xff] %v702
  %767 = vst [vmem:[%s3 + $0x138] sm:$0xff] %v703
  %768 = vst [vmem:[%s3 + $0x140] sm:$0xff] %v704
  %769 = vst [vmem:[%s3 + $0x148] sm:$0xff] %v705
  %770 = vst [vmem:[%s3 + $0x150] sm:$0xff] %v706
  %771 = vst [vmem:[%s3 + $0x158] sm:$0xff] %v707
  %772 = vst [vmem:[%s3 + $0x160] sm:$0xff] %v708
  %773 = vst [vmem:[%s3 + $0x168] sm:$0xff] %v709
  %774 = vst [vmem:[%s3 + $0x170] sm:$0xff] %v710
  %775 = vst [vmem:[%s3 + $0x178] sm:$0xff] %v711
  %776 = vst [vmem:[%s3 + $0x180] sm:$0xff] %v712
  %777 = vst [vmem:[%s3 + $0x188] sm:$0xff] %v713
  %778 = vst [vmem:[%s3 + $0x190] sm:$0xff] %v714
  %779 = vst [vmem:[%s3 + $0x198] sm:$0xff] %v715
  %780 = vst [vmem:[%s3 + $0x1a0] sm:$0xff] %v716
  %781 = vst [vmem:[%s3 + $0x1a8] sm:$0xff] %v717
  %782 = vst [vmem:[%s3 + $0x1b0] sm:$0xff] %v718
  %783 = vst [vmem:[%s3 + $0x1b8] sm:$0xff] %v719
  %784 = vst [vmem:[%s3 + $0x1c0] sm:$0xff] %v720
  %785 = vst [vmem:[%s3 + $0x1c8] sm:$0xff] %v721
  %786 = vst [vmem:[%s3 + $0x1d0] sm:$0xff] %v722
  %787 = vst [vmem:[%s3 + $0x1d8] sm:$0xff] %v723
  %788 = vst [vmem:[%s3 + $0x1e0] sm:$0xff] %v724
  %789 = vst [vmem:[%s3 + $0x1e8] sm:$0xff] %v725
  %790 = vst [vmem:[%s3 + $0x1f0] sm:$0xff] %v726
  %791 = vst [vmem:[%s3 + $0x1f8] sm:$0xff] %v727
  // Predicated region
  $region14: #{inception_c_forward.12} parent=0 // pred_check
    _
  $region15: #{inception_c_forward.12} parent=0 // pred_check_branch
    %793 = sbr.rel (0) target = $region17
  $region16: #{inception_c_forward.12} parent=0 // pred_region
    _
  $region17: #{inception_c_forward.12} parent=0 // pred_fallthru
    _
  // Predicated region
  $region18: #{inception_c_forward.12} parent=0 // pred_check
    _
  $region19: #{inception_c_forward.12} parent=0 // pred_check_branch
    %795 = sbr.rel (0) target = $region21
  $region20: #{inception_c_forward.12} parent=0 // pred_region
    _
  $region21: #{inception_c_forward.12} parent=0 // pred_fallthru
    _

// kernel: inception_c_forward.13
$region0: #{inception_c_forward.13}
  #allocation0 [shape = 'u32[]', space=smem, size = 0x4, offset = 0x4, fixed_abs, tag = 'smem constant byte address 0x4 - core index']
  #allocation1 [shape = 'u32[144,128]{1,0:T(1,128)}', space=vmem, size = 0x12000, scoped, tag = 'internal scratch']
  %s0 = inlined_call_operand.vmem [shape: bf16[512,56], index: 0, kind: input, shape index: {}]
  %s1 = inlined_call_operand.vmem [shape: bf16[56,256], index: 1, kind: input, shape index: {}]
  %s2 = inlined_call_operand.vmem [shape: f32[1,256], index: 2, kind: input, shape index: {}]
  %s3 = inlined_call_operand.vmem [shape: f32[512,256], index: 3, kind: output, shape index: {}]
  %s4 = sld [smem:[#allocation0]]
  $region120: #{inception_c_forward.13} parent=0
    _
  %s6 = ssub.s32 1, %s4
  %s7 = scalar_select 0, %s6, %s4
  $region1: #{inception_c_forward.13} parent=0
    #allocation2 [shape = 'u8[28672]{0}', space=vmem, size = 0x7000, scoped, tag = 'input window, operand 1']
    #allocation3 [shape = 'u8[524288]{0}', space=vmem, size = 0x80000, scoped, tag = 'output window, operand 0']
    loop: start=0, step=1, limit=4
    $region2: #{inception_c_forward.13} parent=1 // loop_pre_header
      _
    $region3: #{inception_c_forward.13} parent=1 // loop_header
      %s9 = sphi 0, %s13
      %p10 = scmp.ge.s32.totalorder %s9, 4
      %s16 = sphi 0, %s28
      %s17 = sphi 0, %s24
      %s18 = sphi 0, %s16
      %s19 = sphi 0, %s17
      %s20 = sphi 0, %s18
      %s21 = sphi 0, %s19
      %s31 = sphi 0, %s33
      %s34 = sphi 0, %s31
      %s35 = sphi 0, %s34
      %s51 = sphi 0, %s35
      %s57 = sphi 0, %s59
      %s60 = sphi 0, %s57
      %s61 = sphi 0, %s60
      %s77 = sphi 0, %s61
      %s83 = sphi 0, %s85
      %s86 = sphi 0, %s83
      %s87 = sphi 0, %s86
      %s103 = sphi 0, %s87
      %s111 = sphi 0, %s113
      %s114 = sphi 0, %s111
      %s115 = sphi 0, %s114
      %s131 = sphi 0, %s115
    $region4: #{inception_c_forward.13} parent=1 // loop_header_branch
      %12 = sbr.rel (%p10) target = $region8
    $region5: #{inception_c_forward.13} parent=1 // loop_body
      %s14 = ssub.s32 %s9, 1
      %s15 = ssub.s32 %s9, 2
      %s22 = sadd.s32 1, %s17
      %p23 = scmp.ge.s32.totalorder %s22, 2
      %s24 = scalar_select %p23, 0, %s22
      %s25 = sadd.s32 1, %s16
      %s26 = scalar_select %p23, %s25, %s16
      %p27 = scmp.ge.s32.totalorder %s26, 1
      %s28 = scalar_select %p27, 0, %s26
      %s29 = ssub.s32 %s16, %s28
      %p30 = scmp.eq.s32.totalorder %s29, 0
      %s32 = sadd.s32 %s31, 1
      %s33 = scalar_select %p30, %s31, %s32
      %p36 = pneg %p30
      %p37 = scmp.eq.s32.totalorder %s9, 1
      %p38 = por %p36, %p37
      %p39 = scmp.ne.s32.totalorder %s31, %s34
      %p40 = scmp.eq.s32.totalorder %s9, 0
      %p41 = por %p39, %p40
      %p42 = scmp.ne.s32.totalorder %s31, %s34
      %p43 = scmp.eq.s32.totalorder %s14, 1
      %p44 = por %p42, %p43
      %p45 = scmp.ne.s32.totalorder %s34, %s35
      %p46 = scmp.eq.s32.totalorder %s14, 0
      %p47 = por %p45, %p46
      %p48 = scmp.ne.s32.totalorder %s34, %s35
      %p49 = scmp.eq.s32.totalorder %s15, 1
      %p50 = por %p48, %p49
      %p52 = scmp.ne.s32.totalorder %s35, %s51
      %p53 = scmp.eq.s32.totalorder %s15, 0
      %p54 = por %p52, %p53
      %s55 = ssub.s32 %s17, %s24
      %p56 = scmp.eq.s32.totalorder %s55, 0
      %s58 = sadd.s32 %s57, 1
      %s59 = scalar_select %p56, %s57, %s58
      %p62 = pneg %p56
      %p63 = scmp.eq.s32.totalorder %s9, 1
      %p64 = por %p62, %p63
      %p65 = scmp.ne.s32.totalorder %s57, %s60
      %p66 = scmp.eq.s32.totalorder %s9, 0
      %p67 = por %p65, %p66
      %p68 = scmp.ne.s32.totalorder %s57, %s60
      %p69 = scmp.eq.s32.totalorder %s14, 1
      %p70 = por %p68, %p69
      %p71 = scmp.ne.s32.totalorder %s60, %s61
      %p72 = scmp.eq.s32.totalorder %s14, 0
      %p73 = por %p71, %p72
      %p74 = scmp.ne.s32.totalorder %s60, %s61
      %p75 = scmp.eq.s32.totalorder %s15, 1
      %p76 = por %p74, %p75
      %p78 = scmp.ne.s32.totalorder %s61, %s77
      %p79 = scmp.eq.s32.totalorder %s15, 0
      %p80 = por %p78, %p79
      %s81 = ssub.s32 %s17, %s24
      %p82 = scmp.eq.s32.totalorder %s81, 0
      %s84 = sadd.s32 %s83, 1
      %s85 = scalar_select %p82, %s83, %s84
      %p88 = pneg %p82
      %p89 = scmp.eq.s32.totalorder %s9, 1
      %p90 = por %p88, %p89
      %p91 = scmp.ne.s32.totalorder %s83, %s86
      %p92 = scmp.eq.s32.totalorder %s9, 0
      %p93 = por %p91, %p92
      %p94 = scmp.ne.s32.totalorder %s83, %s86
      %p95 = scmp.eq.s32.totalorder %s14, 1
      %p96 = por %p94, %p95
      %p97 = scmp.ne.s32.totalorder %s86, %s87
      %p98 = scmp.eq.s32.totalorder %s14, 0
      %p99 = por %p97, %p98
      %p100 = scmp.ne.s32.totalorder %s86, %s87
      %p101 = scmp.eq.s32.totalorder %s15, 1
      %p102 = por %p100, %p101
      %p104 = scmp.ne.s32.totalorder %s87, %s103
      %p105 = scmp.eq.s32.totalorder %s15, 0
      %p106 = por %p104, %p105
      %s107 = ssub.s32 %s16, %s28
      %s108 = ssub.s32 %s17, %s24
      %s109 = sor.u32 %s107, %s108
      %p110 = scmp.eq.s32.totalorder %s109, 0
      %s112 = sadd.s32 %s111, 1
      %s113 = scalar_select %p110, %s111, %s112
      %p116 = pneg %p110
      %p117 = scmp.eq.s32.totalorder %s9, 1
      %p118 = por %p116, %p117
      %p119 = scmp.ne.s32.totalorder %s111, %s114
      %p120 = scmp.eq.s32.totalorder %s9, 0
      %p121 = por %p119, %p120
      %p122 = scmp.ne.s32.totalorder %s111, %s114
      %p123 = scmp.eq.s32.totalorder %s14, 1
      %p124 = por %p122, %p123
      %p125 = scmp.ne.s32.totalorder %s114, %s115
      %p126 = scmp.eq.s32.totalorder %s14, 0
      %p127 = por %p125, %p126
      %p128 = scmp.ne.s32.totalorder %s114, %s115
      %p129 = scmp.eq.s32.totalorder %s15, 1
      %p130 = por %p128, %p129
      %p132 = scmp.ne.s32.totalorder %s115, %s131
      %p133 = scmp.eq.s32.totalorder %s15, 0
      %p134 = por %p132, %p133
      %p135 = scmp.le.s32.totalorder 1, %s9
      %p136 = scmp.lt.s32.totalorder %s9, 3
      %p137 = pnand %p135, %p136
      %p138 = pneg %p137
      // Predicated region
      $region9: #{inception_c_forward.13} parent=5 // pred_check
        _
      $region10: #{inception_c_forward.13} parent=5 // pred_check_branch
        %140 = sbr.rel (%p137) target = $region12
      $region11: #{inception_c_forward.13} parent=5 // pred_region
        %s141 = ssub.s32 %s9, 1
        // Predicated region
        $region13: #{inception_c_forward.13} parent=11 // pred_check
          %p142 = pneg %p47
        $region14: #{inception_c_forward.13} parent=11 // pred_check_branch
          %144 = sbr.rel (%p142) target = $region16
        $region15: #{inception_c_forward.13} parent=11 // pred_region
          %s145 = smul.u32 64, %s18
          %p146 = scmp.lt.s32.totalorder %s145, 63
          %s147 = scalar_select %p146, %s145, 63
          %s148 = smul.addr %s147, 4
          %s149 = scalar_lea.vmem %s0, %s148
          %s150 = smul.u32 64, %s18
        $region16: #{inception_c_forward.13} parent=11 // pred_fallthru
          _
      $region12: #{inception_c_forward.13} parent=5 // pred_fallthru
        _
      %p151 = scmp.lt.s32.totalorder %s9, 2
      // Predicated region
      $region17: #{inception_c_forward.13} parent=5 // pred_check
        %p152 = pneg %p151
      $region18: #{inception_c_forward.13} parent=5 // pred_check_branch
        %154 = sbr.rel (%p152) target = $region20
      $region19: #{inception_c_forward.13} parent=5 // pred_region
        // Predicated region
        $region21: #{inception_c_forward.13} parent=19 // pred_check
          %p155 = pneg %p67
        $region22: #{inception_c_forward.13} parent=19 // pred_check_branch
          %157 = sbr.rel (%p155) target = $region24
        $region23: #{inception_c_forward.13} parent=19 // pred_region
          %s158 = sand.u32 %s57, 1
          %s159 = sand.u32 %s57, 1
          %s160 = smul.addr %s159, 28
          %s161 = scalar_lea.vmem [#allocation2], %s160
          %s162 = smul.addr %s17, 4
          %s163 = scalar_lea.vmem %s1, %s162
          // Predicated region
          $region25: #{inception_c_forward.13} parent=23 // pred_check
            _
          $region26: #{inception_c_forward.13} parent=23 // pred_check_branch
            %165 = sbr.rel (0) target = $region28
          $region27: #{inception_c_forward.13} parent=23 // pred_region
            // Predicated region
            $region29: #{inception_c_forward.13} parent=27 // pred_check
              _
            $region30: #{inception_c_forward.13} parent=27 // pred_check_branch
              %167 = sbr.rel target = $region32
            $region31: #{inception_c_forward.13} parent=27 // pred_region
              // Predicated region
              $region44: #{inception_c_forward.13} parent=31 // pred_check
                _
              $region45: #{inception_c_forward.13} parent=31 // pred_check_branch
                %194 = sbr.rel (0) target = $region47
              $region46: #{inception_c_forward.13} parent=31 // pred_region
                loop: start=0, step=1, limit=1
                $region48: #{inception_c_forward.13} parent=46 // loop_pre_header
                  _
                $region49: #{inception_c_forward.13} parent=46 // loop_header
                  %s196 = sphi 0, %s200
                  %p197 = scmp.ge.s32.totalorder %s196, 1
                  %s201 = sphi %s163, %s163
                  %s202 = sphi %s161, %s161
                $region50: #{inception_c_forward.13} parent=46 // loop_header_branch
                  %199 = sbr.rel (%p197) target = $region54
                $region51: #{inception_c_forward.13} parent=46 // loop_body
                  _
                $region52: #{inception_c_forward.13} parent=46 // loop_footer
                  %s200 = sadd.s32 1, %s196
                $region53: #{inception_c_forward.13} parent=46 // loop_footer_branch
                  %195 = sbr.rel target = $region49
                $region54: #{inception_c_forward.13} parent=46 // loop_exit
                  _
                loop: start=0, step=1, limit=1
                $region55: #{inception_c_forward.13} parent=46 // loop_pre_header
                  _
                $region56: #{inception_c_forward.13} parent=46 // loop_header
                  %s205 = sphi 0, %s209
                  %p206 = scmp.ge.s32.totalorder %s205, 1
                  %s210 = sphi %s163, %s163
                  %s211 = sphi %s161, %s161
                $region57: #{inception_c_forward.13} parent=46 // loop_header_branch
                  %208 = sbr.rel (%p206) target = $region61
                $region58: #{inception_c_forward.13} parent=46 // loop_body
                  %v212 = vld [vmem:[%s210] sm:$0xf]
                  %213 = vst [vmem:[%s211] sm:$0xf] %v212
                  %v214 = vld [vmem:[%s210 + $0x8] sm:$0xf]
                  %215 = vst [vmem:[%s211 + $0x4] sm:$0xf] %v214
                  %v216 = vld [vmem:[%s210 + $0x10] sm:$0xf]
                  %217 = vst [vmem:[%s211 + $0x8] sm:$0xf] %v216
                  %v218 = vld [vmem:[%s210 + $0x18] sm:$0xf]
                  %219 = vst [vmem:[%s211 + $0xc] sm:$0xf] %v218
                  %v220 = vld [vmem:[%s210 + $0x20] sm:$0xf]
                  %221 = vst [vmem:[%s211 + $0x10] sm:$0xf] %v220
                  %v222 = vld [vmem:[%s210 + $0x28] sm:$0xf]
                  %223 = vst [vmem:[%s211 + $0x14] sm:$0xf] %v222
                  %v224 = vld [vmem:[%s210 + $0x30] sm:$0xf]
                  %225 = vst [vmem:[%s211 + $0x18] sm:$0xf] %v224
                $region59: #{inception_c_forward.13} parent=46 // loop_footer
                  %s209 = sadd.s32 1, %s205
                $region60: #{inception_c_forward.13} parent=46 // loop_footer_branch
                  %204 = sbr.rel target = $region56
                $region61: #{inception_c_forward.13} parent=46 // loop_exit
                  _
              $region47: #{inception_c_forward.13} parent=31 // pred_fallthru
                _
            $region32: #{inception_c_forward.13} parent=27 // pred_fallthru
              _
            // Predicated region
            $region33: #{inception_c_forward.13} parent=27 // pred_check
              _
            $region34: #{inception_c_forward.13} parent=27 // pred_check_branch
              %169 = sbr.rel (0) target = $region36
            $region35: #{inception_c_forward.13} parent=27 // pred_region
              loop: start=0, step=1, limit=1
              $region37: #{inception_c_forward.13} parent=35 // loop_pre_header
                _
              $region38: #{inception_c_forward.13} parent=35 // loop_header
                %s172 = sphi 0, %s176
                %p173 = scmp.ge.s32.totalorder %s172, 1
                %s177 = sphi %s163, %s163
                %s178 = sphi %s161, %s161
              $region39: #{inception_c_forward.13} parent=35 // loop_header_branch
                %175 = sbr.rel (%p173) target = $region43
              $region40: #{inception_c_forward.13} parent=35 // loop_body
                %v179 = vld [vmem:[%s177] sm:$0xf]
                %180 = vst [vmem:[%s178] sm:$0xf] %v179
                %v181 = vld [vmem:[%s177 + $0x8] sm:$0xf]
                %182 = vst [vmem:[%s178 + $0x4] sm:$0xf] %v181
                %v183 = vld [vmem:[%s177 + $0x10] sm:$0xf]
                %184 = vst [vmem:[%s178 + $0x8] sm:$0xf] %v183
                %v185 = vld [vmem:[%s177 + $0x18] sm:$0xf]
                %186 = vst [vmem:[%s178 + $0xc] sm:$0xf] %v185
                %v187 = vld [vmem:[%s177 + $0x20] sm:$0xf]
                %188 = vst [vmem:[%s178 + $0x10] sm:$0xf] %v187
                %v189 = vld [vmem:[%s177 + $0x28] sm:$0xf]
                %190 = vst [vmem:[%s178 + $0x14] sm:$0xf] %v189
                %v191 = vld [vmem:[%s177 + $0x30] sm:$0xf]
                %192 = vst [vmem:[%s178 + $0x18] sm:$0xf] %v191
              $region41: #{inception_c_forward.13} parent=35 // loop_footer
                %s176 = sadd.s32 1, %s172
              $region42: #{inception_c_forward.13} parent=35 // loop_footer_branch
                %171 = sbr.rel target = $region38
              $region43: #{inception_c_forward.13} parent=35 // loop_exit
                _
            $region36: #{inception_c_forward.13} parent=27 // pred_fallthru
              _
          $region28: #{inception_c_forward.13} parent=23 // pred_fallthru
            _
          %226 = vnop
        $region24: #{inception_c_forward.13} parent=19 // pred_fallthru
          _
        // Predicated region
        $region62: #{inception_c_forward.13} parent=19 // pred_check
          %p227 = pneg %p93
        $region63: #{inception_c_forward.13} parent=19 // pred_check_branch
          %229 = sbr.rel (%p227) target = $region65
        $region64: #{inception_c_forward.13} parent=19 // pred_region
          %p230 = scmp.lt.s32.totalorder %s17, 1
          %s231 = scalar_select %p230, %s17, 1
          %s232 = scalar_lea.vmem %s2, %s231
        $region65: #{inception_c_forward.13} parent=19 // pred_fallthru
          _
      $region20: #{inception_c_forward.13} parent=5 // pred_fallthru
        _
      %p233 = scmp.le.s32.totalorder 1, %s9
      %p234 = scmp.lt.s32.totalorder %s9, 3
      %p235 = pnand %p233, %p234
      %p236 = pneg %p235
      // Predicated region
      $region66: #{inception_c_forward.13} parent=5 // pred_check
        _
      $region67: #{inception_c_forward.13} parent=5 // pred_check_branch
        %238 = sbr.rel (%p235) target = $region69
      $region68: #{inception_c_forward.13} parent=5 // pred_region
        %s239 = ssub.s32 %s9, 1
        %s240 = sand.u32 %s60, 1
        %s241 = sand.u32 %s60, 1
        %s242 = smul.addr %s241, 28
        %s243 = scalar_lea.vmem [#allocation2], %s242
        // Predicated region
        $region70: #{inception_c_forward.13} parent=68 // pred_check
          %p244 = pneg %p73
        $region71: #{inception_c_forward.13} parent=68 // pred_check_branch
          %246 = sbr.rel (%p244) target = $region73
        $region72: #{inception_c_forward.13} parent=68 // pred_region
          _
        $region73: #{inception_c_forward.13} parent=68 // pred_fallthru
          _
        %s247 = smul.u32 64, %s18
        %p248 = scmp.lt.s32.totalorder %s247, 63
        %s249 = scalar_select %p248, %s247, 63
        %s250 = smul.addr %s249, 4
        %s251 = scalar_lea.vmem %s0, %s250
        %p252 = pneg %p47
        %p253 = pneg %p44
        %s254 = sand.u32 %s60, 1
        %s255 = sand.u32 %s60, 1
        %s256 = smul.addr %s255, 28
        %s257 = scalar_lea.vmem [#allocation2], %s256
        %p258 = pneg %p73
        %p259 = pneg %p70
        %p260 = scmp.lt.s32.totalorder %s19, 1
        %s261 = scalar_select %p260, %s19, 1
        %s262 = scalar_lea.vmem %s2, %s261
        %p263 = pneg %p99
        %p264 = pneg %p96
        %p265 = pneg %p127
        %p266 = pneg %p124
        %s267 = sand.u32 %s114, 1
        %s268 = sand.u32 %s114, 1
        %s269 = smul.addr %s268, 512
        %s270 = scalar_lea.vmem [#allocation3], %s269
        %s271 = smul.u32 64, %s18
        %p272 = scmp.lt.s32.totalorder %s271, 63
        %s273 = scalar_select %p272, %s271, 63
        %s274 = smul.addr %s273, 4
        %s275 = scalar_lea.vmem %s0, %s274
        %s276 = smul.u32 64, %s18
        %p277 = scmp.lt.s32.totalorder %s19, 1
        %s278 = scalar_select %p277, %s19, 1
        %s279 = scalar_lea.vmem %s2, %s278
        %s280 = smul.u32 64, %s18
        %v282 = vld [vmem:[%s275] sm:$0xf]
        %v283 = vld [vmem:[%s275 + $0x4] sm:$0xf]
        %v284 = vld [vmem:[%s275 + $0x8] sm:$0xf]
        %v285 = vld [vmem:[%s275 + $0xc] sm:$0xf]
        %v286 = vld [vmem:[%s275 + $0x10] sm:$0xf]
        %v287 = vld [vmem:[%s275 + $0x14] sm:$0xf]
        %v288 = vld [vmem:[%s275 + $0x18] sm:$0xf]
        %v289 = vld [vmem:[%s275 + $0x1c] sm:$0xf]
        %v290 = vld [vmem:[%s275 + $0x20] sm:$0xf]
        %v291 = vld [vmem:[%s275 + $0x24] sm:$0xf]
        %v292 = vld [vmem:[%s275 + $0x28] sm:$0xf]
        %v293 = vld [vmem:[%s275 + $0x2c] sm:$0xf]
        %v294 = vld [vmem:[%s275 + $0x30] sm:$0xf]
        %v295 = vld [vmem:[%s275 + $0x34] sm:$0xf]
        %v296 = vld [vmem:[%s275 + $0x38] sm:$0xf]
        %v297 = vld [vmem:[%s275 + $0x3c] sm:$0xf]
        %v298 = vld [vmem:[%s275 + $0x40] sm:$0xf]
        %v299 = vld [vmem:[%s275 + $0x44] sm:$0xf]
        %v300 = vld [vmem:[%s275 + $0x48] sm:$0xf]
        %v301 = vld [vmem:[%s275 + $0x4c] sm:$0xf]
        %v302 = vld [vmem:[%s275 + $0x50] sm:$0xf]
        %v303 = vld [vmem:[%s275 + $0x54] sm:$0xf]
        %v304 = vld [vmem:[%s275 + $0x58] sm:$0xf]
        %v305 = vld [vmem:[%s275 + $0x5c] sm:$0xf]
        %v306 = vld [vmem:[%s275 + $0x60] sm:$0xf]
        %v307 = vld [vmem:[%s275 + $0x64] sm:$0xf]
        %v308 = vld [vmem:[%s275 + $0x68] sm:$0xf]
        %v309 = vld [vmem:[%s275 + $0x6c] sm:$0xf]
        %v310 = vld [vmem:[%s275 + $0x70] sm:$0xf]
        %v311 = vld [vmem:[%s275 + $0x74] sm:$0xf]
        %v312 = vld [vmem:[%s275 + $0x78] sm:$0xf]
        %v313 = vld [vmem:[%s275 + $0x7c] sm:$0xf]
        %v314 = vld [vmem:[%s275 + $0x80] sm:$0xf]
        %v315 = vld [vmem:[%s275 + $0x84] sm:$0xf]
        %v316 = vld [vmem:[%s275 + $0x88] sm:$0xf]
        %v317 = vld [vmem:[%s275 + $0x8c] sm:$0xf]
        %v318 = vld [vmem:[%s275 + $0x90] sm:$0xf]
        %v319 = vld [vmem:[%s275 + $0x94] sm:$0xf]
        %v320 = vld [vmem:[%s275 + $0x98] sm:$0xf]
        %v321 = vld [vmem:[%s275 + $0x9c] sm:$0xf]
        %v322 = vld [vmem:[%s275 + $0xa0] sm:$0xf]
        %v323 = vld [vmem:[%s275 + $0xa4] sm:$0xf]
        %v324 = vld [vmem:[%s275 + $0xa8] sm:$0xf]
        %v325 = vld [vmem:[%s275 + $0xac] sm:$0xf]
        %v326 = vld [vmem:[%s275 + $0xb0] sm:$0xf]
        %v327 = vld [vmem:[%s275 + $0xb4] sm:$0xf]
        %v328 = vld [vmem:[%s275 + $0xb8] sm:$0xf]
        %v329 = vld [vmem:[%s275 + $0xbc] sm:$0xf]
        %v330 = vld [vmem:[%s275 + $0xc0] sm:$0xf]
        %v331 = vld [vmem:[%s275 + $0xc4] sm:$0xf]
        %v332 = vld [vmem:[%s275 + $0xc8] sm:$0xf]
        %v333 = vld [vmem:[%s275 + $0xcc] sm:$0xf]
        %v334 = vld [vmem:[%s275 + $0xd0] sm:$0xf]
        %v335 = vld [vmem:[%s275 + $0xd4] sm:$0xf]
        %v336 = vld [vmem:[%s275 + $0xd8] sm:$0xf]
        %v337 = vld [vmem:[%s275 + $0xdc] sm:$0xf]
        %v338 = vld [vmem:[%s275 + $0xe0] sm:$0xf]
        %v339 = vld [vmem:[%s275 + $0xe4] sm:$0xf]
        %v340 = vld [vmem:[%s275 + $0xe8] sm:$0xf]
        %v341 = vld [vmem:[%s275 + $0xec] sm:$0xf]
        %v342 = vld [vmem:[%s275 + $0xf0] sm:$0xf]
        %v343 = vld [vmem:[%s275 + $0xf4] sm:$0xf]
        %v344 = vld [vmem:[%s275 + $0xf8] sm:$0xf]
        %v345 = vld [vmem:[%s275 + $0xfc] sm:$0xf]
        %v346 = vld [vmem:[%s243] sm:$0xf]
        %v347 = vld [vmem:[%s243 + $0x4] sm:$0xf]
        %v348 = vld [vmem:[%s243 + $0x8] sm:$0xf]
        %v349 = vld [vmem:[%s243 + $0xc] sm:$0xf]
        %v350 = vld [vmem:[%s243 + $0x10] sm:$0xf]
        %v351 = vld [vmem:[%s243 + $0x14] sm:$0xf]
        %v352 = vld [vmem:[%s243 + $0x18] sm:$0xf]
        %v353 = vld [vmem:[%s279] sm:$0x1]
        %v355 = vlaneseq
        %v356 = vshrl.u32 %v355, 7
        %v357 = vsub.s32 0, %v356
        %v358 = vrot.slane %v353, %v357
        %v424 = vunpack.c.l.b16 %v282
        %v425 = vunpack.c.l.b16 %v283
        %v426 = vunpack.c.l.b16 %v284
        %v427 = vunpack.c.l.b16 %v285
        %v428 = vunpack.c.l.b16 %v286
        %v429 = vunpack.c.l.b16 %v287
        %v430 = vunpack.c.l.b16 %v288
        %v431 = vunpack.c.l.b16 %v289
        %v432 = vunpack.c.l.b16 %v290
        %v433 = vunpack.c.l.b16 %v291
        %v434 = vunpack.c.l.b16 %v292
        %v435 = vunpack.c.l.b16 %v293
        %v436 = vunpack.c.l.b16 %v294
        %v437 = vunpack.c.l.b16 %v295
        %v438 = vunpack.c.l.b16 %v296
        %v439 = vunpack.c.l.b16 %v297
        %v440 = vunpack.c.l.b16 %v298
        %v441 = vunpack.c.l.b16 %v299
        %v442 = vunpack.c.l.b16 %v300
        %v443 = vunpack.c.l.b16 %v301
        %v444 = vunpack.c.l.b16 %v302
        %v445 = vunpack.c.l.b16 %v303
        %v446 = vunpack.c.l.b16 %v304
        %v447 = vunpack.c.l.b16 %v305
        %v448 = vunpack.c.l.b16 %v306
        %v449 = vunpack.c.l.b16 %v307
        %v450 = vunpack.c.l.b16 %v308
        %v451 = vunpack.c.l.b16 %v309
        %v452 = vunpack.c.l.b16 %v310
        %v453 = vunpack.c.l.b16 %v311
        %v454 = vunpack.c.l.b16 %v312
        %v455 = vunpack.c.l.b16 %v313
        %v456 = vunpack.c.l.b16 %v314
        %v457 = vunpack.c.l.b16 %v315
        %v458 = vunpack.c.l.b16 %v316
        %v459 = vunpack.c.l.b16 %v317
        %v460 = vunpack.c.l.b16 %v318
        %v461 = vunpack.c.l.b16 %v319
        %v462 = vunpack.c.l.b16 %v320
        %v463 = vunpack.c.l.b16 %v321
        %v464 = vunpack.c.l.b16 %v322
        %v465 = vunpack.c.l.b16 %v323
        %v466 = vunpack.c.l.b16 %v324
        %v467 = vunpack.c.l.b16 %v325
        %v468 = vunpack.c.l.b16 %v326
        %v469 = vunpack.c.l.b16 %v327
        %v470 = vunpack.c.l.b16 %v328
        %v471 = vunpack.c.l.b16 %v329
        %v472 = vunpack.c.l.b16 %v330
        %v473 = vunpack.c.l.b16 %v331
        %v474 = vunpack.c.l.b16 %v332
        %v475 = vunpack.c.l.b16 %v333
        %v476 = vunpack.c.l.b16 %v334
        %v477 = vunpack.c.l.b16 %v335
        %v478 = vunpack.c.l.b16 %v336
        %v479 = vunpack.c.l.b16 %v337
        %v480 = vunpack.c.l.b16 %v338
        %v481 = vunpack.c.l.b16 %v339
        %v482 = vunpack.c.l.b16 %v340
        %v483 = vunpack.c.l.b16 %v341
        %v484 = vunpack.c.l.b16 %v342
        %v485 = vunpack.c.l.b16 %v343
        %v486 = vunpack.c.l.b16 %v344
        %v487 = vunpack.c.l.b16 %v345
        %v488 = vpack.c.b16 %v425, %v424
        %v489 = vpack.c.b16 %v427, %v426
        %v490 = vpack.c.b16 %v429, %v428
        %v491 = vpack.c.b16 %v431, %v430
        %v492 = vpack.c.b16 %v433, %v432
        %v493 = vpack.c.b16 %v435, %v434
        %v494 = vpack.c.b16 %v437, %v436
        %v495 = vpack.c.b16 %v439, %v438
        %v496 = vpack.c.b16 %v441, %v440
        %v497 = vpack.c.b16 %v443, %v442
        %v498 = vpack.c.b16 %v445, %v444
        %v499 = vpack.c.b16 %v447, %v446
        %v500 = vpack.c.b16 %v449, %v448
        %v501 = vpack.c.b16 %v451, %v450
        %v502 = vpack.c.b16 %v453, %v452
        %v503 = vpack.c.b16 %v455, %v454
        %v504 = vpack.c.b16 %v457, %v456
        %v505 = vpack.c.b16 %v459, %v458
        %v506 = vpack.c.b16 %v461, %v460
        %v507 = vpack.c.b16 %v463, %v462
        %v508 = vpack.c.b16 %v465, %v464
        %v509 = vpack.c.b16 %v467, %v466
        %v510 = vpack.c.b16 %v469, %v468
        %v511 = vpack.c.b16 %v471, %v470
        %v512 = vpack.c.b16 %v473, %v472
        %v513 = vpack.c.b16 %v475, %v474
        %v514 = vpack.c.b16 %v477, %v476
        %v515 = vpack.c.b16 %v479, %v478
        %v516 = vpack.c.b16 %v481, %v480
        %v517 = vpack.c.b16 %v483, %v482
        %v518 = vpack.c.b16 %v485, %v484
        %v519 = vpack.c.b16 %v487, %v486
        %v527 = vunpack.c.l.b16 %v346
        %v528 = vunpack.c.l.b16 %v347
        %v529 = vunpack.c.l.b16 %v348
        %v530 = vunpack.c.l.b16 %v349
        %v531 = vunpack.c.l.b16 %v350
        %v532 = vunpack.c.l.b16 %v351
        %v533 = vunpack.c.l.b16 %v352
        %v534 = vpack.c.b16 %v528, %v527
        %v535 = vpack.c.b16 %v530, %v529
        %v536 = vpack.c.b16 %v532, %v531
        %v537 = vpack.c.b16 %v533, %v533
        %vm541 = vcmask 457728
        %v543 = vsel %vm541, %v488, 0
        %v546 = vsel %vm541, %v489, 0
        %v549 = vsel %vm541, %v490, 0
        %v552 = vsel %vm541, %v491, 0
        %v555 = vsel %vm541, %v492, 0
        %v558 = vsel %vm541, %v493, 0
        %v561 = vsel %vm541, %v494, 0
        %v564 = vsel %vm541, %v495, 0
        %v567 = vsel %vm541, %v496, 0
        %v570 = vsel %vm541, %v497, 0
        %v573 = vsel %vm541, %v498, 0
        %v576 = vsel %vm541, %v499, 0
        %v579 = vsel %vm541, %v500, 0
        %v582 = vsel %vm541, %v501, 0
        %v585 = vsel %vm541, %v502, 0
        %v588 = vsel %vm541, %v503, 0
        %v591 = vsel %vm541, %v504, 0
        %v594 = vsel %vm541, %v505, 0
        %v597 = vsel %vm541, %v506, 0
        %v600 = vsel %vm541, %v507, 0
        %v603 = vsel %vm541, %v508, 0
        %v606 = vsel %vm541, %v509, 0
        %v609 = vsel %vm541, %v510, 0
        %v612 = vsel %vm541, %v511, 0
        %v615 = vsel %vm541, %v512, 0
        %v618 = vsel %vm541, %v513, 0
        %v621 = vsel %vm541, %v514, 0
        %v624 = vsel %vm541, %v515, 0
        %v627 = vsel %vm541, %v516, 0
        %v630 = vsel %vm541, %v517, 0
        %v633 = vsel %vm541, %v518, 0
        %v636 = vsel %vm541, %v519, 0
        %vm638 = vcmask 1043456
        %v640 = vsel %vm638, %v537, 0
        %642 = vmatprep.subr.bf16.mxu0 0
        %643 = vmatpush1.bf16.msra.mxu0 %v534
        %644 = vmatprep.subr.bf16.mxu0 0
        %645 = vmatpush1.bf16.msra.mxu0 %v535
        %646 = vmatprep.subr.bf16.mxu0 0
        %647 = vmatpush1.bf16.msra.mxu0 %v536
        %648 = vmatprep.subr.bf16.mxu0 0
        %649 = vmatpush1.bf16.msra.mxu0 %v640
        %650 = vmatprep.subr.bf16.mxu0 0
        %651 = vmatpush1.bf16.msra.mxu0 0
        %652 = vmatprep.subr.bf16.mxu0 0
        %653 = vmatpush1.bf16.msra.mxu0 0
        %654 = vmatprep.subr.bf16.mxu0 0
        %655 = vmatpush1.bf16.msra.mxu0 0
        %656 = vmatprep.subr.bf16.mxu0 0
        %657 = vmatpush1.bf16.msra.mxu0 0
        %658 = vmatprep.subr.bf16.mxu0 0
        %659 = vmatpush1.bf16.msra.mxu0 0
        %660 = vmatprep.subr.bf16.mxu0 0
        %661 = vmatpush1.bf16.msra.mxu0 0
        %662 = vmatprep.subr.bf16.mxu0 0
        %663 = vmatpush1.bf16.msra.mxu0 0
        %664 = vmatprep.subr.bf16.mxu0 0
        %665 = vmatpush1.bf16.msra.mxu0 0
        %666 = vmatprep.subr.bf16.mxu0 0
        %667 = vmatpush1.bf16.msra.mxu0 0
        %668 = vmatprep.subr.bf16.mxu0 0
        %669 = vmatpush1.bf16.msra.mxu0 0
        %670 = vmatprep.subr.bf16.mxu0 0
        %671 = vmatpush1.bf16.msra.mxu0 0
        %672 = vmatprep.subr.bf16.mxu0 0
        %673 = vmatpush1.bf16.msra.mxu0 0
        %674 = vmatprep.mubr.bf16.mxu0 0
        %675 = vmatmul.mubr.bf16.gmra.mrb[0].mxu0 %v543
        %v676 = vpop.f32.mrb[0].mxu0
        %v677 = vadd.f32 %v358, %v676
        %v678 = vpop.f32.mrb[0].mxu0
        %v679 = vpop.f32.mrb[0].mxu0
        %v680 = vadd.f32 %v358, %v679
        %v681 = vpop.f32.mrb[0].mxu0
        %682 = vmatprep.mubr.bf16.mxu0 0
        %683 = vmatmul.mubr.bf16.gmra.mrb[0].mxu0 %v546
        %v684 = vpop.f32.mrb[0].mxu0
        %v685 = vadd.f32 %v358, %v684
        %v686 = vpop.f32.mrb[0].mxu0
        %v687 = vpop.f32.mrb[0].mxu0
        %v688 = vadd.f32 %v358, %v687
        %v689 = vpop.f32.mrb[0].mxu0
        %690 = vmatprep.mubr.bf16.mxu0 0
        %691 = vmatmul.mubr.bf16.gmra.mrb[0].mxu0 %v549
        %v692 = vpop.f32.mrb[0].mxu0
        %v693 = vadd.f32 %v358, %v692
        %v694 = vpop.f32.mrb[0].mxu0
        %v695 = vpop.f32.mrb[0].mxu0
        %v696 = vadd.f32 %v358, %v695
        %v697 = vpop.f32.mrb[0].mxu0
        %698 = vmatprep.mubr.bf16.mxu0 0
        %699 = vmatmul.mubr.bf16.gmra.mrb[0].mxu0 %v552
        %v700 = vpop.f32.mrb[0].mxu0
        %v701 = vadd.f32 %v358, %v700
        %v702 = vpop.f32.mrb[0].mxu0
        %v703 = vpop.f32.mrb[0].mxu0
        %v704 = vadd.f32 %v358, %v703
        %v705 = vpop.f32.mrb[0].mxu0
        %706 = vmatprep.mubr.bf16.mxu0 0
        %707 = vmatmul.mubr.bf16.gmra.mrb[0].mxu0 %v555
        %v708 = vpop.f32.mrb[0].mxu0
        %v709 = vadd.f32 %v358, %v708
        %v710 = vpop.f32.mrb[0].mxu0
        %v711 = vpop.f32.mrb[0].mxu0
        %v712 = vadd.f32 %v358, %v711
        %v713 = vpop.f32.mrb[0].mxu0
        %714 = vmatprep.mubr.bf16.mxu0 0
        %715 = vmatmul.mubr.bf16.gmra.mrb[0].mxu0 %v558
        %v716 = vpop.f32.mrb[0].mxu0
        %v717 = vadd.f32 %v358, %v716
        %v718 = vpop.f32.mrb[0].mxu0
        %v719 = vpop.f32.mrb[0].mxu0
        %v720 = vadd.f32 %v358, %v719
        %v721 = vpop.f32.mrb[0].mxu0
        %722 = vmatprep.mubr.bf16.mxu0 0
        %723 = vmatmul.mubr.bf16.gmra.mrb[0].mxu0 %v561
        %v724 = vpop.f32.mrb[0].mxu0
        %v725 = vadd.f32 %v358, %v724
        %v726 = vpop.f32.mrb[0].mxu0
        %v727 = vpop.f32.mrb[0].mxu0
        %v728 = vadd.f32 %v358, %v727
        %v729 = vpop.f32.mrb[0].mxu0
        %730 = vmatprep.mubr.bf16.mxu0 0
        %731 = vmatmul.mubr.bf16.gmra.mrb[0].mxu0 %v564
        %v732 = vpop.f32.mrb[0].mxu0
        %v733 = vadd.f32 %v358, %v732
        %v734 = vpop.f32.mrb[0].mxu0
        %v735 = vpop.f32.mrb[0].mxu0
        %v736 = vadd.f32 %v358, %v735
        %v737 = vpop.f32.mrb[0].mxu0
        %738 = vmatprep.mubr.bf16.mxu0 0
        %739 = vmatmul.mubr.bf16.gmra.mrb[0].mxu0 %v567
        %v740 = vpop.f32.mrb[0].mxu0
        %v741 = vadd.f32 %v358, %v740
        %v742 = vpop.f32.mrb[0].mxu0
        %v743 = vpop.f32.mrb[0].mxu0
        %v744 = vadd.f32 %v358, %v743
        %v745 = vpop.f32.mrb[0].mxu0
        %746 = vmatprep.mubr.bf16.mxu0 0
        %747 = vmatmul.mubr.bf16.gmra.mrb[0].mxu0 %v570
        %v748 = vpop.f32.mrb[0].mxu0
        %v749 = vadd.f32 %v358, %v748
        %v750 = vpop.f32.mrb[0].mxu0
        %v751 = vpop.f32.mrb[0].mxu0
        %v752 = vadd.f32 %v358, %v751
        %v753 = vpop.f32.mrb[0].mxu0
        %754 = vmatprep.mubr.bf16.mxu0 0
        %755 = vmatmul.mubr.bf16.gmra.mrb[0].mxu0 %v573
        %v756 = vpop.f32.mrb[0].mxu0
        %v757 = vadd.f32 %v358, %v756
        %v758 = vpop.f32.mrb[0].mxu0
        %v759 = vpop.f32.mrb[0].mxu0
        %v760 = vadd.f32 %v358, %v759
        %v761 = vpop.f32.mrb[0].mxu0
        %762 = vmatprep.mubr.bf16.mxu0 0
        %763 = vmatmul.mubr.bf16.gmra.mrb[0].mxu0 %v576
        %v764 = vpop.f32.mrb[0].mxu0
        %v765 = vadd.f32 %v358, %v764
        %v766 = vpop.f32.mrb[0].mxu0
        %v767 = vpop.f32.mrb[0].mxu0
        %v768 = vadd.f32 %v358, %v767
        %v769 = vpop.f32.mrb[0].mxu0
        %770 = vmatprep.mubr.bf16.mxu0 0
        %771 = vmatmul.mubr.bf16.gmra.mrb[0].mxu0 %v579
        %v772 = vpop.f32.mrb[0].mxu0
        %v773 = vadd.f32 %v358, %v772
        %v774 = vpop.f32.mrb[0].mxu0
        %v775 = vpop.f32.mrb[0].mxu0
        %v776 = vadd.f32 %v358, %v775
        %v777 = vpop.f32.mrb[0].mxu0
        %778 = vmatprep.mubr.bf16.mxu0 0
        %779 = vmatmul.mubr.bf16.gmra.mrb[0].mxu0 %v582
        %v780 = vpop.f32.mrb[0].mxu0
        %v781 = vadd.f32 %v358, %v780
        %v782 = vpop.f32.mrb[0].mxu0
        %v783 = vpop.f32.mrb[0].mxu0
        %v784 = vadd.f32 %v358, %v783
        %v785 = vpop.f32.mrb[0].mxu0
        %786 = vmatprep.mubr.bf16.mxu0 0
        %787 = vmatmul.mubr.bf16.gmra.mrb[0].mxu0 %v585
        %v788 = vpop.f32.mrb[0].mxu0
        %v789 = vadd.f32 %v358, %v788
        %v790 = vpop.f32.mrb[0].mxu0
        %v791 = vpop.f32.mrb[0].mxu0
        %v792 = vadd.f32 %v358, %v791
        %v793 = vpop.f32.mrb[0].mxu0
        %794 = vmatprep.mubr.bf16.mxu0 0
        %795 = vmatmul.mubr.bf16.gmra.mrb[0].mxu0 %v588
        %v796 = vpop.f32.mrb[0].mxu0
        %v797 = vadd.f32 %v358, %v796
        %v798 = vpop.f32.mrb[0].mxu0
        %v799 = vpop.f32.mrb[0].mxu0
        %v800 = vadd.f32 %v358, %v799
        %v801 = vpop.f32.mrb[0].mxu0
        %802 = vmatprep.mubr.bf16.mxu0 0
        %803 = vmatmul.mubr.bf16.gmra.mrb[0].mxu0 %v591
        %v804 = vpop.f32.mrb[0].mxu0
        %v805 = vadd.f32 %v358, %v804
        %v806 = vpop.f32.mrb[0].mxu0
        %v807 = vpop.f32.mrb[0].mxu0
        %v808 = vadd.f32 %v358, %v807
        %v809 = vpop.f32.mrb[0].mxu0
        %810 = vmatprep.mubr.bf16.mxu0 0
        %811 = vmatmul.mubr.bf16.gmra.mrb[0].mxu0 %v594
        %v812 = vpop.f32.mrb[0].mxu0
        %v813 = vadd.f32 %v358, %v812
        %v814 = vpop.f32.mrb[0].mxu0
        %v815 = vpop.f32.mrb[0].mxu0
        %v816 = vadd.f32 %v358, %v815
        %v817 = vpop.f32.mrb[0].mxu0
        %818 = vmatprep.mubr.bf16.mxu0 0
        %819 = vmatmul.mubr.bf16.gmra.mrb[0].mxu0 %v597
        %v820 = vpop.f32.mrb[0].mxu0
        %v821 = vadd.f32 %v358, %v820
        %v822 = vpop.f32.mrb[0].mxu0
        %v823 = vpop.f32.mrb[0].mxu0
        %v824 = vadd.f32 %v358, %v823
        %v825 = vpop.f32.mrb[0].mxu0
        %826 = vmatprep.mubr.bf16.mxu0 0
        %827 = vmatmul.mubr.bf16.gmra.mrb[0].mxu0 %v600
        %v828 = vpop.f32.mrb[0].mxu0
        %v829 = vadd.f32 %v358, %v828
        %v830 = vpop.f32.mrb[0].mxu0
        %v831 = vpop.f32.mrb[0].mxu0
        %v832 = vadd.f32 %v358, %v831
        %v833 = vpop.f32.mrb[0].mxu0
        %834 = vmatprep.mubr.bf16.mxu0 0
        %835 = vmatmul.mubr.bf16.gmra.mrb[0].mxu0 %v603
        %v836 = vpop.f32.mrb[0].mxu0
        %v837 = vadd.f32 %v358, %v836
        %v838 = vpop.f32.mrb[0].mxu0
        %v839 = vpop.f32.mrb[0].mxu0
        %v840 = vadd.f32 %v358, %v839
        %v841 = vpop.f32.mrb[0].mxu0
        %842 = vmatprep.mubr.bf16.mxu0 0
        %843 = vmatmul.mubr.bf16.gmra.mrb[0].mxu0 %v606
        %v844 = vpop.f32.mrb[0].mxu0
        %v845 = vadd.f32 %v358, %v844
        %v846 = vpop.f32.mrb[0].mxu0
        %v847 = vpop.f32.mrb[0].mxu0
        %v848 = vadd.f32 %v358, %v847
        %v849 = vpop.f32.mrb[0].mxu0
        %850 = vmatprep.mubr.bf16.mxu0 0
        %851 = vmatmul.mubr.bf16.gmra.mrb[0].mxu0 %v609
        %v852 = vpop.f32.mrb[0].mxu0
        %v853 = vadd.f32 %v358, %v852
        %v854 = vpop.f32.mrb[0].mxu0
        %v855 = vpop.f32.mrb[0].mxu0
        %v856 = vadd.f32 %v358, %v855
        %v857 = vpop.f32.mrb[0].mxu0
        %858 = vmatprep.mubr.bf16.mxu0 0
        %859 = vmatmul.mubr.bf16.gmra.mrb[0].mxu0 %v612
        %v860 = vpop.f32.mrb[0].mxu0
        %v861 = vadd.f32 %v358, %v860
        %v862 = vpop.f32.mrb[0].mxu0
        %v863 = vpop.f32.mrb[0].mxu0
        %v864 = vadd.f32 %v358, %v863
        %v865 = vpop.f32.mrb[0].mxu0
        %866 = vmatprep.mubr.bf16.mxu0 0
        %867 = vmatmul.mubr.bf16.gmra.mrb[0].mxu0 %v615
        %v868 = vpop.f32.mrb[0].mxu0
        %v869 = vadd.f32 %v358, %v868
        %v870 = vpop.f32.mrb[0].mxu0
        %v871 = vpop.f32.mrb[0].mxu0
        %v872 = vadd.f32 %v358, %v871
        %v873 = vpop.f32.mrb[0].mxu0
        %874 = vmatprep.mubr.bf16.mxu0 0
        %875 = vmatmul.mubr.bf16.gmra.mrb[0].mxu0 %v618
        %v876 = vpop.f32.mrb[0].mxu0
        %v877 = vadd.f32 %v358, %v876
        %v878 = vpop.f32.mrb[0].mxu0
        %v879 = vpop.f32.mrb[0].mxu0
        %v880 = vadd.f32 %v358, %v879
        %v881 = vpop.f32.mrb[0].mxu0
        %882 = vmatprep.mubr.bf16.mxu0 0
        %883 = vmatmul.mubr.bf16.gmra.mrb[0].mxu0 %v621
        %v884 = vpop.f32.mrb[0].mxu0
        %v885 = vadd.f32 %v358, %v884
        %v886 = vpop.f32.mrb[0].mxu0
        %v887 = vpop.f32.mrb[0].mxu0
        %v888 = vadd.f32 %v358, %v887
        %v889 = vpop.f32.mrb[0].mxu0
        %890 = vmatprep.mubr.bf16.mxu0 0
        %891 = vmatmul.mubr.bf16.gmra.mrb[0].mxu0 %v624
        %v892 = vpop.f32.mrb[0].mxu0
        %v893 = vadd.f32 %v358, %v892
        %v894 = vpop.f32.mrb[0].mxu0
        %v895 = vpop.f32.mrb[0].mxu0
        %v896 = vadd.f32 %v358, %v895
        %v897 = vpop.f32.mrb[0].mxu0
        %898 = vmatprep.mubr.bf16.mxu0 0
        %899 = vmatmul.mubr.bf16.gmra.mrb[0].mxu0 %v627
        %v900 = vpop.f32.mrb[0].mxu0
        %v901 = vadd.f32 %v358, %v900
        %v902 = vpop.f32.mrb[0].mxu0
        %v903 = vpop.f32.mrb[0].mxu0
        %v904 = vadd.f32 %v358, %v903
        %v905 = vpop.f32.mrb[0].mxu0
        %906 = vmatprep.mubr.bf16.mxu0 0
        %907 = vmatmul.mubr.bf16.gmra.mrb[0].mxu0 %v630
        %v908 = vpop.f32.mrb[0].mxu0
        %v909 = vadd.f32 %v358, %v908
        %v910 = vpop.f32.mrb[0].mxu0
        %v911 = vpop.f32.mrb[0].mxu0
        %v912 = vadd.f32 %v358, %v911
        %v913 = vpop.f32.mrb[0].mxu0
        %914 = vmatprep.mubr.bf16.mxu0 0
        %915 = vmatmul.mubr.bf16.gmra.mrb[0].mxu0 %v633
        %v916 = vpop.f32.mrb[0].mxu0
        %v917 = vadd.f32 %v358, %v916
        %v918 = vpop.f32.mrb[0].mxu0
        %v919 = vpop.f32.mrb[0].mxu0
        %v920 = vadd.f32 %v358, %v919
        %v921 = vpop.f32.mrb[0].mxu0
        %922 = vmatprep.mubr.bf16.mxu0 0
        %923 = vmatmul.mubr.bf16.gmra.mrb[0].mxu0 %v636
        %v924 = vpop.f32.mrb[0].mxu0
        %v925 = vadd.f32 %v358, %v924
        %v926 = vpop.f32.mrb[0].mxu0
        %v927 = vpop.f32.mrb[0].mxu0
        %v928 = vadd.f32 %v358, %v927
        %v929 = vpop.f32.mrb[0].mxu0
        %930 = vdwg.mxu0
        %v931 = vmax.f32 %v677, 0.0
        %v932 = vmax.f32 %v680, 0.0
        %v933 = vmax.f32 %v685, 0.0
        %v934 = vmax.f32 %v688, 0.0
        %v935 = vmax.f32 %v693, 0.0
        %v936 = vmax.f32 %v696, 0.0
        %v937 = vmax.f32 %v701, 0.0
        %v938 = vmax.f32 %v704, 0.0
        %v939 = vmax.f32 %v709, 0.0
        %v940 = vmax.f32 %v712, 0.0
        %v941 = vmax.f32 %v717, 0.0
        %v942 = vmax.f32 %v720, 0.0
        %v943 = vmax.f32 %v725, 0.0
        %v944 = vmax.f32 %v728, 0.0
        %v945 = vmax.f32 %v733, 0.0
        %v946 = vmax.f32 %v736, 0.0
        %v947 = vmax.f32 %v741, 0.0
        %v948 = vmax.f32 %v744, 0.0
        %v949 = vmax.f32 %v749, 0.0
        %v950 = vmax.f32 %v752, 0.0
        %v951 = vmax.f32 %v757, 0.0
        %v952 = vmax.f32 %v760, 0.0
        %v953 = vmax.f32 %v765, 0.0
        %v954 = vmax.f32 %v768, 0.0
        %v955 = vmax.f32 %v773, 0.0
        %v956 = vmax.f32 %v776, 0.0
        %v957 = vmax.f32 %v781, 0.0
        %v958 = vmax.f32 %v784, 0.0
        %v959 = vmax.f32 %v789, 0.0
        %v960 = vmax.f32 %v792, 0.0
        %v961 = vmax.f32 %v797, 0.0
        %v962 = vmax.f32 %v800, 0.0
        %v963 = vmax.f32 %v805, 0.0
        %v964 = vmax.f32 %v808, 0.0
        %v965 = vmax.f32 %v813, 0.0
        %v966 = vmax.f32 %v816, 0.0
        %v967 = vmax.f32 %v821, 0.0
        %v968 = vmax.f32 %v824, 0.0
        %v969 = vmax.f32 %v829, 0.0
        %v970 = vmax.f32 %v832, 0.0
        %v971 = vmax.f32 %v837, 0.0
        %v972 = vmax.f32 %v840, 0.0
        %v973 = vmax.f32 %v845, 0.0
        %v974 = vmax.f32 %v848, 0.0
        %v975 = vmax.f32 %v853, 0.0
        %v976 = vmax.f32 %v856, 0.0
        %v977 = vmax.f32 %v861, 0.0
        %v978 = vmax.f32 %v864, 0.0
        %v979 = vmax.f32 %v869, 0.0
        %v980 = vmax.f32 %v872, 0.0
        %v981 = vmax.f32 %v877, 0.0
        %v982 = vmax.f32 %v880, 0.0
        %v983 = vmax.f32 %v885, 0.0
        %v984 = vmax.f32 %v888, 0.0
        %v985 = vmax.f32 %v893, 0.0
        %v986 = vmax.f32 %v896, 0.0
        %v987 = vmax.f32 %v901, 0.0
        %v988 = vmax.f32 %v904, 0.0
        %v989 = vmax.f32 %v909, 0.0
        %v990 = vmax.f32 %v912, 0.0
        %v991 = vmax.f32 %v917, 0.0
        %v992 = vmax.f32 %v920, 0.0
        %v993 = vmax.f32 %v925, 0.0
        %v994 = vmax.f32 %v928, 0.0
        %995 = vst [vmem:[%s270] sm:$0xff] %v931
        %996 = vst [vmem:[%s270 + $0x8] sm:$0xff] %v932
        %997 = vst [vmem:[%s270 + $0x10] sm:$0xff] %v933
        %998 = vst [vmem:[%s270 + $0x18] sm:$0xff] %v934
        %999 = vst [vmem:[%s270 + $0x20] sm:$0xff] %v935
        %1000 = vst [vmem:[%s270 + $0x28] sm:$0xff] %v936
        %1001 = vst [vmem:[%s270 + $0x30] sm:$0xff] %v937
        %1002 = vst [vmem:[%s270 + $0x38] sm:$0xff] %v938
        %1003 = vst [vmem:[%s270 + $0x40] sm:$0xff] %v939
        %1004 = vst [vmem:[%s270 + $0x48] sm:$0xff] %v940
        %1005 = vst [vmem:[%s270 + $0x50] sm:$0xff] %v941
        %1006 = vst [vmem:[%s270 + $0x58] sm:$0xff] %v942
        %1007 = vst [vmem:[%s270 + $0x60] sm:$0xff] %v943
        %1008 = vst [vmem:[%s270 + $0x68] sm:$0xff] %v944
        %1009 = vst [vmem:[%s270 + $0x70] sm:$0xff] %v945
        %1010 = vst [vmem:[%s270 + $0x78] sm:$0xff] %v946
        %1011 = vst [vmem:[%s270 + $0x80] sm:$0xff] %v947
        %1012 = vst [vmem:[%s270 + $0x88] sm:$0xff] %v948
        %1013 = vst [vmem:[%s270 + $0x90] sm:$0xff] %v949
        %1014 = vst [vmem:[%s270 + $0x98] sm:$0xff] %v950
        %1015 = vst [vmem:[%s270 + $0xa0] sm:$0xff] %v951
        %1016 = vst [vmem:[%s270 + $0xa8] sm:$0xff] %v952
        %1017 = vst [vmem:[%s270 + $0xb0] sm:$0xff] %v953
        %1018 = vst [vmem:[%s270 + $0xb8] sm:$0xff] %v954
        %1019 = vst [vmem:[%s270 + $0xc0] sm:$0xff] %v955
        %1020 = vst [vmem:[%s270 + $0xc8] sm:$0xff] %v956
        %1021 = vst [vmem:[%s270 + $0xd0] sm:$0xff] %v957
        %1022 = vst [vmem:[%s270 + $0xd8] sm:$0xff] %v958
        %1023 = vst [vmem:[%s270 + $0xe0] sm:$0xff] %v959
        %1024 = vst [vmem:[%s270 + $0xe8] sm:$0xff] %v960
        %1025 = vst [vmem:[%s270 + $0xf0] sm:$0xff] %v961
        %1026 = vst [vmem:[%s270 + $0xf8] sm:$0xff] %v962
        %1027 = vst [vmem:[%s270 + $0x100] sm:$0xff] %v963
        %1028 = vst [vmem:[%s270 + $0x108] sm:$0xff] %v964
        %1029 = vst [vmem:[%s270 + $0x110] sm:$0xff] %v965
        %1030 = vst [vmem:[%s270 + $0x118] sm:$0xff] %v966
        %1031 = vst [vmem:[%s270 + $0x120] sm:$0xff] %v967
        %1032 = vst [vmem:[%s270 + $0x128] sm:$0xff] %v968
        %1033 = vst [vmem:[%s270 + $0x130] sm:$0xff] %v969
        %1034 = vst [vmem:[%s270 + $0x138] sm:$0xff] %v970
        %1035 = vst [vmem:[%s270 + $0x140] sm:$0xff] %v971
        %1036 = vst [vmem:[%s270 + $0x148] sm:$0xff] %v972
        %1037 = vst [vmem:[%s270 + $0x150] sm:$0xff] %v973
        %1038 = vst [vmem:[%s270 + $0x158] sm:$0xff] %v974
        %1039 = vst [vmem:[%s270 + $0x160] sm:$0xff] %v975
        %1040 = vst [vmem:[%s270 + $0x168] sm:$0xff] %v976
        %1041 = vst [vmem:[%s270 + $0x170] sm:$0xff] %v977
        %1042 = vst [vmem:[%s270 + $0x178] sm:$0xff] %v978
        %1043 = vst [vmem:[%s270 + $0x180] sm:$0xff] %v979
        %1044 = vst [vmem:[%s270 + $0x188] sm:$0xff] %v980
        %1045 = vst [vmem:[%s270 + $0x190] sm:$0xff] %v981
        %1046 = vst [vmem:[%s270 + $0x198] sm:$0xff] %v982
        %1047 = vst [vmem:[%s270 + $0x1a0] sm:$0xff] %v983
        %1048 = vst [vmem:[%s270 + $0x1a8] sm:$0xff] %v984
        %1049 = vst [vmem:[%s270 + $0x1b0] sm:$0xff] %v985
        %1050 = vst [vmem:[%s270 + $0x1b8] sm:$0xff] %v986
        %1051 = vst [vmem:[%s270 + $0x1c0] sm:$0xff] %v987
        %1052 = vst [vmem:[%s270 + $0x1c8] sm:$0xff] %v988
        %1053 = vst [vmem:[%s270 + $0x1d0] sm:$0xff] %v989
        %1054 = vst [vmem:[%s270 + $0x1d8] sm:$0xff] %v990
        %1055 = vst [vmem:[%s270 + $0x1e0] sm:$0xff] %v991
        %1056 = vst [vmem:[%s270 + $0x1e8] sm:$0xff] %v992
        %1057 = vst [vmem:[%s270 + $0x1f0] sm:$0xff] %v993
        %1058 = vst [vmem:[%s270 + $0x1f8] sm:$0xff] %v994
        %s1059 = sand.u32 %s114, 1
        %s1060 = sand.u32 %s114, 1
        %s1061 = smul.addr %s1060, 512
        %s1062 = scalar_lea.vmem [#allocation3], %s1061
        // Predicated region
        $region74: #{inception_c_forward.13} parent=68 // pred_check
          %p1063 = pneg %p124
        $region75: #{inception_c_forward.13} parent=68 // pred_check_branch
          %1065 = sbr.rel (%p1063) target = $region77
        $region76: #{inception_c_forward.13} parent=68 // pred_region
          %s1066 = smul.u32 64, %s18
          %s1067 = smul.addr %s1066, 2
          %s1068 = sadd.s32 %s19, %s1067
          %s1069 = smul.addr %s1068, 8
          %s1070 = scalar_lea.vmem %s3, %s1069
          // Predicated region
          $region78: #{inception_c_forward.13} parent=76 // pred_check
            _
          $region79: #{inception_c_forward.13} parent=76 // pred_check_branch
            %1072 = sbr.rel (0) target = $region81
          $region80: #{inception_c_forward.13} parent=76 // pred_region
            // Predicated region
            $region82: #{inception_c_forward.13} parent=80 // pred_check
              _
            $region83: #{inception_c_forward.13} parent=80 // pred_check_branch
              %1074 = sbr.rel (0) target = $region85
            $region84: #{inception_c_forward.13} parent=80 // pred_region
              // Predicated region
              $region97: #{inception_c_forward.13} parent=84 // pred_check
                _
              $region98: #{inception_c_forward.13} parent=84 // pred_check_branch
                %1215 = sbr.rel (0) target = $region100
              $region99: #{inception_c_forward.13} parent=84 // pred_region
                loop: start=0, step=1, limit=1
                $region101: #{inception_c_forward.13} parent=99 // loop_pre_header
                  _
                $region102: #{inception_c_forward.13} parent=99 // loop_header
                  %s1217 = sphi 0, %s1221
                  %p1218 = scmp.ge.s32.totalorder %s1217, 1
                  %s1222 = sphi %s1062, %s1062
                  %s1223 = sphi %s1070, %s1070
                $region103: #{inception_c_forward.13} parent=99 // loop_header_branch
                  %1220 = sbr.rel (%p1218) target = $region107
                $region104: #{inception_c_forward.13} parent=99 // loop_body
                  %v1224 = vld [vmem:[%s1222] sm:$0xff]
                  %1225 = vst [vmem:[%s1223] sm:$0xff] %v1224
                  %v1226 = vld [vmem:[%s1222 + $0x8] sm:$0xff]
                  %1227 = vst [vmem:[%s1223 + $0x10] sm:$0xff] %v1226
                  %v1228 = vld [vmem:[%s1222 + $0x10] sm:$0xff]
                  %1229 = vst [vmem:[%s1223 + $0x20] sm:$0xff] %v1228
                  %v1230 = vld [vmem:[%s1222 + $0x18] sm:$0xff]
                  %1231 = vst [vmem:[%s1223 + $0x30] sm:$0xff] %v1230
                  %v1232 = vld [vmem:[%s1222 + $0x20] sm:$0xff]
                  %1233 = vst [vmem:[%s1223 + $0x40] sm:$0xff] %v1232
                  %v1234 = vld [vmem:[%s1222 + $0x28] sm:$0xff]
                  %1235 = vst [vmem:[%s1223 + $0x50] sm:$0xff] %v1234
                  %v1236 = vld [vmem:[%s1222 + $0x30] sm:$0xff]
                  %1237 = vst [vmem:[%s1223 + $0x60] sm:$0xff] %v1236
                  %v1238 = vld [vmem:[%s1222 + $0x38] sm:$0xff]
                  %1239 = vst [vmem:[%s1223 + $0x70] sm:$0xff] %v1238
                  %v1240 = vld [vmem:[%s1222 + $0x40] sm:$0xff]
                  %1241 = vst [vmem:[%s1223 + $0x80] sm:$0xff] %v1240
                  %v1242 = vld [vmem:[%s1222 + $0x48] sm:$0xff]
                  %1243 = vst [vmem:[%s1223 + $0x90] sm:$0xff] %v1242
                  %v1244 = vld [vmem:[%s1222 + $0x50] sm:$0xff]
                  %1245 = vst [vmem:[%s1223 + $0xa0] sm:$0xff] %v1244
                  %v1246 = vld [vmem:[%s1222 + $0x58] sm:$0xff]
                  %1247 = vst [vmem:[%s1223 + $0xb0] sm:$0xff] %v1246
                  %v1248 = vld [vmem:[%s1222 + $0x60] sm:$0xff]
                  %1249 = vst [vmem:[%s1223 + $0xc0] sm:$0xff] %v1248
                  %v1250 = vld [vmem:[%s1222 + $0x68] sm:$0xff]
                  %1251 = vst [vmem:[%s1223 + $0xd0] sm:$0xff] %v1250
                  %v1252 = vld [vmem:[%s1222 + $0x70] sm:$0xff]
                  %1253 = vst [vmem:[%s1223 + $0xe0] sm:$0xff] %v1252
                  %v1254 = vld [vmem:[%s1222 + $0x78] sm:$0xff]
                  %1255 = vst [vmem:[%s1223 + $0xf0] sm:$0xff] %v1254
                  %v1256 = vld [vmem:[%s1222 + $0x80] sm:$0xff]
                  %1257 = vst [vmem:[%s1223 + $0x100] sm:$0xff] %v1256
                  %v1258 = vld [vmem:[%s1222 + $0x88] sm:$0xff]
                  %1259 = vst [vmem:[%s1223 + $0x110] sm:$0xff] %v1258
                  %v1260 = vld [vmem:[%s1222 + $0x90] sm:$0xff]
                  %1261 = vst [vmem:[%s1223 + $0x120] sm:$0xff] %v1260
                  %v1262 = vld [vmem:[%s1222 + $0x98] sm:$0xff]
                  %1263 = vst [vmem:[%s1223 + $0x130] sm:$0xff] %v1262
                  %v1264 = vld [vmem:[%s1222 + $0xa0] sm:$0xff]
                  %1265 = vst [vmem:[%s1223 + $0x140] sm:$0xff] %v1264
                  %v1266 = vld [vmem:[%s1222 + $0xa8] sm:$0xff]
                  %1267 = vst [vmem:[%s1223 + $0x150] sm:$0xff] %v1266
                  %v1268 = vld [vmem:[%s1222 + $0xb0] sm:$0xff]
                  %1269 = vst [vmem:[%s1223 + $0x160] sm:$0xff] %v1268
                  %v1270 = vld [vmem:[%s1222 + $0xb8] sm:$0xff]
                  %1271 = vst [vmem:[%s1223 + $0x170] sm:$0xff] %v1270
                  %v1272 = vld [vmem:[%s1222 + $0xc0] sm:$0xff]
                  %1273 = vst [vmem:[%s1223 + $0x180] sm:$0xff] %v1272
                  %v1274 = vld [vmem:[%s1222 + $0xc8] sm:$0xff]
                  %1275 = vst [vmem:[%s1223 + $0x190] sm:$0xff] %v1274
                  %v1276 = vld [vmem:[%s1222 + $0xd0] sm:$0xff]
                  %1277 = vst [vmem:[%s1223 + $0x1a0] sm:$0xff] %v1276
                  %v1278 = vld [vmem:[%s1222 + $0xd8] sm:$0xff]
                  %1279 = vst [vmem:[%s1223 + $0x1b0] sm:$0xff] %v1278
                  %v1280 = vld [vmem:[%s1222 + $0xe0] sm:$0xff]
                  %1281 = vst [vmem:[%s1223 + $0x1c0] sm:$0xff] %v1280
                  %v1282 = vld [vmem:[%s1222 + $0xe8] sm:$0xff]
                  %1283 = vst [vmem:[%s1223 + $0x1d0] sm:$0xff] %v1282
                  %v1284 = vld [vmem:[%s1222 + $0xf0] sm:$0xff]
                  %1285 = vst [vmem:[%s1223 + $0x1e0] sm:$0xff] %v1284
                  %v1286 = vld [vmem:[%s1222 + $0xf8] sm:$0xff]
                  %1287 = vst [vmem:[%s1223 + $0x1f0] sm:$0xff] %v1286
                  %v1288 = vld [vmem:[%s1222 + $0x100] sm:$0xff]
                  %1289 = vst [vmem:[%s1223 + $0x200] sm:$0xff] %v1288
                  %v1290 = vld [vmem:[%s1222 + $0x108] sm:$0xff]
                  %1291 = vst [vmem:[%s1223 + $0x210] sm:$0xff] %v1290
                  %v1292 = vld [vmem:[%s1222 + $0x110] sm:$0xff]
                  %1293 = vst [vmem:[%s1223 + $0x220] sm:$0xff] %v1292
                  %v1294 = vld [vmem:[%s1222 + $0x118] sm:$0xff]
                  %1295 = vst [vmem:[%s1223 + $0x230] sm:$0xff] %v1294
                  %v1296 = vld [vmem:[%s1222 + $0x120] sm:$0xff]
                  %1297 = vst [vmem:[%s1223 + $0x240] sm:$0xff] %v1296
                  %v1298 = vld [vmem:[%s1222 + $0x128] sm:$0xff]
                  %1299 = vst [vmem:[%s1223 + $0x250] sm:$0xff] %v1298
                  %v1300 = vld [vmem:[%s1222 + $0x130] sm:$0xff]
                  %1301 = vst [vmem:[%s1223 + $0x260] sm:$0xff] %v1300
                  %v1302 = vld [vmem:[%s1222 + $0x138] sm:$0xff]
                  %1303 = vst [vmem:[%s1223 + $0x270] sm:$0xff] %v1302
                  %v1304 = vld [vmem:[%s1222 + $0x140] sm:$0xff]
                  %1305 = vst [vmem:[%s1223 + $0x280] sm:$0xff] %v1304
                  %v1306 = vld [vmem:[%s1222 + $0x148] sm:$0xff]
                  %1307 = vst [vmem:[%s1223 + $0x290] sm:$0xff] %v1306
                  %v1308 = vld [vmem:[%s1222 + $0x150] sm:$0xff]
                  %1309 = vst [vmem:[%s1223 + $0x2a0] sm:$0xff] %v1308
                  %v1310 = vld [vmem:[%s1222 + $0x158] sm:$0xff]
                  %1311 = vst [vmem:[%s1223 + $0x2b0] sm:$0xff] %v1310
                  %v1312 = vld [vmem:[%s1222 + $0x160] sm:$0xff]
                  %1313 = vst [vmem:[%s1223 + $0x2c0] sm:$0xff] %v1312
                  %v1314 = vld [vmem:[%s1222 + $0x168] sm:$0xff]
                  %1315 = vst [vmem:[%s1223 + $0x2d0] sm:$0xff] %v1314
                  %v1316 = vld [vmem:[%s1222 + $0x170] sm:$0xff]
                  %1317 = vst [vmem:[%s1223 + $0x2e0] sm:$0xff] %v1316
                  %v1318 = vld [vmem:[%s1222 + $0x178] sm:$0xff]
                  %1319 = vst [vmem:[%s1223 + $0x2f0] sm:$0xff] %v1318
                  %v1320 = vld [vmem:[%s1222 + $0x180] sm:$0xff]
                  %1321 = vst [vmem:[%s1223 + $0x300] sm:$0xff] %v1320
                  %v1322 = vld [vmem:[%s1222 + $0x188] sm:$0xff]
                  %1323 = vst [vmem:[%s1223 + $0x310] sm:$0xff] %v1322
                  %v1324 = vld [vmem:[%s1222 + $0x190] sm:$0xff]
                  %1325 = vst [vmem:[%s1223 + $0x320] sm:$0xff] %v1324
                  %v1326 = vld [vmem:[%s1222 + $0x198] sm:$0xff]
                  %1327 = vst [vmem:[%s1223 + $0x330] sm:$0xff] %v1326
                  %v1328 = vld [vmem:[%s1222 + $0x1a0] sm:$0xff]
                  %1329 = vst [vmem:[%s1223 + $0x340] sm:$0xff] %v1328
                  %v1330 = vld [vmem:[%s1222 + $0x1a8] sm:$0xff]
                  %1331 = vst [vmem:[%s1223 + $0x350] sm:$0xff] %v1330
                  %v1332 = vld [vmem:[%s1222 + $0x1b0] sm:$0xff]
                  %1333 = vst [vmem:[%s1223 + $0x360] sm:$0xff] %v1332
                  %v1334 = vld [vmem:[%s1222 + $0x1b8] sm:$0xff]
                  %1335 = vst [vmem:[%s1223 + $0x370] sm:$0xff] %v1334
                  %v1336 = vld [vmem:[%s1222 + $0x1c0] sm:$0xff]
                  %1337 = vst [vmem:[%s1223 + $0x380] sm:$0xff] %v1336
                  %v1338 = vld [vmem:[%s1222 + $0x1c8] sm:$0xff]
                  %1339 = vst [vmem:[%s1223 + $0x390] sm:$0xff] %v1338
                  %v1340 = vld [vmem:[%s1222 + $0x1d0] sm:$0xff]
                  %1341 = vst [vmem:[%s1223 + $0x3a0] sm:$0xff] %v1340
                  %v1342 = vld [vmem:[%s1222 + $0x1d8] sm:$0xff]
                  %1343 = vst [vmem:[%s1223 + $0x3b0] sm:$0xff] %v1342
                  %v1344 = vld [vmem:[%s1222 + $0x1e0] sm:$0xff]
                  %1345 = vst [vmem:[%s1223 + $0x3c0] sm:$0xff] %v1344
                  %v1346 = vld [vmem:[%s1222 + $0x1e8] sm:$0xff]
                  %1347 = vst [vmem:[%s1223 + $0x3d0] sm:$0xff] %v1346
                  %v1348 = vld [vmem:[%s1222 + $0x1f0] sm:$0xff]
                  %1349 = vst [vmem:[%s1223 + $0x3e0] sm:$0xff] %v1348
                  %v1350 = vld [vmem:[%s1222 + $0x1f8] sm:$0xff]
                  %1351 = vst [vmem:[%s1223 + $0x3f0] sm:$0xff] %v1350
                $region105: #{inception_c_forward.13} parent=99 // loop_footer
                  %s1221 = sadd.s32 1, %s1217
                $region106: #{inception_c_forward.13} parent=99 // loop_footer_branch
                  %1216 = sbr.rel target = $region102
                $region107: #{inception_c_forward.13} parent=99 // loop_exit
                  _
              $region100: #{inception_c_forward.13} parent=84 // pred_fallthru
                _
              // Predicated region
              $region108: #{inception_c_forward.13} parent=84 // pred_check
                _
              $region109: #{inception_c_forward.13} parent=84 // pred_check_branch
                %1353 = sbr.rel target = $region111
              $region110: #{inception_c_forward.13} parent=84 // pred_region
                _
              $region111: #{inception_c_forward.13} parent=84 // pred_fallthru
                _
            $region85: #{inception_c_forward.13} parent=80 // pred_fallthru
              _
            // Predicated region
            $region86: #{inception_c_forward.13} parent=80 // pred_check
              _
            $region87: #{inception_c_forward.13} parent=80 // pred_check_branch
              %1076 = sbr.rel target = $region89
            $region88: #{inception_c_forward.13} parent=80 // pred_region
              loop: start=0, step=1, limit=1
              $region90: #{inception_c_forward.13} parent=88 // loop_pre_header
                _
              $region91: #{inception_c_forward.13} parent=88 // loop_header
                %s1079 = sphi 0, %s1083
                %p1080 = scmp.ge.s32.totalorder %s1079, 1
                %s1084 = sphi %s1062, %s1062
                %s1085 = sphi %s1070, %s1070
              $region92: #{inception_c_forward.13} parent=88 // loop_header_branch
                %1082 = sbr.rel (%p1080) target = $region96
              $region93: #{inception_c_forward.13} parent=88 // loop_body
                %v1086 = vld [vmem:[%s1084] sm:$0xff]
                %1087 = vst [vmem:[%s1085] sm:$0xff] %v1086
                %v1088 = vld [vmem:[%s1084 + $0x8] sm:$0xff]
                %1089 = vst [vmem:[%s1085 + $0x10] sm:$0xff] %v1088
                %v1090 = vld [vmem:[%s1084 + $0x10] sm:$0xff]
                %1091 = vst [vmem:[%s1085 + $0x20] sm:$0xff] %v1090
                %v1092 = vld [vmem:[%s1084 + $0x18] sm:$0xff]
                %1093 = vst [vmem:[%s1085 + $0x30] sm:$0xff] %v1092
                %v1094 = vld [vmem:[%s1084 + $0x20] sm:$0xff]
                %1095 = vst [vmem:[%s1085 + $0x40] sm:$0xff] %v1094
                %v1096 = vld [vmem:[%s1084 + $0x28] sm:$0xff]
                %1097 = vst [vmem:[%s1085 + $0x50] sm:$0xff] %v1096
                %v1098 = vld [vmem:[%s1084 + $0x30] sm:$0xff]
                %1099 = vst [vmem:[%s1085 + $0x60] sm:$0xff] %v1098
                %v1100 = vld [vmem:[%s1084 + $0x38] sm:$0xff]
                %1101 = vst [vmem:[%s1085 + $0x70] sm:$0xff] %v1100
                %v1102 = vld [vmem:[%s1084 + $0x40] sm:$0xff]
                %1103 = vst [vmem:[%s1085 + $0x80] sm:$0xff] %v1102
                %v1104 = vld [vmem:[%s1084 + $0x48] sm:$0xff]
                %1105 = vst [vmem:[%s1085 + $0x90] sm:$0xff] %v1104
                %v1106 = vld [vmem:[%s1084 + $0x50] sm:$0xff]
                %1107 = vst [vmem:[%s1085 + $0xa0] sm:$0xff] %v1106
                %v1108 = vld [vmem:[%s1084 + $0x58] sm:$0xff]
                %1109 = vst [vmem:[%s1085 + $0xb0] sm:$0xff] %v1108
                %v1110 = vld [vmem:[%s1084 + $0x60] sm:$0xff]
                %1111 = vst [vmem:[%s1085 + $0xc0] sm:$0xff] %v1110
                %v1112 = vld [vmem:[%s1084 + $0x68] sm:$0xff]
                %1113 = vst [vmem:[%s1085 + $0xd0] sm:$0xff] %v1112
                %v1114 = vld [vmem:[%s1084 + $0x70] sm:$0xff]
                %1115 = vst [vmem:[%s1085 + $0xe0] sm:$0xff] %v1114
                %v1116 = vld [vmem:[%s1084 + $0x78] sm:$0xff]
                %1117 = vst [vmem:[%s1085 + $0xf0] sm:$0xff] %v1116
                %v1118 = vld [vmem:[%s1084 + $0x80] sm:$0xff]
                %1119 = vst [vmem:[%s1085 + $0x100] sm:$0xff] %v1118
                %v1120 = vld [vmem:[%s1084 + $0x88] sm:$0xff]
                %1121 = vst [vmem:[%s1085 + $0x110] sm:$0xff] %v1120
                %v1122 = vld [vmem:[%s1084 + $0x90] sm:$0xff]
                %1123 = vst [vmem:[%s1085 + $0x120] sm:$0xff] %v1122
                %v1124 = vld [vmem:[%s1084 + $0x98] sm:$0xff]
                %1125 = vst [vmem:[%s1085 + $0x130] sm:$0xff] %v1124
                %v1126 = vld [vmem:[%s1084 + $0xa0] sm:$0xff]
                %1127 = vst [vmem:[%s1085 + $0x140] sm:$0xff] %v1126
                %v1128 = vld [vmem:[%s1084 + $0xa8] sm:$0xff]
                %1129 = vst [vmem:[%s1085 + $0x150] sm:$0xff] %v1128
                %v1130 = vld [vmem:[%s1084 + $0xb0] sm:$0xff]
                %1131 = vst [vmem:[%s1085 + $0x160] sm:$0xff] %v1130
                %v1132 = vld [vmem:[%s1084 + $0xb8] sm:$0xff]
                %1133 = vst [vmem:[%s1085 + $0x170] sm:$0xff] %v1132
                %v1134 = vld [vmem:[%s1084 + $0xc0] sm:$0xff]
                %1135 = vst [vmem:[%s1085 + $0x180] sm:$0xff] %v1134
                %v1136 = vld [vmem:[%s1084 + $0xc8] sm:$0xff]
                %1137 = vst [vmem:[%s1085 + $0x190] sm:$0xff] %v1136
                %v1138 = vld [vmem:[%s1084 + $0xd0] sm:$0xff]
                %1139 = vst [vmem:[%s1085 + $0x1a0] sm:$0xff] %v1138
                %v1140 = vld [vmem:[%s1084 + $0xd8] sm:$0xff]
                %1141 = vst [vmem:[%s1085 + $0x1b0] sm:$0xff] %v1140
                %v1142 = vld [vmem:[%s1084 + $0xe0] sm:$0xff]
                %1143 = vst [vmem:[%s1085 + $0x1c0] sm:$0xff] %v1142
                %v1144 = vld [vmem:[%s1084 + $0xe8] sm:$0xff]
                %1145 = vst [vmem:[%s1085 + $0x1d0] sm:$0xff] %v1144
                %v1146 = vld [vmem:[%s1084 + $0xf0] sm:$0xff]
                %1147 = vst [vmem:[%s1085 + $0x1e0] sm:$0xff] %v1146
                %v1148 = vld [vmem:[%s1084 + $0xf8] sm:$0xff]
                %1149 = vst [vmem:[%s1085 + $0x1f0] sm:$0xff] %v1148
                %v1150 = vld [vmem:[%s1084 + $0x100] sm:$0xff]
                %1151 = vst [vmem:[%s1085 + $0x200] sm:$0xff] %v1150
                %v1152 = vld [vmem:[%s1084 + $0x108] sm:$0xff]
                %1153 = vst [vmem:[%s1085 + $0x210] sm:$0xff] %v1152
                %v1154 = vld [vmem:[%s1084 + $0x110] sm:$0xff]
                %1155 = vst [vmem:[%s1085 + $0x220] sm:$0xff] %v1154
                %v1156 = vld [vmem:[%s1084 + $0x118] sm:$0xff]
                %1157 = vst [vmem:[%s1085 + $0x230] sm:$0xff] %v1156
                %v1158 = vld [vmem:[%s1084 + $0x120] sm:$0xff]
                %1159 = vst [vmem:[%s1085 + $0x240] sm:$0xff] %v1158
                %v1160 = vld [vmem:[%s1084 + $0x128] sm:$0xff]
                %1161 = vst [vmem:[%s1085 + $0x250] sm:$0xff] %v1160
                %v1162 = vld [vmem:[%s1084 + $0x130] sm:$0xff]
                %1163 = vst [vmem:[%s1085 + $0x260] sm:$0xff] %v1162
                %v1164 = vld [vmem:[%s1084 + $0x138] sm:$0xff]
                %1165 = vst [vmem:[%s1085 + $0x270] sm:$0xff] %v1164
                %v1166 = vld [vmem:[%s1084 + $0x140] sm:$0xff]
                %1167 = vst [vmem:[%s1085 + $0x280] sm:$0xff] %v1166
                %v1168 = vld [vmem:[%s1084 + $0x148] sm:$0xff]
                %1169 = vst [vmem:[%s1085 + $0x290] sm:$0xff] %v1168
                %v1170 = vld [vmem:[%s1084 + $0x150] sm:$0xff]
                %1171 = vst [vmem:[%s1085 + $0x2a0] sm:$0xff] %v1170
                %v1172 = vld [vmem:[%s1084 + $0x158] sm:$0xff]
                %1173 = vst [vmem:[%s1085 + $0x2b0] sm:$0xff] %v1172
                %v1174 = vld [vmem:[%s1084 + $0x160] sm:$0xff]
                %1175 = vst [vmem:[%s1085 + $0x2c0] sm:$0xff] %v1174
                %v1176 = vld [vmem:[%s1084 + $0x168] sm:$0xff]
                %1177 = vst [vmem:[%s1085 + $0x2d0] sm:$0xff] %v1176
                %v1178 = vld [vmem:[%s1084 + $0x170] sm:$0xff]
                %1179 = vst [vmem:[%s1085 + $0x2e0] sm:$0xff] %v1178
                %v1180 = vld [vmem:[%s1084 + $0x178] sm:$0xff]
                %1181 = vst [vmem:[%s1085 + $0x2f0] sm:$0xff] %v1180
                %v1182 = vld [vmem:[%s1084 + $0x180] sm:$0xff]
                %1183 = vst [vmem:[%s1085 + $0x300] sm:$0xff] %v1182
                %v1184 = vld [vmem:[%s1084 + $0x188] sm:$0xff]
                %1185 = vst [vmem:[%s1085 + $0x310] sm:$0xff] %v1184
                %v1186 = vld [vmem:[%s1084 + $0x190] sm:$0xff]
                %1187 = vst [vmem:[%s1085 + $0x320] sm:$0xff] %v1186
                %v1188 = vld [vmem:[%s1084 + $0x198] sm:$0xff]
                %1189 = vst [vmem:[%s1085 + $0x330] sm:$0xff] %v1188
                %v1190 = vld [vmem:[%s1084 + $0x1a0] sm:$0xff]
                %1191 = vst [vmem:[%s1085 + $0x340] sm:$0xff] %v1190
                %v1192 = vld [vmem:[%s1084 + $0x1a8] sm:$0xff]
                %1193 = vst [vmem:[%s1085 + $0x350] sm:$0xff] %v1192
                %v1194 = vld [vmem:[%s1084 + $0x1b0] sm:$0xff]
                %1195 = vst [vmem:[%s1085 + $0x360] sm:$0xff] %v1194
                %v1196 = vld [vmem:[%s1084 + $0x1b8] sm:$0xff]
                %1197 = vst [vmem:[%s1085 + $0x370] sm:$0xff] %v1196
                %v1198 = vld [vmem:[%s1084 + $0x1c0] sm:$0xff]
                %1199 = vst [vmem:[%s1085 + $0x380] sm:$0xff] %v1198
                %v1200 = vld [vmem:[%s1084 + $0x1c8] sm:$0xff]
                %1201 = vst [vmem:[%s1085 + $0x390] sm:$0xff] %v1200
                %v1202 = vld [vmem:[%s1084 + $0x1d0] sm:$0xff]
                %1203 = vst [vmem:[%s1085 + $0x3a0] sm:$0xff] %v1202
                %v1204 = vld [vmem:[%s1084 + $0x1d8] sm:$0xff]
                %1205 = vst [vmem:[%s1085 + $0x3b0] sm:$0xff] %v1204
                %v1206 = vld [vmem:[%s1084 + $0x1e0] sm:$0xff]
                %1207 = vst [vmem:[%s1085 + $0x3c0] sm:$0xff] %v1206
                %v1208 = vld [vmem:[%s1084 + $0x1e8] sm:$0xff]
                %1209 = vst [vmem:[%s1085 + $0x3d0] sm:$0xff] %v1208
                %v1210 = vld [vmem:[%s1084 + $0x1f0] sm:$0xff]
                %1211 = vst [vmem:[%s1085 + $0x3e0] sm:$0xff] %v1210
                %v1212 = vld [vmem:[%s1084 + $0x1f8] sm:$0xff]
                %1213 = vst [vmem:[%s1085 + $0x3f0] sm:$0xff] %v1212
              $region94: #{inception_c_forward.13} parent=88 // loop_footer
                %s1083 = sadd.s32 1, %s1079
              $region95: #{inception_c_forward.13} parent=88 // loop_footer_branch
                %1078 = sbr.rel target = $region91
              $region96: #{inception_c_forward.13} parent=88 // loop_exit
                _
            $region89: #{inception_c_forward.13} parent=80 // pred_fallthru
              _
          $region81: #{inception_c_forward.13} parent=76 // pred_fallthru
            _
          %1354 = vnop
        $region77: #{inception_c_forward.13} parent=68 // pred_fallthru
          _
      $region69: #{inception_c_forward.13} parent=5 // pred_fallthru
        _
      %p1355 = scmp.le.s32.totalorder 2, %s9
      // Predicated region
      $region112: #{inception_c_forward.13} parent=5 // pred_check
        %p1356 = pneg %p1355
      $region113: #{inception_c_forward.13} parent=5 // pred_check_branch
        %1358 = sbr.rel (%p1356) target = $region115
      $region114: #{inception_c_forward.13} parent=5 // pred_region
        %s1359 = ssub.s32 %s9, 2
        // Predicated region
        $region116: #{inception_c_forward.13} parent=114 // pred_check
          %p1360 = pneg %p130
        $region117: #{inception_c_forward.13} parent=114 // pred_check_branch
          %1362 = sbr.rel (%p1360) target = $region119
        $region118: #{inception_c_forward.13} parent=114 // pred_region
          %s1363 = sand.u32 %s115, 1
          %s1364 = sand.u32 %s115, 1
          %s1365 = smul.addr %s1364, 512
          %s1366 = scalar_lea.vmem [#allocation3], %s1365
        $region119: #{inception_c_forward.13} parent=114 // pred_fallthru
          _
      $region115: #{inception_c_forward.13} parent=5 // pred_fallthru
        _
    $region6: #{inception_c_forward.13} parent=1 // loop_footer
      %s13 = sadd.s32 1, %s9
    $region7: #{inception_c_forward.13} parent=1 // loop_footer_branch
      %8 = sbr.rel target = $region3
    $region8: #{inception_c_forward.13} parent=1 // loop_exit
      _

</llo_original>
